<compile_context>
chip_gen: v7x
topology: tpu7x:2x2x1
jax: 0.10.0
libtpu: 0.0.40
codegen_flags: <defaults>
</compile_context>

<pallas_src>
import numpy as np
import jax
import jax.numpy as jnp
from jax.experimental import pallas as pl
from jax.experimental.pallas import tpu as pltpu

# ---------------- hyperparameters (small, consistent with the module) -------
B = 16                    # batch
TB = 8                    # batch tile per grid step (grid = B//TB = 2 programs)
DX = 8                    # raw non-monotonic feature dim
NM_HIDDEN = 32            # hidden width of the (user-supplied) non_monotonic_net
DIM_NM = 16               # dim_non_monotonic
LAYERS = (64, 64, 32)     # hidden layers (scaled-down stand-in for [512, 512, 64])
DIM_OUT = 1               # dim_out (the lane-dense tail below assumes 1)
NB_STEPS = 50             # integration_steps (Clenshaw-Curtis)
T1 = NB_STEPS + 1         # number of quadrature nodes
T1PAD = 64                # nodes padded to a multiple of 8 (extra nodes get weight 0)
NROWS = TB * T1PAD        # 512 flattened (batch, node) rows fed to the integrand MLP

MXU_DTYPE = jnp.float32   # set to jnp.bfloat16 on v6e/v7x once MXU-bound

assert DIM_OUT == 1


# ---------------- Clenshaw-Curtis weights (host-side, deterministic) --------
def compute_cc_weights(nb_steps):
    lam = np.arange(0, nb_steps + 1, 1).reshape(-1, 1)
    lam = np.cos((lam @ lam.T) * np.pi / nb_steps)
    lam[:, 0] = 0.5
    lam[:, -1] = 0.5 * lam[:, -1]
    lam = lam * 2.0 / nb_steps
    W = np.arange(0, nb_steps + 1, 1).reshape(-1, 1)
    W[np.arange(1, nb_steps + 1, 2)] = 0
    W = 2.0 / (1 - W ** 2)
    W[0] = 1
    W[np.arange(1, nb_steps + 1, 2)] = 0
    cc_weights = (lam.T @ W).reshape(-1).astype(np.float32)                            # (T1,)
    steps = np.cos(np.arange(0, nb_steps + 1) * np.pi / nb_steps).astype(np.float32)   # (T1,)
    return cc_weights, steps


# ---------------- shared math helpers (used in kernel and reference) --------
def _elu_plus_one(z):
    # exp(min(z,0)) avoids generating inf in the unselected (z>0) branch.
    return jnp.where(z > 0, z, jnp.exp(jnp.minimum(z, 0.0)) - 1.0) + 1.0


def _mlp2d(z, params, final=None):
    n = len(params)
    for i, (w, b) in enumerate(params):
        z = jnp.dot(z, w, preferred_element_type=jnp.float32) + b
        if i < n - 1:
            z = jnp.maximum(z, 0.0)
        elif final == "elu_plus_one":
            z = _elu_plus_one(z)
    return z


# ---------------- packed-parameter layout (host-side, static) ---------------
def _round8(n):
    return (n + 7) // 8 * 8


# (name, stored_rows, stored_cols).  The integrand first layer (fan_in = 1+DIM_NM)
# is split into its t-row ("i1t") and its h-block ("i1h") so the t-invariant part
# can be hoisted; the last integrand weight is stored transposed ("i4T") for the
# VPU multiply-reduce tail.
_STORE_DEFS = (
    ("nm1", DX,        NM_HIDDEN),
    ("nm2", NM_HIDDEN, DIM_NM),
    ("c1",  DIM_NM,    LAYERS[0]),
    ("c2",  LAYERS[0], LAYERS[1]),
    ("c3",  LAYERS[1], LAYERS[2]),
    ("c4",  LAYERS[2], 2 * DIM_OUT),
    ("i1t", 1,         LAYERS[0]),
    ("i1h", DIM_NM,    LAYERS[0]),
    ("i2",  LAYERS[0], LAYERS[1]),
    ("i3",  LAYERS[1], LAYERS[2]),
    ("i4T", DIM_OUT,   LAYERS[2]),
)


def _build_layout(defs):
    layout, off = {}, 0
    for name, rows, cols in defs:
        layout[name] = (off, rows, cols)
        off += _round8(rows)
    return layout, _round8(off)


_LAYOUT, W_ROWS = _build_layout(_STORE_DEFS)
_STORE_IDX = {name: i for i, (name, _, _) in enumerate(_STORE_DEFS)}
W_COLS = max(cols for _, _, cols in _STORE_DEFS)          # 64
B_ROWS = _round8(len(_STORE_DEFS))                        # 16
assert W_COLS <= 128


def pack_params(params):
    """Pack the 10 Linear layers into one weight slab + one bias slab (f32)."""
    nm, cond, integ = params["nm"], params["cond"], params["integrand"]
    w1, b1 = integ[0]
    w4, b4 = integ[3]
    store = {
        "nm1": nm[0], "nm2": nm[1],
        "c1": cond[0], "c2": cond[1], "c3": cond[2], "c4": cond[3],
        "i1t": (w1[0:1, :], np.zeros((1, LAYERS[0]), np.float32)),   # no bias here
        "i1h": (w1[1:, :], b1),
        "i2": integ[1], "i3": integ[2],
        "i4T": (jnp.transpose(w4), b4),
    }
    wslab = np.zeros((W_ROWS, W_COLS), np.float32)
    bslab = np.zeros((B_ROWS, W_COLS), np.float32)
    for idx, (name, rows, cols) in enumerate(_STORE_DEFS):
        off, _, _ = _LAYOUT[name]
        w, b = store[name]
        w = np.asarray(w, np.float32)
        b = np.asarray(b, np.float32).reshape(1, -1)
        assert w.shape == (rows, cols), (name, w.shape)
        wslab[off:off + rows, :cols] = w
        bslab[idx, :b.shape[1]] = b[0]
    return jnp.asarray(wslab), jnp.asarray(bslab)


def quad_constants(params):
    """Constant expansion / reduction matrices that fold the CC quadrature.

    Row r of the flattened integrand batch corresponds to (b, t) = (r // T1PAD, r % T1PAD).
      ETm[r, b]      = 1                      (broadcast per-batch  h·W1 + b1  to all nodes)
      ETm[r, TB + b] = (steps[t] + 1) / 2     (node position, multiplies the q * W1_t row)
      R[b, r]        = ccw[t]                 (CC-weighted reduce over nodes)
    Padded nodes t >= T1 get weight 0 in both ETm's Tm block and R.
    """
    steps = np.asarray(params["steps"], np.float32)
    ccw = np.asarray(params["ccw"], np.float32)
    tnode = np.zeros((T1PAD,), np.float32)
    tnode[:T1] = (steps + 1.0) * 0.5
    ccw_p = np.zeros((T1PAD,), np.float32)
    ccw_p[:T1] = ccw
    eye = np.eye(TB, dtype=np.float32)
    E = np.kron(eye, np.ones((T1PAD, 1), np.float32))        # (NROWS, TB)
    Tm = np.kron(eye, tnode.reshape(T1PAD, 1))               # (NROWS, TB)
    ETm = np.concatenate([E, Tm], axis=1)                    # (NROWS, 2*TB) fused expansion
    R = np.kron(eye, ccw_p.reshape(1, T1PAD))                # (TB, NROWS)
    return jnp.asarray(ETm), jnp.asarray(R)


# ---------------- Pallas kernel ----------------------------------------------
def _sq_kernel(x_ref, q_ref, w_ref, b_ref, etm_ref, r_ref, out_ref, rhs_ref):
    def load_w(name):
        off, rows, cols = _LAYOUT[name]
        return w_ref[off:off + rows, 0:cols]        # static slice, 8-row aligned offsets

    def load_b(name):
        idx = _STORE_IDX[name]
        _, _, cols = _LAYOUT[name]
        return b_ref[idx:idx + 1, 0:cols]

    def dense(z, name, relu=True):
        w = load_w(name).astype(MXU_DTYPE)
        z = jnp.dot(z.astype(MXU_DTYPE), w, preferred_element_type=jnp.float32)
        z = z + load_b(name)
        return jnp.maximum(z, 0.0) if relu else z

    x = x_ref[...]                                   # (TB, DX)
    q = q_ref[...]                                   # (TB, 1)

    # --- non-monotonic embedding --------------------------------------------
    h = dense(x, "nm1", relu=True)
    h = dense(h, "nm2", relu=False)                  # (TB, DIM_NM)

    # --- conditioner: offset / log-scaling ----------------------------------
    c = dense(h, "c1")
    c = dense(c, "c2")
    c = dense(c, "c3")
    c = dense(c, "c4", relu=False)                   # (TB, 2*DIM_OUT)
    offset = c[:, 0:DIM_OUT]
    scaling = jnp.exp(c[:, DIM_OUT:2 * DIM_OUT])

    # --- integrand: all T1 quadrature nodes in ONE batched pass -------------
    # t-invariant part hoisted: hW = h @ W1[1:, :] + b1   (computed once per tile)
    hW = dense(h, "i1h", relu=False)                 # (TB, L0)
    w1t = load_w("i1t")                              # (1, L0)

    # Fused expansion: stack [hW ; q * w1t] in VMEM scratch, then a single
    # (NROWS, 2*TB) @ (2*TB, L0) matmul gives the first integrand pre-activation
    #   z[r, :] = hW[b, :] + tnode[t] * q[b] * W1_t[:]
    rhs_ref[0:TB, :] = hW
    rhs_ref[TB:2 * TB, :] = q * w1t                  # (TB, L0) outer product on the VPU
    z = jnp.dot(etm_ref[...], rhs_ref[...], preferred_element_type=jnp.float32)
    z = jnp.maximum(z, 0.0)                          # (NROWS, L0) first integrand layer
    z = dense(z, "i2")                               # (NROWS, L1)
    z = dense(z, "i3")                               # (NROWS, L2)

    # last (L2 -> 1) projection as VPU multiply + lane reduce (lane-dense tail,
    # no N=1 MXU matmul), then ELU + 1 for a positive integrand.
    w4t = load_w("i4T")                              # (1, L2)
    i4 = _STORE_IDX["i4T"]
    b4 = b_ref[i4:i4 + 1, 0:DIM_OUT]                 # (1, 1)
    f = jnp.sum(z * w4t, axis=-1, keepdims=True) + b4
    f = _elu_plus_one(f)                             # (NROWS, 1)

    # Clenshaw-Curtis weighted reduce over nodes; R already carries ccw weights.
    intg = jnp.dot(r_ref[...], f, preferred_element_type=jnp.float32)   # (TB, 1)

    # integral over [0, q] = (q/2) * sum_t ccw[t] f(x_t); then affine conditioner.
    out_ref[...] = (scaling * (intg * (q * 0.5)) + offset).astype(out_ref.dtype)


# ---------------- wrapper -----------------------------------------------------
def simultaneous_quantiles_forward(x, qs, params, last_hidden_layer=False):
    # TODO(synk): last_hidden_layer=True path (last hidden activations for Orthonormal Certificates) not implemented.
    assert not last_hidden_layer
    batch = x.shape[0]
    assert x.shape[1] == DX and qs.shape == (batch, 1)

    # Guard: pad batch to a multiple of TB (padded rows are zeros, sliced off below).
    pad = (-batch) % TB
    if pad:
        x = jnp.pad(x, ((0, pad), (0, 0)))
        qs = jnp.pad(qs, ((0, pad), (0, 0)))
    bp = batch + pad

    wslab, bslab = pack_params(params)
    ETm, R = quad_constants(params)

    grid = (bp // TB,)                               # 2 programs -> both v7x cores busy

    def tiled(shape):
        return pl.BlockSpec(shape, lambda i: (i, 0))

    def rep(shape):
        # constant block index -> Pallas fetches these once, no per-step re-DMA
        return pl.BlockSpec(shape, lambda i: (0, 0))

    out = pl.pallas_call(
        _sq_kernel,
        grid_spec=pltpu.PrefetchScalarGridSpec(
            num_scalar_prefetch=0,
            grid=grid,
            in_specs=[
                tiled((TB, DX)),                     # x
                tiled((TB, 1)),                      # qs
                rep(wslab.shape),                    # packed weights
                rep(bslab.shape),                    # packed biases
                rep(ETm.shape),                      # fused [E | Tm] expansion
                rep(R.shape),                        # ccw-weighted reduce
            ],
            out_specs=pl.BlockSpec((TB, DIM_OUT), lambda i: (i, 0)),
            scratch_shapes=[pltpu.VMEM((2 * TB, LAYERS[0]), jnp.float32)],  # stacked RHS
        ),
        out_shape=jax.ShapeDtypeStruct((bp, DIM_OUT), jnp.float32),
        compiler_params=pltpu.CompilerParams(
            dimension_semantics=("parallel",)),
    )(x, qs, wslab, bslab, ETm, R)
    return out[:batch]


# ---------------- deterministic parameter init (PyTorch-Linear-like) ---------
def _init_linear(key, fan_in, fan_out):
    kw, kb = jax.random.split(key)
    bound = 1.0 / np.sqrt(fan_in)
    w = jax.random.uniform(kw, (fan_in, fan_out), jnp.float32, -bound, bound)
    b = jax.random.uniform(kb, (1, fan_out), jnp.float32, -bound, bound)
    return w, b


def init_params(key):
    n_lin = 2 + (len(LAYERS) + 1) + (len(LAYERS) + 1)
    keys = jax.random.split(key, n_lin)
    k = iter(keys)
    # non_monotonic_net: DX -> NM_HIDDEN -> DIM_NM (Linear, ReLU, Linear)
    nm = [_init_linear(next(k), DX, NM_HIDDEN), _init_linear(next(k), NM_HIDDEN, DIM_NM)]
    # conditioner net: DIM_NM -> LAYERS -> 2*DIM_OUT (offset / log-scaling)
    dims = (DIM_NM,) + LAYERS + (2 * DIM_OUT,)
    cond = [_init_linear(next(k), dims[i], dims[i + 1]) for i in range(len(dims) - 1)]
    # integrand net: (1 + DIM_NM) -> LAYERS -> DIM_OUT, final ELU(.) + 1
    dims_i = (1 + DIM_NM,) + LAYERS + (DIM_OUT,)
    integ = [_init_linear(next(k), dims_i[i], dims_i[i + 1]) for i in range(len(dims_i) - 1)]
    ccw, steps = compute_cc_weights(NB_STEPS)
    return {"nm": nm, "cond": cond, "integrand": integ,
            "steps": jnp.asarray(steps), "ccw": jnp.asarray(ccw)}


# ---------------- plain-JAX reference (same math, no Pallas) ------------------
def reference_forward(x, qs, params):
    nm_p, cond_p, int_p = params["nm"], params["cond"], params["integrand"]
    steps, ccw = params["steps"], params["ccw"]
    h = _mlp2d(x, nm_p, final=None)
    co = _mlp2d(h, cond_p, final=None)
    offset = co[:, :DIM_OUT]
    scaling = jnp.exp(co[:, DIM_OUT:])
    w1, b1 = int_p[0]
    hW = jnp.dot(h, w1[1:, :], preferred_element_type=jnp.float32) + b1
    acc = jnp.zeros((x.shape[0], DIM_OUT), jnp.float32)
    for t in range(T1):
        x_t = qs * ((steps[t] + 1.0) * 0.5)
        z = jnp.maximum(x_t * w1[0:1, :] + hW, 0.0)
        z = _mlp2d(z, int_p[1:], final="elu_plus_one")
        acc = acc + ccw[t] * z
    return scaling * (acc * qs * 0.5) + offset


if __name__ == "__main__":
    key = jax.random.PRNGKey(0)
    kx, kq, kp = jax.random.split(key, 3)
    x = jax.random.normal(kx, (B, DX), jnp.float32)               # X_non_monotonic
    qs = jax.random.uniform(kq, (B, 1), jnp.float32, 0.01, 0.99)  # quantile per record
    params = init_params(kp)

    out = simultaneous_quantiles_forward(x, qs, params, last_hidden_layer=False)
    out = jax.block_until_ready(out)
    assert out.shape == (B, DIM_OUT)

    ref = jax.block_until_ready(reference_forward(x, qs, params))
    np.testing.assert_allclose(np.asarray(out), np.asarray(ref), rtol=1e-2, atol=1e-2)

    print("KERNEL_OK")
</pallas_src>

<mosaic_0001>
module attributes {stable_mosaic.version = 11 : i64} {
  func.func @_sq_kernel(%arg0: i32, %arg1: memref<8x8xf32, #tpu.memory_space<vmem>>, %arg2: memref<8x1xf32, #tpu.memory_space<vmem>>, %arg3: memref<376x64xf32, #tpu.memory_space<vmem>>, %arg4: memref<16x64xf32, #tpu.memory_space<vmem>>, %arg5: memref<512x16xf32, #tpu.memory_space<vmem>>, %arg6: memref<8x512xf32, #tpu.memory_space<vmem>>, %arg7: memref<8x1xf32, #tpu.memory_space<vmem>>, %arg8: memref<16x64xf32, #tpu.memory_space<vmem>>) attributes {dimension_semantics = [#tpu.dimension_semantics<parallel>], iteration_bounds = array<i64: 2>, scalar_prefetch = 0 : i64, scratch_operands = 1 : i64, tpu.core_type = #tpu.core_type<tc>, window_params = [{transform_indices = @transform_0, window_bounds = array<i64: 8, 8>}, {transform_indices = @transform_1, window_bounds = array<i64: 8, 1>}, {pipeline_mode = #tpu.pipeline_mode<synchronous>, transform_indices = @transform_2, window_bounds = array<i64: 376, 64>}, {pipeline_mode = #tpu.pipeline_mode<synchronous>, transform_indices = @transform_3, window_bounds = array<i64: 16, 64>}, {pipeline_mode = #tpu.pipeline_mode<synchronous>, transform_indices = @transform_4, window_bounds = array<i64: 512, 16>}, {pipeline_mode = #tpu.pipeline_mode<synchronous>, transform_indices = @transform_5, window_bounds = array<i64: 8, 512>}, {transform_indices = @transform_6, window_bounds = array<i64: 8, 1>}]} {
    %c0 = arith.constant 0 : index
    %c0_0 = arith.constant 0 : index
    %0 = vector.load %arg1[%c0, %c0_0] : memref<8x8xf32, #tpu.memory_space<vmem>>, vector<8x8xf32>
    %c0_1 = arith.constant 0 : index
    %c0_2 = arith.constant 0 : index
    %1 = vector.load %arg2[%c0_1, %c0_2] : memref<8x1xf32, #tpu.memory_space<vmem>>, vector<8x1xf32>
    %c0_3 = arith.constant 0 : index
    %c0_4 = arith.constant 0 : index
    %2 = vector.load %arg3[%c0_3, %c0_4] : memref<376x64xf32, #tpu.memory_space<vmem>>, vector<8x32xf32>
    %cst = arith.constant dense<0.000000e+00> : vector<8x32xf32>
    %3 = tpu.matmul %0, %2, %cst {dimension_numbers = #tpu.dot_dimension_numbers<[1], [0], [0], [1], [0, 0, 1, 1], [], []>} : vector<8x8xf32>, vector<8x32xf32>, vector<8x32xf32> -> vector<8x32xf32>
    %c0_5 = arith.constant 0 : index
    %c0_6 = arith.constant 0 : index
    %4 = vector.load %arg4[%c0_5, %c0_6] : memref<16x64xf32, #tpu.memory_space<vmem>>, vector<1x32xf32>
    %5 = vector.broadcast %4 : vector<1x32xf32> to vector<8x32xf32>
    %6 = arith.addf %3, %5 : vector<8x32xf32>
    %cst_7 = arith.constant 0.000000e+00 : f32
    %7 = vector.broadcast %cst_7 : f32 to vector<8x32xf32>
    %8 = arith.maximumf %6, %7 : vector<8x32xf32>
    %c8 = arith.constant 8 : index
    %c0_8 = arith.constant 0 : index
    %9 = vector.load %arg3[%c8, %c0_8] : memref<376x64xf32, #tpu.memory_space<vmem>>, vector<32x16xf32>
    %cst_9 = arith.constant dense<0.000000e+00> : vector<8x16xf32>
    %10 = tpu.matmul %8, %9, %cst_9 {dimension_numbers = #tpu.dot_dimension_numbers<[1], [0], [0], [1], [0, 0, 1, 1], [], []>} : vector<8x32xf32>, vector<32x16xf32>, vector<8x16xf32> -> vector<8x16xf32>
    %c1 = arith.constant 1 : index
    %c0_10 = arith.constant 0 : index
    %11 = vector.load %arg4[%c1, %c0_10] : memref<16x64xf32, #tpu.memory_space<vmem>>, vector<1x16xf32>
    %12 = vector.broadcast %11 : vector<1x16xf32> to vector<8x16xf32>
    %13 = arith.addf %10, %12 : vector<8x16xf32>
    %c40 = arith.constant 40 : index
    %c0_11 = arith.constant 0 : index
    %14 = vector.load %arg3[%c40, %c0_11] : memref<376x64xf32, #tpu.memory_space<vmem>>, vector<16x64xf32>
    %cst_12 = arith.constant dense<0.000000e+00> : vector<8x64xf32>
    %15 = tpu.matmul %13, %14, %cst_12 {dimension_numbers = #tpu.dot_dimension_numbers<[1], [0], [0], [1], [0, 0, 1, 1], [], []>} : vector<8x16xf32>, vector<16x64xf32>, vector<8x64xf32> -> vector<8x64xf32>
    %c2 = arith.constant 2 : index
    %c0_13 = arith.constant 0 : index
    %16 = vector.load %arg4[%c2, %c0_13] : memref<16x64xf32, #tpu.memory_space<vmem>>, vector<1x64xf32>
    %17 = vector.broadcast %16 : vector<1x64xf32> to vector<8x64xf32>
    %18 = arith.addf %15, %17 : vector<8x64xf32>
    %cst_14 = arith.constant 0.000000e+00 : f32
    %19 = vector.broadcast %cst_14 : f32 to vector<8x64xf32>
    %20 = arith.maximumf %18, %19 : vector<8x64xf32>
    %c56 = arith.constant 56 : index
    %c0_15 = arith.constant 0 : index
    %21 = vector.load %arg3[%c56, %c0_15] : memref<376x64xf32, #tpu.memory_space<vmem>>, vector<64x64xf32>
    %cst_16 = arith.constant dense<0.000000e+00> : vector<8x64xf32>
    %22 = tpu.matmul %20, %21, %cst_16 {dimension_numbers = #tpu.dot_dimension_numbers<[1], [0], [0], [1], [0, 0, 1, 1], [], []>} : vector<8x64xf32>, vector<64x64xf32>, vector<8x64xf32> -> vector<8x64xf32>
    %c3 = arith.constant 3 : index
    %c0_17 = arith.constant 0 : index
    %23 = vector.load %arg4[%c3, %c0_17] : memref<16x64xf32, #tpu.memory_space<vmem>>, vector<1x64xf32>
    %24 = vector.broadcast %23 : vector<1x64xf32> to vector<8x64xf32>
    %25 = arith.addf %22, %24 : vector<8x64xf32>
    %cst_18 = arith.constant 0.000000e+00 : f32
    %26 = vector.broadcast %cst_18 : f32 to vector<8x64xf32>
    %27 = arith.maximumf %25, %26 : vector<8x64xf32>
    %c120 = arith.constant 120 : index
    %c0_19 = arith.constant 0 : index
    %28 = vector.load %arg3[%c120, %c0_19] : memref<376x64xf32, #tpu.memory_space<vmem>>, vector<64x32xf32>
    %cst_20 = arith.constant dense<0.000000e+00> : vector<8x32xf32>
    %29 = tpu.matmul %27, %28, %cst_20 {dimension_numbers = #tpu.dot_dimension_numbers<[1], [0], [0], [1], [0, 0, 1, 1], [], []>} : vector<8x64xf32>, vector<64x32xf32>, vector<8x32xf32> -> vector<8x32xf32>
    %c4 = arith.constant 4 : index
    %c0_21 = arith.constant 0 : index
    %30 = vector.load %arg4[%c4, %c0_21] : memref<16x64xf32, #tpu.memory_space<vmem>>, vector<1x32xf32>
    %31 = vector.broadcast %30 : vector<1x32xf32> to vector<8x32xf32>
    %32 = arith.addf %29, %31 : vector<8x32xf32>
    %cst_22 = arith.constant 0.000000e+00 : f32
    %33 = vector.broadcast %cst_22 : f32 to vector<8x32xf32>
    %34 = arith.maximumf %32, %33 : vector<8x32xf32>
    %c184 = arith.constant 184 : index
    %c0_23 = arith.constant 0 : index
    %35 = vector.load %arg3[%c184, %c0_23] : memref<376x64xf32, #tpu.memory_space<vmem>>, vector<32x2xf32>
    %cst_24 = arith.constant dense<0.000000e+00> : vector<8x2xf32>
    %36 = tpu.matmul %34, %35, %cst_24 {dimension_numbers = #tpu.dot_dimension_numbers<[1], [0], [0], [1], [0, 0, 1, 1], [], []>} : vector<8x32xf32>, vector<32x2xf32>, vector<8x2xf32> -> vector<8x2xf32>
    %c5 = arith.constant 5 : index
    %c0_25 = arith.constant 0 : index
    %37 = vector.load %arg4[%c5, %c0_25] : memref<16x64xf32, #tpu.memory_space<vmem>>, vector<1x2xf32>
    %38 = vector.broadcast %37 : vector<1x2xf32> to vector<8x2xf32>
    %39 = arith.addf %36, %38 : vector<8x2xf32>
    %40 = vector.extract_strided_slice %39 {offsets = [0, 0], sizes = [8, 1], strides = [1, 1]} : vector<8x2xf32> to vector<8x1xf32>
    %41 = vector.extract_strided_slice %39 {offsets = [0, 1], sizes = [8, 1], strides = [1, 1]} : vector<8x2xf32> to vector<8x1xf32>
    %42 = math.exp %41 : vector<8x1xf32>
    %c224 = arith.constant 224 : index
    %c0_26 = arith.constant 0 : index
    %43 = vector.load %arg3[%c224, %c0_26] : memref<376x64xf32, #tpu.memory_space<vmem>>, vector<16x64xf32>
    %cst_27 = arith.constant dense<0.000000e+00> : vector<8x64xf32>
    %44 = tpu.matmul %13, %43, %cst_27 {dimension_numbers = #tpu.dot_dimension_numbers<[1], [0], [0], [1], [0, 0, 1, 1], [], []>} : vector<8x16xf32>, vector<16x64xf32>, vector<8x64xf32> -> vector<8x64xf32>
    %c7 = arith.constant 7 : index
    %c0_28 = arith.constant 0 : index
    %45 = vector.load %arg4[%c7, %c0_28] : memref<16x64xf32, #tpu.memory_space<vmem>>, vector<1x64xf32>
    %46 = vector.broadcast %45 : vector<1x64xf32> to vector<8x64xf32>
    %47 = arith.addf %44, %46 : vector<8x64xf32>
    %c216 = arith.constant 216 : index
    %c0_29 = arith.constant 0 : index
    %48 = vector.load %arg3[%c216, %c0_29] : memref<376x64xf32, #tpu.memory_space<vmem>>, vector<1x64xf32>
    %c0_30 = arith.constant 0 : index
    %c0_31 = arith.constant 0 : index
    %49 = vector.load %arg8[%c0_30, %c0_31] : memref<16x64xf32, #tpu.memory_space<vmem>>, vector<8x64xf32>
    tpu.vector_store %arg8[%c0_30, %c0_31], %47 {strides = array<i32>} : memref<16x64xf32, #tpu.memory_space<vmem>>, vector<8x64xf32>,
    %50 = vector.broadcast %1 : vector<8x1xf32> to vector<8x64xf32>
    %51 = vector.broadcast %48 : vector<1x64xf32> to vector<8x64xf32>
    %52 = arith.mulf %50, %51 : vector<8x64xf32>
    %c8_32 = arith.constant 8 : index
    %c0_33 = arith.constant 0 : index
    %53 = vector.load %arg8[%c8_32, %c0_33] : memref<16x64xf32, #tpu.memory_space<vmem>>, vector<8x64xf32>
    tpu.vector_store %arg8[%c8_32, %c0_33], %52 {strides = array<i32>} : memref<16x64xf32, #tpu.memory_space<vmem>>, vector<8x64xf32>,
    %c0_34 = arith.constant 0 : index
    %c0_35 = arith.constant 0 : index
    %54 = vector.load %arg5[%c0_34, %c0_35] : memref<512x16xf32, #tpu.memory_space<vmem>>, vector<512x16xf32>
    %c0_36 = arith.constant 0 : index
    %c0_37 = arith.constant 0 : index
    %55 = vector.load %arg8[%c0_36, %c0_37] : memref<16x64xf32, #tpu.memory_space<vmem>>, vector<16x64xf32>
    %cst_38 = arith.constant dense<0.000000e+00> : vector<512x64xf32>
    %56 = tpu.matmul %54, %55, %cst_38 {dimension_numbers = #tpu.dot_dimension_numbers<[1], [0], [0], [1], [0, 0, 1, 1], [], []>} : vector<512x16xf32>, vector<16x64xf32>, vector<512x64xf32> -> vector<512x64xf32>
    %cst_39 = arith.constant 0.000000e+00 : f32
    %57 = vector.broadcast %cst_39 : f32 to vector<512x64xf32>
    %58 = arith.maximumf %56, %57 : vector<512x64xf32>
    %c240 = arith.constant 240 : index
    %c0_40 = arith.constant 0 : index
    %59 = vector.load %arg3[%c240, %c0_40] : memref<376x64xf32, #tpu.memory_space<vmem>>, vector<64x64xf32>
    %cst_41 = arith.constant dense<0.000000e+00> : vector<512x64xf32>
    %60 = tpu.matmul %58, %59, %cst_41 {dimension_numbers = #tpu.dot_dimension_numbers<[1], [0], [0], [1], [0, 0, 1, 1], [], []>} : vector<512x64xf32>, vector<64x64xf32>, vector<512x64xf32> -> vector<512x64xf32>
    %c8_42 = arith.constant 8 : index
    %c0_43 = arith.constant 0 : index
    %61 = vector.load %arg4[%c8_42, %c0_43] : memref<16x64xf32, #tpu.memory_space<vmem>>, vector<1x64xf32>
    %62 = vector.broadcast %61 : vector<1x64xf32> to vector<512x64xf32>
    %63 = arith.addf %60, %62 : vector<512x64xf32>
    %cst_44 = arith.constant 0.000000e+00 : f32
    %64 = vector.broadcast %cst_44 : f32 to vector<512x64xf32>
    %65 = arith.maximumf %63, %64 : vector<512x64xf32>
    %c304 = arith.constant 304 : index
    %c0_45 = arith.constant 0 : index
    %66 = vector.load %arg3[%c304, %c0_45] : memref<376x64xf32, #tpu.memory_space<vmem>>, vector<64x32xf32>
    %cst_46 = arith.constant dense<0.000000e+00> : vector<512x32xf32>
    %67 = tpu.matmul %65, %66, %cst_46 {dimension_numbers = #tpu.dot_dimension_numbers<[1], [0], [0], [1], [0, 0, 1, 1], [], []>} : vector<512x64xf32>, vector<64x32xf32>, vector<512x32xf32> -> vector<512x32xf32>
    %c9 = arith.constant 9 : index
    %c0_47 = arith.constant 0 : index
    %68 = vector.load %arg4[%c9, %c0_47] : memref<16x64xf32, #tpu.memory_space<vmem>>, vector<1x32xf32>
    %69 = vector.broadcast %68 : vector<1x32xf32> to vector<512x32xf32>
    %70 = arith.addf %67, %69 : vector<512x32xf32>
    %cst_48 = arith.constant 0.000000e+00 : f32
    %71 = vector.broadcast %cst_48 : f32 to vector<512x32xf32>
    %72 = arith.maximumf %70, %71 : vector<512x32xf32>
    %c368 = arith.constant 368 : index
    %c0_49 = arith.constant 0 : index
    %73 = vector.load %arg3[%c368, %c0_49] : memref<376x64xf32, #tpu.memory_space<vmem>>, vector<1x32xf32>
    %c10 = arith.constant 10 : index
    %c0_50 = arith.constant 0 : index
    %74 = vector.load %arg4[%c10, %c0_50] : memref<16x64xf32, #tpu.memory_space<vmem>>, vector<1x1xf32>
    %75 = vector.broadcast %73 : vector<1x32xf32> to vector<512x32xf32>
    %76 = arith.mulf %72, %75 : vector<512x32xf32>
    %cst_51 = arith.constant dense<0.000000e+00> : vector<512xf32>
    %77 = vector.multi_reduction <add>, %76, %cst_51 [1] : vector<512x32xf32> to vector<512xf32>
    %78 = vector.shape_cast %77 : vector<512xf32> to vector<512x1xf32>
    %79 = vector.broadcast %74 : vector<1x1xf32> to vector<512x1xf32>
    %80 = arith.addf %78, %79 : vector<512x1xf32>
    %cst_52 = arith.constant 0.000000e+00 : f32
    %81 = vector.broadcast %cst_52 : f32 to vector<512x1xf32>
    %82 = arith.cmpf ogt, %80, %81 : vector<512x1xf32>
    %cst_53 = arith.constant 0.000000e+00 : f32
    %83 = vector.broadcast %cst_53 : f32 to vector<512x1xf32>
    %84 = arith.minimumf %80, %83 : vector<512x1xf32>
    %85 = math.exp %84 : vector<512x1xf32>
    %cst_54 = arith.constant 1.000000e+00 : f32
    %86 = vector.broadcast %cst_54 : f32 to vector<512x1xf32>
    %87 = arith.subf %85, %86 : vector<512x1xf32>
    %88 = arith.select %82, %80, %87 : vector<512x1xi1>, vector<512x1xf32>
    %cst_55 = arith.constant 1.000000e+00 : f32
    %89 = vector.broadcast %cst_55 : f32 to vector<512x1xf32>
    %90 = arith.addf %88, %89 : vector<512x1xf32>
    %c0_56 = arith.constant 0 : index
    %c0_57 = arith.constant 0 : index
    %91 = vector.load %arg6[%c0_56, %c0_57] : memref<8x512xf32, #tpu.memory_space<vmem>>, vector<8x512xf32>
    %cst_58 = arith.constant dense<0.000000e+00> : vector<8x1xf32>
    %92 = tpu.matmul %91, %90, %cst_58 {dimension_numbers = #tpu.dot_dimension_numbers<[1], [0], [0], [1], [0, 0, 1, 1], [], []>} : vector<8x512xf32>, vector<512x1xf32>, vector<8x1xf32> -> vector<8x1xf32>
    %cst_59 = arith.constant 5.000000e-01 : f32
    %93 = vector.broadcast %cst_59 : f32 to vector<8x1xf32>
    %94 = arith.mulf %1, %93 : vector<8x1xf32>
    %95 = arith.mulf %92, %94 : vector<8x1xf32>
    %96 = arith.mulf %42, %95 : vector<8x1xf32>
    %97 = arith.addf %96, %40 : vector<8x1xf32>
    %c0_60 = arith.constant 0 : index
    %c0_61 = arith.constant 0 : index
    %98 = vector.load %arg7[%c0_60, %c0_61] : memref<8x1xf32, #tpu.memory_space<vmem>>, vector<8x1xf32>
    tpu.vector_store %arg7[%c0_60, %c0_61], %97 {strides = array<i32>} : memref<8x1xf32, #tpu.memory_space<vmem>>, vector<8x1xf32>,
    return
  }
  func.func @transform_0(%arg0: i32) -> (i32, i32) {
    %c0_i32 = arith.constant 0 : i32
    %c0_i32_0 = arith.constant 0 : i32
    return %arg0, %c0_i32 : i32, i32
  }
  func.func @transform_1(%arg0: i32) -> (i32, i32) {
    %c0_i32 = arith.constant 0 : i32
    %c0_i32_0 = arith.constant 0 : i32
    return %arg0, %c0_i32 : i32, i32
  }
  func.func @transform_2(%arg0: i32) -> (i32, i32) {
    %c0_i32 = arith.constant 0 : i32
    %c0_i32_0 = arith.constant 0 : i32
    %c0_i32_1 = arith.constant 0 : i32
    return %c0_i32, %c0_i32_0 : i32, i32
  }
  func.func @transform_3(%arg0: i32) -> (i32, i32) {
    %c0_i32 = arith.constant 0 : i32
    %c0_i32_0 = arith.constant 0 : i32
    %c0_i32_1 = arith.constant 0 : i32
    return %c0_i32, %c0_i32_0 : i32, i32
  }
  func.func @transform_4(%arg0: i32) -> (i32, i32) {
    %c0_i32 = arith.constant 0 : i32
    %c0_i32_0 = arith.constant 0 : i32
    %c0_i32_1 = arith.constant 0 : i32
    return %c0_i32, %c0_i32_0 : i32, i32
  }
  func.func @transform_5(%arg0: i32) -> (i32, i32) {
    %c0_i32 = arith.constant 0 : i32
    %c0_i32_0 = arith.constant 0 : i32
    %c0_i32_1 = arith.constant 0 : i32
    return %c0_i32, %c0_i32_0 : i32, i32
  }
  func.func @transform_6(%arg0: i32) -> (i32, i32) {
    %c0_i32 = arith.constant 0 : i32
    %c0_i32_0 = arith.constant 0 : i32
    return %arg0, %c0_i32 : i32, i32
  }
}

</mosaic_0001>

<llo_original>
// kernel: tpu_custom_call.1
$region0: #{tpu_custom_call.1}
  #allocation0 [shape = 'u32[]', space=smem, size = 0x4, offset = 0x4, fixed_abs, tag = 'smem constant byte address 0x4 - core index']
  #allocation1 [shape = 'u32[144,128]{1,0:T(1,128)}', space=vmem, size = 0x12000, scoped, tag = 'internal scratch']
  #allocation2 [shape = 'f32[16,64]{1,0:T(8,128)}', space=vmem, size = 0x2000, scoped, tag = 'scratch operand']
  %s0 = inlined_call_operand.vmem [shape: f32[16,8], index: 0, kind: input, shape index: {}]
  %s1 = inlined_call_operand.vmem [shape: f32[16,1], index: 1, kind: input, shape index: {}]
  %s2 = inlined_call_operand.vmem [shape: f32[376,64], index: 2, kind: input, shape index: {}]
  %s3 = inlined_call_operand.vmem [shape: f32[16,64], index: 3, kind: input, shape index: {}]
  %s4 = inlined_call_operand.vmem [shape: f32[512,16], index: 4, kind: input, shape index: {}]
  %s5 = inlined_call_operand.vmem [shape: f32[8,512], index: 5, kind: input, shape index: {}]
  %s6 = inlined_call_operand.vmem [shape: f32[16,1], index: 6, kind: output, shape index: {}]
  %s7 = sld [smem:[#allocation0]]
  $region57: #{tpu_custom_call.1} parent=0
    _
  %s9 = ssub.s32 1, %s7
  %s10 = scalar_select 0, %s9, %s7
  loop: start=0, step=1, limit=4
  $region2: #{tpu_custom_call.1} parent=0 // loop_pre_header
    _
  $region3: #{tpu_custom_call.1} parent=0 // loop_header
    %s12 = sphi 0, %s16
    %p13 = scmp.ge.s32.totalorder %s12, 4
    %s22 = sphi 0, %s24
    %s25 = sphi 0, %s22
    %s26 = sphi 0, %s25
    %s42 = sphi 0, %s26
    %s48 = sphi 0, %s50
    %s51 = sphi 0, %s48
    %s52 = sphi 0, %s51
    %s68 = sphi 0, %s52
    %s72 = sphi 0, %s72
    %s74 = sphi 0, %s72
    %s75 = sphi 0, %s74
    %s89 = sphi 0, %s75
    %s93 = sphi 0, %s93
    %s95 = sphi 0, %s93
    %s96 = sphi 0, %s95
    %s110 = sphi 0, %s96
    %s114 = sphi 0, %s114
    %s116 = sphi 0, %s114
    %s117 = sphi 0, %s116
    %s131 = sphi 0, %s117
    %s135 = sphi 0, %s135
    %s137 = sphi 0, %s135
    %s138 = sphi 0, %s137
    %s152 = sphi 0, %s138
    %s158 = sphi 0, %s160
    %s161 = sphi 0, %s158
    %s162 = sphi 0, %s161
    %s178 = sphi 0, %s162
  $region4: #{tpu_custom_call.1} parent=0 // loop_header_branch
    %15 = sbr.rel (%p13) target = $region8
  $region5: #{tpu_custom_call.1} parent=0 // loop_body
    %s17 = ssub.s32 %s12, 1
    %s18 = ssub.s32 %s12, 2
    %s19 = sadd.s32 %s12, 1
    %s20 = ssub.s32 %s12, %s19
    %p21 = scmp.eq.s32.totalorder %s20, 0
    %s23 = sadd.s32 %s22, 1
    %s24 = scalar_select %p21, %s22, %s23
    %p27 = pneg %p21
    %p28 = scmp.eq.s32.totalorder %s12, 1
    %p29 = por %p27, %p28
    %p30 = scmp.ne.s32.totalorder %s22, %s25
    %p31 = scmp.eq.s32.totalorder %s12, 0
    %p32 = por %p30, %p31
    %p33 = scmp.ne.s32.totalorder %s22, %s25
    %p34 = scmp.eq.s32.totalorder %s17, 1
    %p35 = por %p33, %p34
    %p36 = scmp.ne.s32.totalorder %s25, %s26
    %p37 = scmp.eq.s32.totalorder %s17, 0
    %p38 = por %p36, %p37
    %p39 = scmp.ne.s32.totalorder %s25, %s26
    %p40 = scmp.eq.s32.totalorder %s18, 1
    %p41 = por %p39, %p40
    %p43 = scmp.ne.s32.totalorder %s26, %s42
    %p44 = scmp.eq.s32.totalorder %s18, 0
    %p45 = por %p43, %p44
    %s46 = ssub.s32 %s12, %s19
    %p47 = scmp.eq.s32.totalorder %s46, 0
    %s49 = sadd.s32 %s48, 1
    %s50 = scalar_select %p47, %s48, %s49
    %p53 = pneg %p47
    %p54 = scmp.eq.s32.totalorder %s12, 1
    %p55 = por %p53, %p54
    %p56 = scmp.ne.s32.totalorder %s48, %s51
    %p57 = scmp.eq.s32.totalorder %s12, 0
    %p58 = por %p56, %p57
    %p59 = scmp.ne.s32.totalorder %s48, %s51
    %p60 = scmp.eq.s32.totalorder %s17, 1
    %p61 = por %p59, %p60
    %p62 = scmp.ne.s32.totalorder %s51, %s52
    %p63 = scmp.eq.s32.totalorder %s17, 0
    %p64 = por %p62, %p63
    %p65 = scmp.ne.s32.totalorder %s51, %s52
    %p66 = scmp.eq.s32.totalorder %s18, 1
    %p67 = por %p65, %p66
    %p69 = scmp.ne.s32.totalorder %s52, %s68
    %p70 = scmp.eq.s32.totalorder %s18, 0
    %p71 = por %p69, %p70
    %s73 = sadd.s32 %s72, 1
    %p76 = scmp.eq.s32.totalorder %s12, 1
    %p77 = scmp.ne.s32.totalorder %s72, %s74
    %p78 = scmp.eq.s32.totalorder %s12, 0
    %p79 = por %p77, %p78
    %p80 = scmp.ne.s32.totalorder %s72, %s74
    %p81 = scmp.eq.s32.totalorder %s17, 1
    %p82 = por %p80, %p81
    %p83 = scmp.ne.s32.totalorder %s74, %s75
    %p84 = scmp.eq.s32.totalorder %s17, 0
    %p85 = por %p83, %p84
    %p86 = scmp.ne.s32.totalorder %s74, %s75
    %p87 = scmp.eq.s32.totalorder %s18, 1
    %p88 = por %p86, %p87
    %p90 = scmp.ne.s32.totalorder %s75, %s89
    %p91 = scmp.eq.s32.totalorder %s18, 0
    %p92 = por %p90, %p91
    %s94 = sadd.s32 %s93, 1
    %p97 = scmp.eq.s32.totalorder %s12, 1
    %p98 = scmp.ne.s32.totalorder %s93, %s95
    %p99 = scmp.eq.s32.totalorder %s12, 0
    %p100 = por %p98, %p99
    %p101 = scmp.ne.s32.totalorder %s93, %s95
    %p102 = scmp.eq.s32.totalorder %s17, 1
    %p103 = por %p101, %p102
    %p104 = scmp.ne.s32.totalorder %s95, %s96
    %p105 = scmp.eq.s32.totalorder %s17, 0
    %p106 = por %p104, %p105
    %p107 = scmp.ne.s32.totalorder %s95, %s96
    %p108 = scmp.eq.s32.totalorder %s18, 1
    %p109 = por %p107, %p108
    %p111 = scmp.ne.s32.totalorder %s96, %s110
    %p112 = scmp.eq.s32.totalorder %s18, 0
    %p113 = por %p111, %p112
    %s115 = sadd.s32 %s114, 1
    %p118 = scmp.eq.s32.totalorder %s12, 1
    %p119 = scmp.ne.s32.totalorder %s114, %s116
    %p120 = scmp.eq.s32.totalorder %s12, 0
    %p121 = por %p119, %p120
    %p122 = scmp.ne.s32.totalorder %s114, %s116
    %p123 = scmp.eq.s32.totalorder %s17, 1
    %p124 = por %p122, %p123
    %p125 = scmp.ne.s32.totalorder %s116, %s117
    %p126 = scmp.eq.s32.totalorder %s17, 0
    %p127 = por %p125, %p126
    %p128 = scmp.ne.s32.totalorder %s116, %s117
    %p129 = scmp.eq.s32.totalorder %s18, 1
    %p130 = por %p128, %p129
    %p132 = scmp.ne.s32.totalorder %s117, %s131
    %p133 = scmp.eq.s32.totalorder %s18, 0
    %p134 = por %p132, %p133
    %s136 = sadd.s32 %s135, 1
    %p139 = scmp.eq.s32.totalorder %s12, 1
    %p140 = scmp.ne.s32.totalorder %s135, %s137
    %p141 = scmp.eq.s32.totalorder %s12, 0
    %p142 = por %p140, %p141
    %p143 = scmp.ne.s32.totalorder %s135, %s137
    %p144 = scmp.eq.s32.totalorder %s17, 1
    %p145 = por %p143, %p144
    %p146 = scmp.ne.s32.totalorder %s137, %s138
    %p147 = scmp.eq.s32.totalorder %s17, 0
    %p148 = por %p146, %p147
    %p149 = scmp.ne.s32.totalorder %s137, %s138
    %p150 = scmp.eq.s32.totalorder %s18, 1
    %p151 = por %p149, %p150
    %p153 = scmp.ne.s32.totalorder %s138, %s152
    %p154 = scmp.eq.s32.totalorder %s18, 0
    %p155 = por %p153, %p154
    %s156 = ssub.s32 %s12, %s19
    %p157 = scmp.eq.s32.totalorder %s156, 0
    %s159 = sadd.s32 %s158, 1
    %s160 = scalar_select %p157, %s158, %s159
    %p163 = pneg %p157
    %p164 = scmp.eq.s32.totalorder %s12, 1
    %p165 = por %p163, %p164
    %p166 = scmp.ne.s32.totalorder %s158, %s161
    %p167 = scmp.eq.s32.totalorder %s12, 0
    %p168 = por %p166, %p167
    %p169 = scmp.ne.s32.totalorder %s158, %s161
    %p170 = scmp.eq.s32.totalorder %s17, 1
    %p171 = por %p169, %p170
    %p172 = scmp.ne.s32.totalorder %s161, %s162
    %p173 = scmp.eq.s32.totalorder %s17, 0
    %p174 = por %p172, %p173
    %p175 = scmp.ne.s32.totalorder %s161, %s162
    %p176 = scmp.eq.s32.totalorder %s18, 1
    %p177 = por %p175, %p176
    %p179 = scmp.ne.s32.totalorder %s162, %s178
    %p180 = scmp.eq.s32.totalorder %s18, 0
    %p181 = por %p179, %p180
    %p182 = scmp.le.s32.totalorder 1, %s12
    %p183 = scmp.lt.s32.totalorder %s12, 3
    %p184 = pnand %p182, %p183
    %p185 = pneg %p184
    // Predicated region
    $region9: #{tpu_custom_call.1} parent=5 // pred_check
      _
    $region10: #{tpu_custom_call.1} parent=5 // pred_check_branch
      %187 = sbr.rel (%p184) target = $region12
    $region11: #{tpu_custom_call.1} parent=5 // pred_region
      %s188 = ssub.s32 %s12, 1
      // Predicated region
      $region13: #{tpu_custom_call.1} parent=11 // pred_check
        %p189 = pneg %p85
      $region14: #{tpu_custom_call.1} parent=11 // pred_check_branch
        %191 = sbr.rel (%p189) target = $region16
      $region15: #{tpu_custom_call.1} parent=11 // pred_region
        _
      $region16: #{tpu_custom_call.1} parent=11 // pred_fallthru
        _
      // Predicated region
      $region17: #{tpu_custom_call.1} parent=11 // pred_check
        %p192 = pneg %p106
      $region18: #{tpu_custom_call.1} parent=11 // pred_check_branch
        %194 = sbr.rel (%p192) target = $region20
      $region19: #{tpu_custom_call.1} parent=11 // pred_region
        _
      $region20: #{tpu_custom_call.1} parent=11 // pred_fallthru
        _
      // Predicated region
      $region21: #{tpu_custom_call.1} parent=11 // pred_check
        %p195 = pneg %p127
      $region22: #{tpu_custom_call.1} parent=11 // pred_check_branch
        %197 = sbr.rel (%p195) target = $region24
      $region23: #{tpu_custom_call.1} parent=11 // pred_region
        _
      $region24: #{tpu_custom_call.1} parent=11 // pred_fallthru
        _
      // Predicated region
      $region25: #{tpu_custom_call.1} parent=11 // pred_check
        %p198 = pneg %p148
      $region26: #{tpu_custom_call.1} parent=11 // pred_check_branch
        %200 = sbr.rel (%p198) target = $region28
      $region27: #{tpu_custom_call.1} parent=11 // pred_region
        _
      $region28: #{tpu_custom_call.1} parent=11 // pred_fallthru
        _
    $region12: #{tpu_custom_call.1} parent=5 // pred_fallthru
      _
    %p201 = scmp.lt.s32.totalorder %s12, 2
    // Predicated region
    $region29: #{tpu_custom_call.1} parent=5 // pred_check
      %p202 = pneg %p201
    $region30: #{tpu_custom_call.1} parent=5 // pred_check_branch
      %204 = sbr.rel (%p202) target = $region32
    $region31: #{tpu_custom_call.1} parent=5 // pred_region
      // Predicated region
      $region33: #{tpu_custom_call.1} parent=31 // pred_check
        %p205 = pneg %p32
      $region34: #{tpu_custom_call.1} parent=31 // pred_check_branch
        %207 = sbr.rel (%p205) target = $region36
      $region35: #{tpu_custom_call.1} parent=31 // pred_region
        %p208 = scmp.lt.s32.totalorder %s12, 1
        %s209 = scalar_select %p208, %s12, 1
        %s210 = smul.addr %s209, 8
        %s211 = scalar_lea.vmem %s0, %s210
      $region36: #{tpu_custom_call.1} parent=31 // pred_fallthru
        _
      // Predicated region
      $region37: #{tpu_custom_call.1} parent=31 // pred_check
        %p212 = pneg %p58
      $region38: #{tpu_custom_call.1} parent=31 // pred_check_branch
        %214 = sbr.rel (%p212) target = $region40
      $region39: #{tpu_custom_call.1} parent=31 // pred_region
        %p215 = scmp.lt.s32.totalorder %s12, 1
        %s216 = scalar_select %p215, %s12, 1
        %s217 = smul.addr %s216, 8
        %s218 = scalar_lea.vmem %s1, %s217
      $region40: #{tpu_custom_call.1} parent=31 // pred_fallthru
        _
    $region32: #{tpu_custom_call.1} parent=5 // pred_fallthru
      _
    %p219 = scmp.le.s32.totalorder 1, %s12
    %p220 = scmp.lt.s32.totalorder %s12, 3
    %p221 = pnand %p219, %p220
    %p222 = pneg %p221
    // Predicated region
    $region41: #{tpu_custom_call.1} parent=5 // pred_check
      _
    $region42: #{tpu_custom_call.1} parent=5 // pred_check_branch
      %224 = sbr.rel (%p221) target = $region44
    $region43: #{tpu_custom_call.1} parent=5 // pred_region
      %s225 = ssub.s32 %s12, 1
      %p226 = scmp.lt.s32.totalorder %s17, 1
      %s227 = scalar_select %p226, %s17, 1
      %s228 = smul.addr %s227, 8
      %s229 = scalar_lea.vmem %s0, %s228
      %p230 = pneg %p38
      %p231 = pneg %p35
      %p232 = scmp.lt.s32.totalorder %s17, 1
      %s233 = scalar_select %p232, %s17, 1
      %s234 = smul.addr %s233, 8
      %s235 = scalar_lea.vmem %s1, %s234
      %p236 = pneg %p64
      %p237 = pneg %p61
      %p238 = pneg %p85
      %p239 = pneg %p82
      %p240 = pneg %p106
      %p241 = pneg %p103
      %p242 = pneg %p127
      %p243 = pneg %p124
      %p244 = pneg %p148
      %p245 = pneg %p145
      %p246 = pneg %p174
      %p247 = pneg %p171
      %p248 = scmp.lt.s32.totalorder %s17, 1
      %s249 = scalar_select %p248, %s17, 1
      %s250 = smul.addr %s249, 8
      %s251 = scalar_lea.vmem %s6, %s250
      %p252 = scmp.lt.s32.totalorder %s17, 1
      %s253 = scalar_select %p252, %s17, 1
      %s254 = smul.addr %s253, 8
      %s255 = scalar_lea.vmem %s0, %s254
      %p256 = scmp.lt.s32.totalorder %s17, 1
      %s257 = scalar_select %p256, %s17, 1
      %s258 = smul.addr %s257, 8
      %s259 = scalar_lea.vmem %s1, %s258
      %p260 = scmp.lt.s32.totalorder %s17, 1
      %s261 = scalar_select %p260, %s17, 1
      %s262 = smul.addr %s261, 8
      %s263 = scalar_lea.vmem %s6, %s262
      %v264 = vld [vmem:[%s255] sm:$0xff]
      %v265 = vld [vmem:[%s259] sm:$0xff]
      %v266 = vld [vmem:[%s2] sm:$0xff]
      %v267 = vld [vmem:[%s3] sm:$0x1]
      %v268 = vlaneseq
      %v269 = vshrl.u32 %v268, 7
      %v270 = vsub.s32 0, %v269
      %v271 = vrot.slane %v267, %v270
      %vm272 = vcmask 64512
      %v274 = vsel %vm272, %v264, 0
      %276 = vmatprep.subr.mxu0 0.0
      %277 = vmatpush1.msra.mxu0 %v266
      %278 = vmatprep.subr.mxu0 0.0
      %279 = vmatpush1.msra.mxu0 0.0
      %280 = vmatprep.subr.mxu0 0.0
      %281 = vmatpush1.msra.mxu0 0.0
      %282 = vmatprep.subr.mxu0 0.0
      %283 = vmatpush1.msra.mxu0 0.0
      %284 = vmatprep.subr.mxu0 0.0
      %285 = vmatpush1.msra.mxu0 0.0
      %286 = vmatprep.subr.mxu0 0.0
      %287 = vmatpush1.msra.mxu0 0.0
      %288 = vmatprep.subr.mxu0 0.0
      %289 = vmatpush1.msra.mxu0 0.0
      %290 = vmatprep.subr.mxu0 0.0
      %291 = vmatpush1.msra.mxu0 0.0
      %292 = vmatprep.subr.mxu0 0.0
      %293 = vmatpush1.msra.mxu0 0.0
      %294 = vmatprep.subr.mxu0 0.0
      %295 = vmatpush1.msra.mxu0 0.0
      %296 = vmatprep.subr.mxu0 0.0
      %297 = vmatpush1.msra.mxu0 0.0
      %298 = vmatprep.subr.mxu0 0.0
      %299 = vmatpush1.msra.mxu0 0.0
      %300 = vmatprep.subr.mxu0 0.0
      %301 = vmatpush1.msra.mxu0 0.0
      %302 = vmatprep.subr.mxu0 0.0
      %303 = vmatpush1.msra.mxu0 0.0
      %304 = vmatprep.subr.mxu0 0.0
      %305 = vmatpush1.msra.mxu0 0.0
      %306 = vmatprep.subr.mxu0 0.0
      %307 = vmatpush1.msra.mxu0 0.0
      %308 = vmatprep.subr.mxu0 0.0
      %309 = vmatpush1.msra.mxu0 0.0
      %310 = vmatprep.subr.mxu0 0.0
      %311 = vmatpush1.msra.mxu0 0.0
      %312 = vmatprep.subr.mxu0 0.0
      %313 = vmatpush1.msra.mxu0 0.0
      %314 = vmatprep.subr.mxu0 0.0
      %315 = vmatpush1.msra.mxu0 0.0
      %316 = vmatprep.subr.mxu0 0.0
      %317 = vmatpush1.msra.mxu0 0.0
      %318 = vmatprep.subr.mxu0 0.0
      %319 = vmatpush1.msra.mxu0 0.0
      %320 = vmatprep.subr.mxu0 0.0
      %321 = vmatpush1.msra.mxu0 0.0
      %322 = vmatprep.subr.mxu0 0.0
      %323 = vmatpush1.msra.mxu0 0.0
      %324 = vmatprep.subr.mxu0 0.0
      %325 = vmatpush1.msra.mxu0 0.0
      %326 = vmatprep.subr.mxu0 0.0
      %327 = vmatpush1.msra.mxu0 0.0
      %328 = vmatprep.subr.mxu0 0.0
      %329 = vmatpush1.msra.mxu0 0.0
      %330 = vmatprep.subr.mxu0 0.0
      %331 = vmatpush1.msra.mxu0 0.0
      %332 = vmatprep.subr.mxu0 0.0
      %333 = vmatpush1.msra.mxu0 0.0
      %334 = vmatprep.subr.mxu0 0.0
      %335 = vmatpush1.msra.mxu0 0.0
      %336 = vmatprep.subr.mxu0 0.0
      %337 = vmatpush1.msra.mxu0 0.0
      %338 = vmatprep.subr.mxu0 0.0
      %339 = vmatpush1.msra.mxu0 0.0
      %340 = vmatprep.mubr.f32.mxu0 0.0
      %341 = vmatmul.mubr.f32.gmra.mrb[0].mxu0 %v274
      %v342 = vpop.f32.mrb[0].mxu0
      %v343 = vadd.f32 %v271, %v342
      %v344 = vpop.f32.mrb[0].mxu0
      %345 = vdwg.mxu0
      %v346 = vmax.f32 %v343, 0.0
      %v347 = vld [vmem:[%s2 + $0x8] sm:$0xff]
      %v348 = vld [vmem:[%s2 + $0x10] sm:$0xff]
      %v349 = vld [vmem:[%s2 + $0x18] sm:$0xff]
      %v350 = vld [vmem:[%s2 + $0x20] sm:$0xff]
      %v351 = vld [vmem:[%s3 + $0x1] sm:$0x1]
      %v352 = vlaneseq
      %v353 = vshrl.u32 %v352, 7
      %v354 = vsub.s32 0, %v353
      %v355 = vrot.slane %v351, %v354
      %vm356 = vcmask 261120
      %v358 = vsel %vm356, %v346, 0
      %360 = vmatprep.subr.mxu0 0.0
      %361 = vmatpush1.msra.mxu0 %v347
      %362 = vmatprep.subr.mxu0 0.0
      %363 = vmatpush1.msra.mxu0 %v348
      %364 = vmatprep.subr.mxu0 0.0
      %365 = vmatpush1.msra.mxu0 %v349
      %366 = vmatprep.subr.mxu0 0.0
      %367 = vmatpush1.msra.mxu0 %v350
      %368 = vmatprep.subr.mxu0 0.0
      %369 = vmatpush1.msra.mxu0 0.0
      %370 = vmatprep.subr.mxu0 0.0
      %371 = vmatpush1.msra.mxu0 0.0
      %372 = vmatprep.subr.mxu0 0.0
      %373 = vmatpush1.msra.mxu0 0.0
      %374 = vmatprep.subr.mxu0 0.0
      %375 = vmatpush1.msra.mxu0 0.0
      %376 = vmatprep.subr.mxu0 0.0
      %377 = vmatpush1.msra.mxu0 0.0
      %378 = vmatprep.subr.mxu0 0.0
      %379 = vmatpush1.msra.mxu0 0.0
      %380 = vmatprep.subr.mxu0 0.0
      %381 = vmatpush1.msra.mxu0 0.0
      %382 = vmatprep.subr.mxu0 0.0
      %383 = vmatpush1.msra.mxu0 0.0
      %384 = vmatprep.subr.mxu0 0.0
      %385 = vmatpush1.msra.mxu0 0.0
      %386 = vmatprep.subr.mxu0 0.0
      %387 = vmatpush1.msra.mxu0 0.0
      %388 = vmatprep.subr.mxu0 0.0
      %389 = vmatpush1.msra.mxu0 0.0
      %390 = vmatprep.subr.mxu0 0.0
      %391 = vmatpush1.msra.mxu0 0.0
      %392 = vmatprep.subr.mxu0 0.0
      %393 = vmatpush1.msra.mxu0 0.0
      %394 = vmatprep.subr.mxu0 0.0
      %395 = vmatpush1.msra.mxu0 0.0
      %396 = vmatprep.subr.mxu0 0.0
      %397 = vmatpush1.msra.mxu0 0.0
      %398 = vmatprep.subr.mxu0 0.0
      %399 = vmatpush1.msra.mxu0 0.0
      %400 = vmatprep.subr.mxu0 0.0
      %401 = vmatpush1.msra.mxu0 0.0
      %402 = vmatprep.subr.mxu0 0.0
      %403 = vmatpush1.msra.mxu0 0.0
      %404 = vmatprep.subr.mxu0 0.0
      %405 = vmatpush1.msra.mxu0 0.0
      %406 = vmatprep.subr.mxu0 0.0
      %407 = vmatpush1.msra.mxu0 0.0
      %408 = vmatprep.subr.mxu0 0.0
      %409 = vmatpush1.msra.mxu0 0.0
      %410 = vmatprep.subr.mxu0 0.0
      %411 = vmatpush1.msra.mxu0 0.0
      %412 = vmatprep.subr.mxu0 0.0
      %413 = vmatpush1.msra.mxu0 0.0
      %414 = vmatprep.subr.mxu0 0.0
      %415 = vmatpush1.msra.mxu0 0.0
      %416 = vmatprep.subr.mxu0 0.0
      %417 = vmatpush1.msra.mxu0 0.0
      %418 = vmatprep.subr.mxu0 0.0
      %419 = vmatpush1.msra.mxu0 0.0
      %420 = vmatprep.subr.mxu0 0.0
      %421 = vmatpush1.msra.mxu0 0.0
      %422 = vmatprep.subr.mxu0 0.0
      %423 = vmatpush1.msra.mxu0 0.0
      %424 = vmatprep.mubr.f32.mxu0 0.0
      %425 = vmatmul.mubr.f32.gmra.mrb[0].mxu0 %v358
      %v426 = vpop.f32.mrb[0].mxu0
      %v427 = vadd.f32 %v355, %v426
      %v428 = vpop.f32.mrb[0].mxu0
      %429 = vdwg.mxu0
      %v430 = vld [vmem:[%s2 + $0x28] sm:$0xff]
      %v431 = vld [vmem:[%s2 + $0x30] sm:$0xff]
      %v432 = vld [vmem:[%s3 + $0x2] sm:$0x1]
      %v433 = vlaneseq
      %v434 = vshrl.u32 %v433, 7
      %v435 = vsub.s32 0, %v434
      %v436 = vrot.slane %v432, %v435
      %vm437 = vcmask 130048
      %v439 = vsel %vm437, %v427, 0
      %441 = vmatprep.subr.mxu0 0.0
      %442 = vmatpush1.msra.mxu0 %v430
      %443 = vmatprep.subr.mxu0 0.0
      %444 = vmatpush1.msra.mxu0 %v431
      %445 = vmatprep.subr.mxu0 0.0
      %446 = vmatpush1.msra.mxu0 0.0
      %447 = vmatprep.subr.mxu0 0.0
      %448 = vmatpush1.msra.mxu0 0.0
      %449 = vmatprep.subr.mxu0 0.0
      %450 = vmatpush1.msra.mxu0 0.0
      %451 = vmatprep.subr.mxu0 0.0
      %452 = vmatpush1.msra.mxu0 0.0
      %453 = vmatprep.subr.mxu0 0.0
      %454 = vmatpush1.msra.mxu0 0.0
      %455 = vmatprep.subr.mxu0 0.0
      %456 = vmatpush1.msra.mxu0 0.0
      %457 = vmatprep.subr.mxu0 0.0
      %458 = vmatpush1.msra.mxu0 0.0
      %459 = vmatprep.subr.mxu0 0.0
      %460 = vmatpush1.msra.mxu0 0.0
      %461 = vmatprep.subr.mxu0 0.0
      %462 = vmatpush1.msra.mxu0 0.0
      %463 = vmatprep.subr.mxu0 0.0
      %464 = vmatpush1.msra.mxu0 0.0
      %465 = vmatprep.subr.mxu0 0.0
      %466 = vmatpush1.msra.mxu0 0.0
      %467 = vmatprep.subr.mxu0 0.0
      %468 = vmatpush1.msra.mxu0 0.0
      %469 = vmatprep.subr.mxu0 0.0
      %470 = vmatpush1.msra.mxu0 0.0
      %471 = vmatprep.subr.mxu0 0.0
      %472 = vmatpush1.msra.mxu0 0.0
      %473 = vmatprep.subr.mxu0 0.0
      %474 = vmatpush1.msra.mxu0 0.0
      %475 = vmatprep.subr.mxu0 0.0
      %476 = vmatpush1.msra.mxu0 0.0
      %477 = vmatprep.subr.mxu0 0.0
      %478 = vmatpush1.msra.mxu0 0.0
      %479 = vmatprep.subr.mxu0 0.0
      %480 = vmatpush1.msra.mxu0 0.0
      %481 = vmatprep.subr.mxu0 0.0
      %482 = vmatpush1.msra.mxu0 0.0
      %483 = vmatprep.subr.mxu0 0.0
      %484 = vmatpush1.msra.mxu0 0.0
      %485 = vmatprep.subr.mxu0 0.0
      %486 = vmatpush1.msra.mxu0 0.0
      %487 = vmatprep.subr.mxu0 0.0
      %488 = vmatpush1.msra.mxu0 0.0
      %489 = vmatprep.subr.mxu0 0.0
      %490 = vmatpush1.msra.mxu0 0.0
      %491 = vmatprep.subr.mxu0 0.0
      %492 = vmatpush1.msra.mxu0 0.0
      %493 = vmatprep.subr.mxu0 0.0
      %494 = vmatpush1.msra.mxu0 0.0
      %495 = vmatprep.subr.mxu0 0.0
      %496 = vmatpush1.msra.mxu0 0.0
      %497 = vmatprep.subr.mxu0 0.0
      %498 = vmatpush1.msra.mxu0 0.0
      %499 = vmatprep.subr.mxu0 0.0
      %500 = vmatpush1.msra.mxu0 0.0
      %501 = vmatprep.subr.mxu0 0.0
      %502 = vmatpush1.msra.mxu0 0.0
      %503 = vmatprep.subr.mxu0 0.0
      %504 = vmatpush1.msra.mxu0 0.0
      %505 = vmatprep.mubr.f32.mxu0 0.0
      %506 = vmatmul.mubr.f32.gmra.mrb[0].mxu0 %v439
      %v507 = vpop.f32.mrb[0].mxu0
      %v508 = vadd.f32 %v436, %v507
      %v509 = vpop.f32.mrb[0].mxu0
      %510 = vdwg.mxu0
      %v511 = vmax.f32 %v508, 0.0
      %v512 = vld [vmem:[%s2 + $0x38] sm:$0xff]
      %v513 = vld [vmem:[%s2 + $0x40] sm:$0xff]
      %v514 = vld [vmem:[%s2 + $0x48] sm:$0xff]
      %v515 = vld [vmem:[%s2 + $0x50] sm:$0xff]
      %v516 = vld [vmem:[%s2 + $0x58] sm:$0xff]
      %v517 = vld [vmem:[%s2 + $0x60] sm:$0xff]
      %v518 = vld [vmem:[%s2 + $0x68] sm:$0xff]
      %v519 = vld [vmem:[%s2 + $0x70] sm:$0xff]
      %v520 = vld [vmem:[%s3 + $0x3] sm:$0x1]
      %v521 = vlaneseq
      %v522 = vshrl.u32 %v521, 7
      %v523 = vsub.s32 0, %v522
      %v524 = vrot.slane %v520, %v523
      %vm525 = vcmask 523264
      %v527 = vsel %vm525, %v511, 0
      %529 = vmatprep.subr.mxu0 0.0
      %530 = vmatpush1.msra.mxu0 %v512
      %531 = vmatprep.subr.mxu0 0.0
      %532 = vmatpush1.msra.mxu0 %v513
      %533 = vmatprep.subr.mxu0 0.0
      %534 = vmatpush1.msra.mxu0 %v514
      %535 = vmatprep.subr.mxu0 0.0
      %536 = vmatpush1.msra.mxu0 %v515
      %537 = vmatprep.subr.mxu0 0.0
      %538 = vmatpush1.msra.mxu0 %v516
      %539 = vmatprep.subr.mxu0 0.0
      %540 = vmatpush1.msra.mxu0 %v517
      %541 = vmatprep.subr.mxu0 0.0
      %542 = vmatpush1.msra.mxu0 %v518
      %543 = vmatprep.subr.mxu0 0.0
      %544 = vmatpush1.msra.mxu0 %v519
      %545 = vmatprep.subr.mxu0 0.0
      %546 = vmatpush1.msra.mxu0 0.0
      %547 = vmatprep.subr.mxu0 0.0
      %548 = vmatpush1.msra.mxu0 0.0
      %549 = vmatprep.subr.mxu0 0.0
      %550 = vmatpush1.msra.mxu0 0.0
      %551 = vmatprep.subr.mxu0 0.0
      %552 = vmatpush1.msra.mxu0 0.0
      %553 = vmatprep.subr.mxu0 0.0
      %554 = vmatpush1.msra.mxu0 0.0
      %555 = vmatprep.subr.mxu0 0.0
      %556 = vmatpush1.msra.mxu0 0.0
      %557 = vmatprep.subr.mxu0 0.0
      %558 = vmatpush1.msra.mxu0 0.0
      %559 = vmatprep.subr.mxu0 0.0
      %560 = vmatpush1.msra.mxu0 0.0
      %561 = vmatprep.subr.mxu0 0.0
      %562 = vmatpush1.msra.mxu0 0.0
      %563 = vmatprep.subr.mxu0 0.0
      %564 = vmatpush1.msra.mxu0 0.0
      %565 = vmatprep.subr.mxu0 0.0
      %566 = vmatpush1.msra.mxu0 0.0
      %567 = vmatprep.subr.mxu0 0.0
      %568 = vmatpush1.msra.mxu0 0.0
      %569 = vmatprep.subr.mxu0 0.0
      %570 = vmatpush1.msra.mxu0 0.0
      %571 = vmatprep.subr.mxu0 0.0
      %572 = vmatpush1.msra.mxu0 0.0
      %573 = vmatprep.subr.mxu0 0.0
      %574 = vmatpush1.msra.mxu0 0.0
      %575 = vmatprep.subr.mxu0 0.0
      %576 = vmatpush1.msra.mxu0 0.0
      %577 = vmatprep.subr.mxu0 0.0
      %578 = vmatpush1.msra.mxu0 0.0
      %579 = vmatprep.subr.mxu0 0.0
      %580 = vmatpush1.msra.mxu0 0.0
      %581 = vmatprep.subr.mxu0 0.0
      %582 = vmatpush1.msra.mxu0 0.0
      %583 = vmatprep.subr.mxu0 0.0
      %584 = vmatpush1.msra.mxu0 0.0
      %585 = vmatprep.subr.mxu0 0.0
      %586 = vmatpush1.msra.mxu0 0.0
      %587 = vmatprep.subr.mxu0 0.0
      %588 = vmatpush1.msra.mxu0 0.0
      %589 = vmatprep.subr.mxu0 0.0
      %590 = vmatpush1.msra.mxu0 0.0
      %591 = vmatprep.subr.mxu0 0.0
      %592 = vmatpush1.msra.mxu0 0.0
      %593 = vmatprep.mubr.f32.mxu0 0.0
      %594 = vmatmul.mubr.f32.gmra.mrb[0].mxu0 %v527
      %v595 = vpop.f32.mrb[0].mxu0
      %v596 = vadd.f32 %v524, %v595
      %v597 = vpop.f32.mrb[0].mxu0
      %598 = vdwg.mxu0
      %v599 = vmax.f32 %v596, 0.0
      %v600 = vld [vmem:[%s2 + $0x78] sm:$0xff]
      %v601 = vld [vmem:[%s2 + $0x80] sm:$0xff]
      %v602 = vld [vmem:[%s2 + $0x88] sm:$0xff]
      %v603 = vld [vmem:[%s2 + $0x90] sm:$0xff]
      %v604 = vld [vmem:[%s2 + $0x98] sm:$0xff]
      %v605 = vld [vmem:[%s2 + $0xa0] sm:$0xff]
      %v606 = vld [vmem:[%s2 + $0xa8] sm:$0xff]
      %v607 = vld [vmem:[%s2 + $0xb0] sm:$0xff]
      %v608 = vld [vmem:[%s3 + $0x4] sm:$0x1]
      %v609 = vlaneseq
      %v610 = vshrl.u32 %v609, 7
      %v611 = vsub.s32 0, %v610
      %v612 = vrot.slane %v608, %v611
      %v614 = vsel %vm525, %v599, 0
      %616 = vmatprep.subr.mxu0 0.0
      %617 = vmatpush1.msra.mxu0 %v600
      %618 = vmatprep.subr.mxu0 0.0
      %619 = vmatpush1.msra.mxu0 %v601
      %620 = vmatprep.subr.mxu0 0.0
      %621 = vmatpush1.msra.mxu0 %v602
      %622 = vmatprep.subr.mxu0 0.0
      %623 = vmatpush1.msra.mxu0 %v603
      %624 = vmatprep.subr.mxu0 0.0
      %625 = vmatpush1.msra.mxu0 %v604
      %626 = vmatprep.subr.mxu0 0.0
      %627 = vmatpush1.msra.mxu0 %v605
      %628 = vmatprep.subr.mxu0 0.0
      %629 = vmatpush1.msra.mxu0 %v606
      %630 = vmatprep.subr.mxu0 0.0
      %631 = vmatpush1.msra.mxu0 %v607
      %632 = vmatprep.subr.mxu0 0.0
      %633 = vmatpush1.msra.mxu0 0.0
      %634 = vmatprep.subr.mxu0 0.0
      %635 = vmatpush1.msra.mxu0 0.0
      %636 = vmatprep.subr.mxu0 0.0
      %637 = vmatpush1.msra.mxu0 0.0
      %638 = vmatprep.subr.mxu0 0.0
      %639 = vmatpush1.msra.mxu0 0.0
      %640 = vmatprep.subr.mxu0 0.0
      %641 = vmatpush1.msra.mxu0 0.0
      %642 = vmatprep.subr.mxu0 0.0
      %643 = vmatpush1.msra.mxu0 0.0
      %644 = vmatprep.subr.mxu0 0.0
      %645 = vmatpush1.msra.mxu0 0.0
      %646 = vmatprep.subr.mxu0 0.0
      %647 = vmatpush1.msra.mxu0 0.0
      %648 = vmatprep.subr.mxu0 0.0
      %649 = vmatpush1.msra.mxu0 0.0
      %650 = vmatprep.subr.mxu0 0.0
      %651 = vmatpush1.msra.mxu0 0.0
      %652 = vmatprep.subr.mxu0 0.0
      %653 = vmatpush1.msra.mxu0 0.0
      %654 = vmatprep.subr.mxu0 0.0
      %655 = vmatpush1.msra.mxu0 0.0
      %656 = vmatprep.subr.mxu0 0.0
      %657 = vmatpush1.msra.mxu0 0.0
      %658 = vmatprep.subr.mxu0 0.0
      %659 = vmatpush1.msra.mxu0 0.0
      %660 = vmatprep.subr.mxu0 0.0
      %661 = vmatpush1.msra.mxu0 0.0
      %662 = vmatprep.subr.mxu0 0.0
      %663 = vmatpush1.msra.mxu0 0.0
      %664 = vmatprep.subr.mxu0 0.0
      %665 = vmatpush1.msra.mxu0 0.0
      %666 = vmatprep.subr.mxu0 0.0
      %667 = vmatpush1.msra.mxu0 0.0
      %668 = vmatprep.subr.mxu0 0.0
      %669 = vmatpush1.msra.mxu0 0.0
      %670 = vmatprep.subr.mxu0 0.0
      %671 = vmatpush1.msra.mxu0 0.0
      %672 = vmatprep.subr.mxu0 0.0
      %673 = vmatpush1.msra.mxu0 0.0
      %674 = vmatprep.subr.mxu0 0.0
      %675 = vmatpush1.msra.mxu0 0.0
      %676 = vmatprep.subr.mxu0 0.0
      %677 = vmatpush1.msra.mxu0 0.0
      %678 = vmatprep.subr.mxu0 0.0
      %679 = vmatpush1.msra.mxu0 0.0
      %680 = vmatprep.mubr.f32.mxu0 0.0
      %681 = vmatmul.mubr.f32.gmra.mrb[0].mxu0 %v614
      %v682 = vpop.f32.mrb[0].mxu0
      %v683 = vadd.f32 %v612, %v682
      %v684 = vpop.f32.mrb[0].mxu0
      %685 = vdwg.mxu0
      %v686 = vmax.f32 %v683, 0.0
      %v687 = vld [vmem:[%s2 + $0xb8] sm:$0xff]
      %v688 = vld [vmem:[%s2 + $0xc0] sm:$0xff]
      %v689 = vld [vmem:[%s2 + $0xc8] sm:$0xff]
      %v690 = vld [vmem:[%s2 + $0xd0] sm:$0xff]
      %v691 = vld [vmem:[%s3 + $0x5] sm:$0x1]
      %v692 = vlaneseq
      %v693 = vshrl.u32 %v692, 7
      %v694 = vsub.s32 0, %v693
      %v695 = vrot.slane %v691, %v694
      %v697 = vsel %vm356, %v686, 0
      %699 = vmatprep.subr.mxu0 0.0
      %700 = vmatpush1.msra.mxu0 %v687
      %701 = vmatprep.subr.mxu0 0.0
      %702 = vmatpush1.msra.mxu0 %v688
      %703 = vmatprep.subr.mxu0 0.0
      %704 = vmatpush1.msra.mxu0 %v689
      %705 = vmatprep.subr.mxu0 0.0
      %706 = vmatpush1.msra.mxu0 %v690
      %707 = vmatprep.subr.mxu0 0.0
      %708 = vmatpush1.msra.mxu0 0.0
      %709 = vmatprep.subr.mxu0 0.0
      %710 = vmatpush1.msra.mxu0 0.0
      %711 = vmatprep.subr.mxu0 0.0
      %712 = vmatpush1.msra.mxu0 0.0
      %713 = vmatprep.subr.mxu0 0.0
      %714 = vmatpush1.msra.mxu0 0.0
      %715 = vmatprep.subr.mxu0 0.0
      %716 = vmatpush1.msra.mxu0 0.0
      %717 = vmatprep.subr.mxu0 0.0
      %718 = vmatpush1.msra.mxu0 0.0
      %719 = vmatprep.subr.mxu0 0.0
      %720 = vmatpush1.msra.mxu0 0.0
      %721 = vmatprep.subr.mxu0 0.0
      %722 = vmatpush1.msra.mxu0 0.0
      %723 = vmatprep.subr.mxu0 0.0
      %724 = vmatpush1.msra.mxu0 0.0
      %725 = vmatprep.subr.mxu0 0.0
      %726 = vmatpush1.msra.mxu0 0.0
      %727 = vmatprep.subr.mxu0 0.0
      %728 = vmatpush1.msra.mxu0 0.0
      %729 = vmatprep.subr.mxu0 0.0
      %730 = vmatpush1.msra.mxu0 0.0
      %731 = vmatprep.subr.mxu0 0.0
      %732 = vmatpush1.msra.mxu0 0.0
      %733 = vmatprep.subr.mxu0 0.0
      %734 = vmatpush1.msra.mxu0 0.0
      %735 = vmatprep.subr.mxu0 0.0
      %736 = vmatpush1.msra.mxu0 0.0
      %737 = vmatprep.subr.mxu0 0.0
      %738 = vmatpush1.msra.mxu0 0.0
      %739 = vmatprep.subr.mxu0 0.0
      %740 = vmatpush1.msra.mxu0 0.0
      %741 = vmatprep.subr.mxu0 0.0
      %742 = vmatpush1.msra.mxu0 0.0
      %743 = vmatprep.subr.mxu0 0.0
      %744 = vmatpush1.msra.mxu0 0.0
      %745 = vmatprep.subr.mxu0 0.0
      %746 = vmatpush1.msra.mxu0 0.0
      %747 = vmatprep.subr.mxu0 0.0
      %748 = vmatpush1.msra.mxu0 0.0
      %749 = vmatprep.subr.mxu0 0.0
      %750 = vmatpush1.msra.mxu0 0.0
      %751 = vmatprep.subr.mxu0 0.0
      %752 = vmatpush1.msra.mxu0 0.0
      %753 = vmatprep.subr.mxu0 0.0
      %754 = vmatpush1.msra.mxu0 0.0
      %755 = vmatprep.subr.mxu0 0.0
      %756 = vmatpush1.msra.mxu0 0.0
      %757 = vmatprep.subr.mxu0 0.0
      %758 = vmatpush1.msra.mxu0 0.0
      %759 = vmatprep.subr.mxu0 0.0
      %760 = vmatpush1.msra.mxu0 0.0
      %761 = vmatprep.subr.mxu0 0.0
      %762 = vmatpush1.msra.mxu0 0.0
      %763 = vmatprep.mubr.f32.mxu0 0.0
      %764 = vmatmul.mubr.f32.gmra.mrb[0].mxu0 %v697
      %v765 = vpop.f32.mrb[0].mxu0
      %v766 = vadd.f32 %v695, %v765
      %v767 = vpop.f32.mrb[0].mxu0
      %768 = vdwg.mxu0
      %v769 = vmul.f32 %v766, 1.442695
      %v770 = vpow.pop %v769
      %v771 = vld [vmem:[%s2 + $0xe0] sm:$0xff]
      %v772 = vld [vmem:[%s2 + $0xe8] sm:$0xff]
      %v773 = vld [vmem:[%s3 + $0x7] sm:$0x1]
      %v774 = vlaneseq
      %v775 = vshrl.u32 %v774, 7
      %v776 = vsub.s32 0, %v775
      %v777 = vrot.slane %v773, %v776
      %778 = vmatprep.subr.mxu0 0.0
      %779 = vmatpush1.msra.mxu0 %v771
      %780 = vmatprep.subr.mxu0 0.0
      %781 = vmatpush1.msra.mxu0 %v772
      %782 = vmatprep.subr.mxu0 0.0
      %783 = vmatpush1.msra.mxu0 0.0
      %784 = vmatprep.subr.mxu0 0.0
      %785 = vmatpush1.msra.mxu0 0.0
      %786 = vmatprep.subr.mxu0 0.0
      %787 = vmatpush1.msra.mxu0 0.0
      %788 = vmatprep.subr.mxu0 0.0
      %789 = vmatpush1.msra.mxu0 0.0
      %790 = vmatprep.subr.mxu0 0.0
      %791 = vmatpush1.msra.mxu0 0.0
      %792 = vmatprep.subr.mxu0 0.0
      %793 = vmatpush1.msra.mxu0 0.0
      %794 = vmatprep.subr.mxu0 0.0
      %795 = vmatpush1.msra.mxu0 0.0
      %796 = vmatprep.subr.mxu0 0.0
      %797 = vmatpush1.msra.mxu0 0.0
      %798 = vmatprep.subr.mxu0 0.0
      %799 = vmatpush1.msra.mxu0 0.0
      %800 = vmatprep.subr.mxu0 0.0
      %801 = vmatpush1.msra.mxu0 0.0
      %802 = vmatprep.subr.mxu0 0.0
      %803 = vmatpush1.msra.mxu0 0.0
      %804 = vmatprep.subr.mxu0 0.0
      %805 = vmatpush1.msra.mxu0 0.0
      %806 = vmatprep.subr.mxu0 0.0
      %807 = vmatpush1.msra.mxu0 0.0
      %808 = vmatprep.subr.mxu0 0.0
      %809 = vmatpush1.msra.mxu0 0.0
      %810 = vmatprep.subr.mxu0 0.0
      %811 = vmatpush1.msra.mxu0 0.0
      %812 = vmatprep.subr.mxu0 0.0
      %813 = vmatpush1.msra.mxu0 0.0
      %814 = vmatprep.subr.mxu0 0.0
      %815 = vmatpush1.msra.mxu0 0.0
      %816 = vmatprep.subr.mxu0 0.0
      %817 = vmatpush1.msra.mxu0 0.0
      %818 = vmatprep.subr.mxu0 0.0
      %819 = vmatpush1.msra.mxu0 0.0
      %820 = vmatprep.subr.mxu0 0.0
      %821 = vmatpush1.msra.mxu0 0.0
      %822 = vmatprep.subr.mxu0 0.0
      %823 = vmatpush1.msra.mxu0 0.0
      %824 = vmatprep.subr.mxu0 0.0
      %825 = vmatpush1.msra.mxu0 0.0
      %826 = vmatprep.subr.mxu0 0.0
      %827 = vmatpush1.msra.mxu0 0.0
      %828 = vmatprep.subr.mxu0 0.0
      %829 = vmatpush1.msra.mxu0 0.0
      %830 = vmatprep.subr.mxu0 0.0
      %831 = vmatpush1.msra.mxu0 0.0
      %832 = vmatprep.subr.mxu0 0.0
      %833 = vmatpush1.msra.mxu0 0.0
      %834 = vmatprep.subr.mxu0 0.0
      %835 = vmatpush1.msra.mxu0 0.0
      %836 = vmatprep.subr.mxu0 0.0
      %837 = vmatpush1.msra.mxu0 0.0
      %838 = vmatprep.subr.mxu0 0.0
      %839 = vmatpush1.msra.mxu0 0.0
      %840 = vmatprep.subr.mxu0 0.0
      %841 = vmatpush1.msra.mxu0 0.0
      %842 = vmatprep.mubr.f32.mxu0 0.0
      %843 = vmatmul.mubr.f32.gmra.mrb[0].mxu0 %v439
      %v844 = vpop.f32.mrb[0].mxu0
      %v845 = vadd.f32 %v777, %v844
      %v846 = vpop.f32.mrb[0].mxu0
      %847 = vdwg.mxu0
      %v848 = vld [vmem:[%s2 + $0xd8] sm:$0x1]
      %849 = vst.msk [vmem:[#allocation2] sm:$0xff] %vm525, %v845
      %851 = vset.pattern.permute.xlu0 0
      %852 = vperm.xlu0 %851, %v265
      %v853 = vpop.permute.xlu0 %852
      %v855 = vlaneseq
      %v856 = vshrl.u32 %v855, 7
      %v857 = vsub.s32 0, %v856
      %v858 = vrot.slane %v848, %v857
      %v859 = vmul.f32 %v853, %v858
      %860 = vst.msk [vmem:[#allocation2 + $0x8] sm:$0xff] %vm525, %v859
      %v861 = vld [vmem:[%s4] sm:$0xff]
      %v862 = vld [vmem:[%s4 + $0x8] sm:$0xff]
      %v863 = vld [vmem:[%s4 + $0x10] sm:$0xff]
      %v864 = vld [vmem:[%s4 + $0x18] sm:$0xff]
      %v865 = vld [vmem:[%s4 + $0x20] sm:$0xff]
      %v866 = vld [vmem:[%s4 + $0x28] sm:$0xff]
      %v867 = vld [vmem:[%s4 + $0x30] sm:$0xff]
      %v868 = vld [vmem:[%s4 + $0x38] sm:$0xff]
      %v869 = vld [vmem:[%s4 + $0x40] sm:$0xff]
      %v870 = vld [vmem:[%s4 + $0x48] sm:$0xff]
      %v871 = vld [vmem:[%s4 + $0x50] sm:$0xff]
      %v872 = vld [vmem:[%s4 + $0x58] sm:$0xff]
      %v873 = vld [vmem:[%s4 + $0x60] sm:$0xff]
      %v874 = vld [vmem:[%s4 + $0x68] sm:$0xff]
      %v875 = vld [vmem:[%s4 + $0x70] sm:$0xff]
      %v876 = vld [vmem:[%s4 + $0x78] sm:$0xff]
      %v877 = vld [vmem:[%s4 + $0x80] sm:$0xff]
      %v878 = vld [vmem:[%s4 + $0x88] sm:$0xff]
      %v879 = vld [vmem:[%s4 + $0x90] sm:$0xff]
      %v880 = vld [vmem:[%s4 + $0x98] sm:$0xff]
      %v881 = vld [vmem:[%s4 + $0xa0] sm:$0xff]
      %v882 = vld [vmem:[%s4 + $0xa8] sm:$0xff]
      %v883 = vld [vmem:[%s4 + $0xb0] sm:$0xff]
      %v884 = vld [vmem:[%s4 + $0xb8] sm:$0xff]
      %v885 = vld [vmem:[%s4 + $0xc0] sm:$0xff]
      %v886 = vld [vmem:[%s4 + $0xc8] sm:$0xff]
      %v887 = vld [vmem:[%s4 + $0xd0] sm:$0xff]
      %v888 = vld [vmem:[%s4 + $0xd8] sm:$0xff]
      %v889 = vld [vmem:[%s4 + $0xe0] sm:$0xff]
      %v890 = vld [vmem:[%s4 + $0xe8] sm:$0xff]
      %v891 = vld [vmem:[%s4 + $0xf0] sm:$0xff]
      %v892 = vld [vmem:[%s4 + $0xf8] sm:$0xff]
      %v893 = vld [vmem:[%s4 + $0x100] sm:$0xff]
      %v894 = vld [vmem:[%s4 + $0x108] sm:$0xff]
      %v895 = vld [vmem:[%s4 + $0x110] sm:$0xff]
      %v896 = vld [vmem:[%s4 + $0x118] sm:$0xff]
      %v897 = vld [vmem:[%s4 + $0x120] sm:$0xff]
      %v898 = vld [vmem:[%s4 + $0x128] sm:$0xff]
      %v899 = vld [vmem:[%s4 + $0x130] sm:$0xff]
      %v900 = vld [vmem:[%s4 + $0x138] sm:$0xff]
      %v901 = vld [vmem:[%s4 + $0x140] sm:$0xff]
      %v902 = vld [vmem:[%s4 + $0x148] sm:$0xff]
      %v903 = vld [vmem:[%s4 + $0x150] sm:$0xff]
      %v904 = vld [vmem:[%s4 + $0x158] sm:$0xff]
      %v905 = vld [vmem:[%s4 + $0x160] sm:$0xff]
      %v906 = vld [vmem:[%s4 + $0x168] sm:$0xff]
      %v907 = vld [vmem:[%s4 + $0x170] sm:$0xff]
      %v908 = vld [vmem:[%s4 + $0x178] sm:$0xff]
      %v909 = vld [vmem:[%s4 + $0x180] sm:$0xff]
      %v910 = vld [vmem:[%s4 + $0x188] sm:$0xff]
      %v911 = vld [vmem:[%s4 + $0x190] sm:$0xff]
      %v912 = vld [vmem:[%s4 + $0x198] sm:$0xff]
      %v913 = vld [vmem:[%s4 + $0x1a0] sm:$0xff]
      %v914 = vld [vmem:[%s4 + $0x1a8] sm:$0xff]
      %v915 = vld [vmem:[%s4 + $0x1b0] sm:$0xff]
      %v916 = vld [vmem:[%s4 + $0x1b8] sm:$0xff]
      %v917 = vld [vmem:[%s4 + $0x1c0] sm:$0xff]
      %v918 = vld [vmem:[%s4 + $0x1c8] sm:$0xff]
      %v919 = vld [vmem:[%s4 + $0x1d0] sm:$0xff]
      %v920 = vld [vmem:[%s4 + $0x1d8] sm:$0xff]
      %v921 = vld [vmem:[%s4 + $0x1e0] sm:$0xff]
      %v922 = vld [vmem:[%s4 + $0x1e8] sm:$0xff]
      %v923 = vld [vmem:[%s4 + $0x1f0] sm:$0xff]
      %v924 = vld [vmem:[%s4 + $0x1f8] sm:$0xff]
      %v925 = vld [vmem:[#allocation2] sm:$0xff]
      %v926 = vld [vmem:[#allocation2 + $0x8] sm:$0xff]
      %v928 = vsel %vm437, %v861, 0
      %v931 = vsel %vm437, %v862, 0
      %v934 = vsel %vm437, %v863, 0
      %v937 = vsel %vm437, %v864, 0
      %v940 = vsel %vm437, %v865, 0
      %v943 = vsel %vm437, %v866, 0
      %v946 = vsel %vm437, %v867, 0
      %v949 = vsel %vm437, %v868, 0
      %v952 = vsel %vm437, %v869, 0
      %v955 = vsel %vm437, %v870, 0
      %v958 = vsel %vm437, %v871, 0
      %v961 = vsel %vm437, %v872, 0
      %v964 = vsel %vm437, %v873, 0
      %v967 = vsel %vm437, %v874, 0
      %v970 = vsel %vm437, %v875, 0
      %v973 = vsel %vm437, %v876, 0
      %v976 = vsel %vm437, %v877, 0
      %v979 = vsel %vm437, %v878, 0
      %v982 = vsel %vm437, %v879, 0
      %v985 = vsel %vm437, %v880, 0
      %v988 = vsel %vm437, %v881, 0
      %v991 = vsel %vm437, %v882, 0
      %v994 = vsel %vm437, %v883, 0
      %v997 = vsel %vm437, %v884, 0
      %v1000 = vsel %vm437, %v885, 0
      %v1003 = vsel %vm437, %v886, 0
      %v1006 = vsel %vm437, %v887, 0
      %v1009 = vsel %vm437, %v888, 0
      %v1012 = vsel %vm437, %v889, 0
      %v1015 = vsel %vm437, %v890, 0
      %v1018 = vsel %vm437, %v891, 0
      %v1021 = vsel %vm437, %v892, 0
      %v1024 = vsel %vm437, %v893, 0
      %v1027 = vsel %vm437, %v894, 0
      %v1030 = vsel %vm437, %v895, 0
      %v1033 = vsel %vm437, %v896, 0
      %v1036 = vsel %vm437, %v897, 0
      %v1039 = vsel %vm437, %v898, 0
      %v1042 = vsel %vm437, %v899, 0
      %v1045 = vsel %vm437, %v900, 0
      %v1048 = vsel %vm437, %v901, 0
      %v1051 = vsel %vm437, %v902, 0
      %v1054 = vsel %vm437, %v903, 0
      %v1057 = vsel %vm437, %v904, 0
      %v1060 = vsel %vm437, %v905, 0
      %v1063 = vsel %vm437, %v906, 0
      %v1066 = vsel %vm437, %v907, 0
      %v1069 = vsel %vm437, %v908, 0
      %v1072 = vsel %vm437, %v909, 0
      %v1075 = vsel %vm437, %v910, 0
      %v1078 = vsel %vm437, %v911, 0
      %v1081 = vsel %vm437, %v912, 0
      %v1084 = vsel %vm437, %v913, 0
      %v1087 = vsel %vm437, %v914, 0
      %v1090 = vsel %vm437, %v915, 0
      %v1093 = vsel %vm437, %v916, 0
      %v1096 = vsel %vm437, %v917, 0
      %v1099 = vsel %vm437, %v918, 0
      %v1102 = vsel %vm437, %v919, 0
      %v1105 = vsel %vm437, %v920, 0
      %v1108 = vsel %vm437, %v921, 0
      %v1111 = vsel %vm437, %v922, 0
      %v1114 = vsel %vm437, %v923, 0
      %v1117 = vsel %vm437, %v924, 0
      %1119 = vmatprep.subr.mxu0 0.0
      %1120 = vmatpush1.msra.mxu0 %v925
      %1121 = vmatprep.subr.mxu0 0.0
      %1122 = vmatpush1.msra.mxu0 %v926
      %1123 = vmatprep.subr.mxu0 0.0
      %1124 = vmatpush1.msra.mxu0 0.0
      %1125 = vmatprep.subr.mxu0 0.0
      %1126 = vmatpush1.msra.mxu0 0.0
      %1127 = vmatprep.subr.mxu0 0.0
      %1128 = vmatpush1.msra.mxu0 0.0
      %1129 = vmatprep.subr.mxu0 0.0
      %1130 = vmatpush1.msra.mxu0 0.0
      %1131 = vmatprep.subr.mxu0 0.0
      %1132 = vmatpush1.msra.mxu0 0.0
      %1133 = vmatprep.subr.mxu0 0.0
      %1134 = vmatpush1.msra.mxu0 0.0
      %1135 = vmatprep.subr.mxu0 0.0
      %1136 = vmatpush1.msra.mxu0 0.0
      %1137 = vmatprep.subr.mxu0 0.0
      %1138 = vmatpush1.msra.mxu0 0.0
      %1139 = vmatprep.subr.mxu0 0.0
      %1140 = vmatpush1.msra.mxu0 0.0
      %1141 = vmatprep.subr.mxu0 0.0
      %1142 = vmatpush1.msra.mxu0 0.0
      %1143 = vmatprep.subr.mxu0 0.0
      %1144 = vmatpush1.msra.mxu0 0.0
      %1145 = vmatprep.subr.mxu0 0.0
      %1146 = vmatpush1.msra.mxu0 0.0
      %1147 = vmatprep.subr.mxu0 0.0
      %1148 = vmatpush1.msra.mxu0 0.0
      %1149 = vmatprep.subr.mxu0 0.0
      %1150 = vmatpush1.msra.mxu0 0.0
      %1151 = vmatprep.subr.mxu0 0.0
      %1152 = vmatpush1.msra.mxu0 0.0
      %1153 = vmatprep.subr.mxu0 0.0
      %1154 = vmatpush1.msra.mxu0 0.0
      %1155 = vmatprep.subr.mxu0 0.0
      %1156 = vmatpush1.msra.mxu0 0.0
      %1157 = vmatprep.subr.mxu0 0.0
      %1158 = vmatpush1.msra.mxu0 0.0
      %1159 = vmatprep.subr.mxu0 0.0
      %1160 = vmatpush1.msra.mxu0 0.0
      %1161 = vmatprep.subr.mxu0 0.0
      %1162 = vmatpush1.msra.mxu0 0.0
      %1163 = vmatprep.subr.mxu0 0.0
      %1164 = vmatpush1.msra.mxu0 0.0
      %1165 = vmatprep.subr.mxu0 0.0
      %1166 = vmatpush1.msra.mxu0 0.0
      %1167 = vmatprep.subr.mxu0 0.0
      %1168 = vmatpush1.msra.mxu0 0.0
      %1169 = vmatprep.subr.mxu0 0.0
      %1170 = vmatpush1.msra.mxu0 0.0
      %1171 = vmatprep.subr.mxu0 0.0
      %1172 = vmatpush1.msra.mxu0 0.0
      %1173 = vmatprep.subr.mxu0 0.0
      %1174 = vmatpush1.msra.mxu0 0.0
      %1175 = vmatprep.subr.mxu0 0.0
      %1176 = vmatpush1.msra.mxu0 0.0
      %1177 = vmatprep.subr.mxu0 0.0
      %1178 = vmatpush1.msra.mxu0 0.0
      %1179 = vmatprep.subr.mxu0 0.0
      %1180 = vmatpush1.msra.mxu0 0.0
      %1181 = vmatprep.subr.mxu0 0.0
      %1182 = vmatpush1.msra.mxu0 0.0
      %1183 = vmatprep.mubr.f32.mxu0 0.0
      %1184 = vmatmul.mubr.f32.gmra.mrb[0].mxu0 %v928
      %v1185 = vpop.f32.mrb[0].mxu0
      %v1186 = vadd.f32 0.0, %v1185
      %v1187 = vpop.f32.mrb[0].mxu0
      %1188 = vmatprep.mubr.f32.mxu0 0.0
      %1189 = vmatmul.mubr.f32.gmra.mrb[0].mxu0 %v931
      %v1190 = vpop.f32.mrb[0].mxu0
      %v1191 = vadd.f32 0.0, %v1190
      %v1192 = vpop.f32.mrb[0].mxu0
      %1193 = vmatprep.mubr.f32.mxu0 0.0
      %1194 = vmatmul.mubr.f32.gmra.mrb[0].mxu0 %v934
      %v1195 = vpop.f32.mrb[0].mxu0
      %v1196 = vadd.f32 0.0, %v1195
      %v1197 = vpop.f32.mrb[0].mxu0
      %1198 = vmatprep.mubr.f32.mxu0 0.0
      %1199 = vmatmul.mubr.f32.gmra.mrb[0].mxu0 %v937
      %v1200 = vpop.f32.mrb[0].mxu0
      %v1201 = vadd.f32 0.0, %v1200
      %v1202 = vpop.f32.mrb[0].mxu0
      %1203 = vmatprep.mubr.f32.mxu0 0.0
      %1204 = vmatmul.mubr.f32.gmra.mrb[0].mxu0 %v940
      %v1205 = vpop.f32.mrb[0].mxu0
      %v1206 = vadd.f32 0.0, %v1205
      %v1207 = vpop.f32.mrb[0].mxu0
      %1208 = vmatprep.mubr.f32.mxu0 0.0
      %1209 = vmatmul.mubr.f32.gmra.mrb[0].mxu0 %v943
      %v1210 = vpop.f32.mrb[0].mxu0
      %v1211 = vadd.f32 0.0, %v1210
      %v1212 = vpop.f32.mrb[0].mxu0
      %1213 = vmatprep.mubr.f32.mxu0 0.0
      %1214 = vmatmul.mubr.f32.gmra.mrb[0].mxu0 %v946
      %v1215 = vpop.f32.mrb[0].mxu0
      %v1216 = vadd.f32 0.0, %v1215
      %v1217 = vpop.f32.mrb[0].mxu0
      %1218 = vmatprep.mubr.f32.mxu0 0.0
      %1219 = vmatmul.mubr.f32.gmra.mrb[0].mxu0 %v949
      %v1220 = vpop.f32.mrb[0].mxu0
      %v1221 = vadd.f32 0.0, %v1220
      %v1222 = vpop.f32.mrb[0].mxu0
      %1223 = vmatprep.mubr.f32.mxu0 0.0
      %1224 = vmatmul.mubr.f32.gmra.mrb[0].mxu0 %v952
      %v1225 = vpop.f32.mrb[0].mxu0
      %v1226 = vadd.f32 0.0, %v1225
      %v1227 = vpop.f32.mrb[0].mxu0
      %1228 = vmatprep.mubr.f32.mxu0 0.0
      %1229 = vmatmul.mubr.f32.gmra.mrb[0].mxu0 %v955
      %v1230 = vpop.f32.mrb[0].mxu0
      %v1231 = vadd.f32 0.0, %v1230
      %v1232 = vpop.f32.mrb[0].mxu0
      %1233 = vmatprep.mubr.f32.mxu0 0.0
      %1234 = vmatmul.mubr.f32.gmra.mrb[0].mxu0 %v958
      %v1235 = vpop.f32.mrb[0].mxu0
      %v1236 = vadd.f32 0.0, %v1235
      %v1237 = vpop.f32.mrb[0].mxu0
      %1238 = vmatprep.mubr.f32.mxu0 0.0
      %1239 = vmatmul.mubr.f32.gmra.mrb[0].mxu0 %v961
      %v1240 = vpop.f32.mrb[0].mxu0
      %v1241 = vadd.f32 0.0, %v1240
      %v1242 = vpop.f32.mrb[0].mxu0
      %1243 = vmatprep.mubr.f32.mxu0 0.0
      %1244 = vmatmul.mubr.f32.gmra.mrb[0].mxu0 %v964
      %v1245 = vpop.f32.mrb[0].mxu0
      %v1246 = vadd.f32 0.0, %v1245
      %v1247 = vpop.f32.mrb[0].mxu0
      %1248 = vmatprep.mubr.f32.mxu0 0.0
      %1249 = vmatmul.mubr.f32.gmra.mrb[0].mxu0 %v967
      %v1250 = vpop.f32.mrb[0].mxu0
      %v1251 = vadd.f32 0.0, %v1250
      %v1252 = vpop.f32.mrb[0].mxu0
      %1253 = vmatprep.mubr.f32.mxu0 0.0
      %1254 = vmatmul.mubr.f32.gmra.mrb[0].mxu0 %v970
      %v1255 = vpop.f32.mrb[0].mxu0
      %v1256 = vadd.f32 0.0, %v1255
      %v1257 = vpop.f32.mrb[0].mxu0
      %1258 = vmatprep.mubr.f32.mxu0 0.0
      %1259 = vmatmul.mubr.f32.gmra.mrb[0].mxu0 %v973
      %v1260 = vpop.f32.mrb[0].mxu0
      %v1261 = vadd.f32 0.0, %v1260
      %v1262 = vpop.f32.mrb[0].mxu0
      %1263 = vmatprep.mubr.f32.mxu0 0.0
      %1264 = vmatmul.mubr.f32.gmra.mrb[0].mxu0 %v976
      %v1265 = vpop.f32.mrb[0].mxu0
      %v1266 = vadd.f32 0.0, %v1265
      %v1267 = vpop.f32.mrb[0].mxu0
      %1268 = vmatprep.mubr.f32.mxu0 0.0
      %1269 = vmatmul.mubr.f32.gmra.mrb[0].mxu0 %v979
      %v1270 = vpop.f32.mrb[0].mxu0
      %v1271 = vadd.f32 0.0, %v1270
      %v1272 = vpop.f32.mrb[0].mxu0
      %1273 = vmatprep.mubr.f32.mxu0 0.0
      %1274 = vmatmul.mubr.f32.gmra.mrb[0].mxu0 %v982
      %v1275 = vpop.f32.mrb[0].mxu0
      %v1276 = vadd.f32 0.0, %v1275
      %v1277 = vpop.f32.mrb[0].mxu0
      %1278 = vmatprep.mubr.f32.mxu0 0.0
      %1279 = vmatmul.mubr.f32.gmra.mrb[0].mxu0 %v985
      %v1280 = vpop.f32.mrb[0].mxu0
      %v1281 = vadd.f32 0.0, %v1280
      %v1282 = vpop.f32.mrb[0].mxu0
      %1283 = vmatprep.mubr.f32.mxu0 0.0
      %1284 = vmatmul.mubr.f32.gmra.mrb[0].mxu0 %v988
      %v1285 = vpop.f32.mrb[0].mxu0
      %v1286 = vadd.f32 0.0, %v1285
      %v1287 = vpop.f32.mrb[0].mxu0
      %1288 = vmatprep.mubr.f32.mxu0 0.0
      %1289 = vmatmul.mubr.f32.gmra.mrb[0].mxu0 %v991
      %v1290 = vpop.f32.mrb[0].mxu0
      %v1291 = vadd.f32 0.0, %v1290
      %v1292 = vpop.f32.mrb[0].mxu0
      %1293 = vmatprep.mubr.f32.mxu0 0.0
      %1294 = vmatmul.mubr.f32.gmra.mrb[0].mxu0 %v994
      %v1295 = vpop.f32.mrb[0].mxu0
      %v1296 = vadd.f32 0.0, %v1295
      %v1297 = vpop.f32.mrb[0].mxu0
      %1298 = vmatprep.mubr.f32.mxu0 0.0
      %1299 = vmatmul.mubr.f32.gmra.mrb[0].mxu0 %v997
      %v1300 = vpop.f32.mrb[0].mxu0
      %v1301 = vadd.f32 0.0, %v1300
      %v1302 = vpop.f32.mrb[0].mxu0
      %1303 = vmatprep.mubr.f32.mxu0 0.0
      %1304 = vmatmul.mubr.f32.gmra.mrb[0].mxu0 %v1000
      %v1305 = vpop.f32.mrb[0].mxu0
      %v1306 = vadd.f32 0.0, %v1305
      %v1307 = vpop.f32.mrb[0].mxu0
      %1308 = vmatprep.mubr.f32.mxu0 0.0
      %1309 = vmatmul.mubr.f32.gmra.mrb[0].mxu0 %v1003
      %v1310 = vpop.f32.mrb[0].mxu0
      %v1311 = vadd.f32 0.0, %v1310
      %v1312 = vpop.f32.mrb[0].mxu0
      %1313 = vmatprep.mubr.f32.mxu0 0.0
      %1314 = vmatmul.mubr.f32.gmra.mrb[0].mxu0 %v1006
      %v1315 = vpop.f32.mrb[0].mxu0
      %v1316 = vadd.f32 0.0, %v1315
      %v1317 = vpop.f32.mrb[0].mxu0
      %1318 = vmatprep.mubr.f32.mxu0 0.0
      %1319 = vmatmul.mubr.f32.gmra.mrb[0].mxu0 %v1009
      %v1320 = vpop.f32.mrb[0].mxu0
      %v1321 = vadd.f32 0.0, %v1320
      %v1322 = vpop.f32.mrb[0].mxu0
      %1323 = vmatprep.mubr.f32.mxu0 0.0
      %1324 = vmatmul.mubr.f32.gmra.mrb[0].mxu0 %v1012
      %v1325 = vpop.f32.mrb[0].mxu0
      %v1326 = vadd.f32 0.0, %v1325
      %v1327 = vpop.f32.mrb[0].mxu0
      %1328 = vmatprep.mubr.f32.mxu0 0.0
      %1329 = vmatmul.mubr.f32.gmra.mrb[0].mxu0 %v1015
      %v1330 = vpop.f32.mrb[0].mxu0
      %v1331 = vadd.f32 0.0, %v1330
      %v1332 = vpop.f32.mrb[0].mxu0
      %1333 = vmatprep.mubr.f32.mxu0 0.0
      %1334 = vmatmul.mubr.f32.gmra.mrb[0].mxu0 %v1018
      %v1335 = vpop.f32.mrb[0].mxu0
      %v1336 = vadd.f32 0.0, %v1335
      %v1337 = vpop.f32.mrb[0].mxu0
      %1338 = vmatprep.mubr.f32.mxu0 0.0
      %1339 = vmatmul.mubr.f32.gmra.mrb[0].mxu0 %v1021
      %v1340 = vpop.f32.mrb[0].mxu0
      %v1341 = vadd.f32 0.0, %v1340
      %v1342 = vpop.f32.mrb[0].mxu0
      %1343 = vmatprep.mubr.f32.mxu0 0.0
      %1344 = vmatmul.mubr.f32.gmra.mrb[0].mxu0 %v1024
      %v1345 = vpop.f32.mrb[0].mxu0
      %v1346 = vadd.f32 0.0, %v1345
      %v1347 = vpop.f32.mrb[0].mxu0
      %1348 = vmatprep.mubr.f32.mxu0 0.0
      %1349 = vmatmul.mubr.f32.gmra.mrb[0].mxu0 %v1027
      %v1350 = vpop.f32.mrb[0].mxu0
      %v1351 = vadd.f32 0.0, %v1350
      %v1352 = vpop.f32.mrb[0].mxu0
      %1353 = vmatprep.mubr.f32.mxu0 0.0
      %1354 = vmatmul.mubr.f32.gmra.mrb[0].mxu0 %v1030
      %v1355 = vpop.f32.mrb[0].mxu0
      %v1356 = vadd.f32 0.0, %v1355
      %v1357 = vpop.f32.mrb[0].mxu0
      %1358 = vmatprep.mubr.f32.mxu0 0.0
      %1359 = vmatmul.mubr.f32.gmra.mrb[0].mxu0 %v1033
      %v1360 = vpop.f32.mrb[0].mxu0
      %v1361 = vadd.f32 0.0, %v1360
      %v1362 = vpop.f32.mrb[0].mxu0
      %1363 = vmatprep.mubr.f32.mxu0 0.0
      %1364 = vmatmul.mubr.f32.gmra.mrb[0].mxu0 %v1036
      %v1365 = vpop.f32.mrb[0].mxu0
      %v1366 = vadd.f32 0.0, %v1365
      %v1367 = vpop.f32.mrb[0].mxu0
      %1368 = vmatprep.mubr.f32.mxu0 0.0
      %1369 = vmatmul.mubr.f32.gmra.mrb[0].mxu0 %v1039
      %v1370 = vpop.f32.mrb[0].mxu0
      %v1371 = vadd.f32 0.0, %v1370
      %v1372 = vpop.f32.mrb[0].mxu0
      %1373 = vmatprep.mubr.f32.mxu0 0.0
      %1374 = vmatmul.mubr.f32.gmra.mrb[0].mxu0 %v1042
      %v1375 = vpop.f32.mrb[0].mxu0
      %v1376 = vadd.f32 0.0, %v1375
      %v1377 = vpop.f32.mrb[0].mxu0
      %1378 = vmatprep.mubr.f32.mxu0 0.0
      %1379 = vmatmul.mubr.f32.gmra.mrb[0].mxu0 %v1045
      %v1380 = vpop.f32.mrb[0].mxu0
      %v1381 = vadd.f32 0.0, %v1380
      %v1382 = vpop.f32.mrb[0].mxu0
      %1383 = vmatprep.mubr.f32.mxu0 0.0
      %1384 = vmatmul.mubr.f32.gmra.mrb[0].mxu0 %v1048
      %v1385 = vpop.f32.mrb[0].mxu0
      %v1386 = vadd.f32 0.0, %v1385
      %v1387 = vpop.f32.mrb[0].mxu0
      %1388 = vmatprep.mubr.f32.mxu0 0.0
      %1389 = vmatmul.mubr.f32.gmra.mrb[0].mxu0 %v1051
      %v1390 = vpop.f32.mrb[0].mxu0
      %v1391 = vadd.f32 0.0, %v1390
      %v1392 = vpop.f32.mrb[0].mxu0
      %1393 = vmatprep.mubr.f32.mxu0 0.0
      %1394 = vmatmul.mubr.f32.gmra.mrb[0].mxu0 %v1054
      %v1395 = vpop.f32.mrb[0].mxu0
      %v1396 = vadd.f32 0.0, %v1395
      %v1397 = vpop.f32.mrb[0].mxu0
      %1398 = vmatprep.mubr.f32.mxu0 0.0
      %1399 = vmatmul.mubr.f32.gmra.mrb[0].mxu0 %v1057
      %v1400 = vpop.f32.mrb[0].mxu0
      %v1401 = vadd.f32 0.0, %v1400
      %v1402 = vpop.f32.mrb[0].mxu0
      %1403 = vmatprep.mubr.f32.mxu0 0.0
      %1404 = vmatmul.mubr.f32.gmra.mrb[0].mxu0 %v1060
      %v1405 = vpop.f32.mrb[0].mxu0
      %v1406 = vadd.f32 0.0, %v1405
      %v1407 = vpop.f32.mrb[0].mxu0
      %1408 = vmatprep.mubr.f32.mxu0 0.0
      %1409 = vmatmul.mubr.f32.gmra.mrb[0].mxu0 %v1063
      %v1410 = vpop.f32.mrb[0].mxu0
      %v1411 = vadd.f32 0.0, %v1410
      %v1412 = vpop.f32.mrb[0].mxu0
      %1413 = vmatprep.mubr.f32.mxu0 0.0
      %1414 = vmatmul.mubr.f32.gmra.mrb[0].mxu0 %v1066
      %v1415 = vpop.f32.mrb[0].mxu0
      %v1416 = vadd.f32 0.0, %v1415
      %v1417 = vpop.f32.mrb[0].mxu0
      %1418 = vmatprep.mubr.f32.mxu0 0.0
      %1419 = vmatmul.mubr.f32.gmra.mrb[0].mxu0 %v1069
      %v1420 = vpop.f32.mrb[0].mxu0
      %v1421 = vadd.f32 0.0, %v1420
      %v1422 = vpop.f32.mrb[0].mxu0
      %1423 = vmatprep.mubr.f32.mxu0 0.0
      %1424 = vmatmul.mubr.f32.gmra.mrb[0].mxu0 %v1072
      %v1425 = vpop.f32.mrb[0].mxu0
      %v1426 = vadd.f32 0.0, %v1425
      %v1427 = vpop.f32.mrb[0].mxu0
      %1428 = vmatprep.mubr.f32.mxu0 0.0
      %1429 = vmatmul.mubr.f32.gmra.mrb[0].mxu0 %v1075
      %v1430 = vpop.f32.mrb[0].mxu0
      %v1431 = vadd.f32 0.0, %v1430
      %v1432 = vpop.f32.mrb[0].mxu0
      %1433 = vmatprep.mubr.f32.mxu0 0.0
      %1434 = vmatmul.mubr.f32.gmra.mrb[0].mxu0 %v1078
      %v1435 = vpop.f32.mrb[0].mxu0
      %v1436 = vadd.f32 0.0, %v1435
      %v1437 = vpop.f32.mrb[0].mxu0
      %1438 = vmatprep.mubr.f32.mxu0 0.0
      %1439 = vmatmul.mubr.f32.gmra.mrb[0].mxu0 %v1081
      %v1440 = vpop.f32.mrb[0].mxu0
      %v1441 = vadd.f32 0.0, %v1440
      %v1442 = vpop.f32.mrb[0].mxu0
      %1443 = vmatprep.mubr.f32.mxu0 0.0
      %1444 = vmatmul.mubr.f32.gmra.mrb[0].mxu0 %v1084
      %v1445 = vpop.f32.mrb[0].mxu0
      %v1446 = vadd.f32 0.0, %v1445
      %v1447 = vpop.f32.mrb[0].mxu0
      %1448 = vmatprep.mubr.f32.mxu0 0.0
      %1449 = vmatmul.mubr.f32.gmra.mrb[0].mxu0 %v1087
      %v1450 = vpop.f32.mrb[0].mxu0
      %v1451 = vadd.f32 0.0, %v1450
      %v1452 = vpop.f32.mrb[0].mxu0
      %1453 = vmatprep.mubr.f32.mxu0 0.0
      %1454 = vmatmul.mubr.f32.gmra.mrb[0].mxu0 %v1090
      %v1455 = vpop.f32.mrb[0].mxu0
      %v1456 = vadd.f32 0.0, %v1455
      %v1457 = vpop.f32.mrb[0].mxu0
      %1458 = vmatprep.mubr.f32.mxu0 0.0
      %1459 = vmatmul.mubr.f32.gmra.mrb[0].mxu0 %v1093
      %v1460 = vpop.f32.mrb[0].mxu0
      %v1461 = vadd.f32 0.0, %v1460
      %v1462 = vpop.f32.mrb[0].mxu0
      %1463 = vmatprep.mubr.f32.mxu0 0.0
      %1464 = vmatmul.mubr.f32.gmra.mrb[0].mxu0 %v1096
      %v1465 = vpop.f32.mrb[0].mxu0
      %v1466 = vadd.f32 0.0, %v1465
      %v1467 = vpop.f32.mrb[0].mxu0
      %1468 = vmatprep.mubr.f32.mxu0 0.0
      %1469 = vmatmul.mubr.f32.gmra.mrb[0].mxu0 %v1099
      %v1470 = vpop.f32.mrb[0].mxu0
      %v1471 = vadd.f32 0.0, %v1470
      %v1472 = vpop.f32.mrb[0].mxu0
      %1473 = vmatprep.mubr.f32.mxu0 0.0
      %1474 = vmatmul.mubr.f32.gmra.mrb[0].mxu0 %v1102
      %v1475 = vpop.f32.mrb[0].mxu0
      %v1476 = vadd.f32 0.0, %v1475
      %v1477 = vpop.f32.mrb[0].mxu0
      %1478 = vmatprep.mubr.f32.mxu0 0.0
      %1479 = vmatmul.mubr.f32.gmra.mrb[0].mxu0 %v1105
      %v1480 = vpop.f32.mrb[0].mxu0
      %v1481 = vadd.f32 0.0, %v1480
      %v1482 = vpop.f32.mrb[0].mxu0
      %1483 = vmatprep.mubr.f32.mxu0 0.0
      %1484 = vmatmul.mubr.f32.gmra.mrb[0].mxu0 %v1108
      %v1485 = vpop.f32.mrb[0].mxu0
      %v1486 = vadd.f32 0.0, %v1485
      %v1487 = vpop.f32.mrb[0].mxu0
      %1488 = vmatprep.mubr.f32.mxu0 0.0
      %1489 = vmatmul.mubr.f32.gmra.mrb[0].mxu0 %v1111
      %v1490 = vpop.f32.mrb[0].mxu0
      %v1491 = vadd.f32 0.0, %v1490
      %v1492 = vpop.f32.mrb[0].mxu0
      %1493 = vmatprep.mubr.f32.mxu0 0.0
      %1494 = vmatmul.mubr.f32.gmra.mrb[0].mxu0 %v1114
      %v1495 = vpop.f32.mrb[0].mxu0
      %v1496 = vadd.f32 0.0, %v1495
      %v1497 = vpop.f32.mrb[0].mxu0
      %1498 = vmatprep.mubr.f32.mxu0 0.0
      %1499 = vmatmul.mubr.f32.gmra.mrb[0].mxu0 %v1117
      %v1500 = vpop.f32.mrb[0].mxu0
      %v1501 = vadd.f32 0.0, %v1500
      %v1502 = vpop.f32.mrb[0].mxu0
      %1503 = vdwg.mxu0
      %v1504 = vmax.f32 %v1186, 0.0
      %v1505 = vmax.f32 %v1191, 0.0
      %v1506 = vmax.f32 %v1196, 0.0
      %v1507 = vmax.f32 %v1201, 0.0
      %v1508 = vmax.f32 %v1206, 0.0
      %v1509 = vmax.f32 %v1211, 0.0
      %v1510 = vmax.f32 %v1216, 0.0
      %v1511 = vmax.f32 %v1221, 0.0
      %v1512 = vmax.f32 %v1226, 0.0
      %v1513 = vmax.f32 %v1231, 0.0
      %v1514 = vmax.f32 %v1236, 0.0
      %v1515 = vmax.f32 %v1241, 0.0
      %v1516 = vmax.f32 %v1246, 0.0
      %v1517 = vmax.f32 %v1251, 0.0
      %v1518 = vmax.f32 %v1256, 0.0
      %v1519 = vmax.f32 %v1261, 0.0
      %v1520 = vmax.f32 %v1266, 0.0
      %v1521 = vmax.f32 %v1271, 0.0
      %v1522 = vmax.f32 %v1276, 0.0
      %v1523 = vmax.f32 %v1281, 0.0
      %v1524 = vmax.f32 %v1286, 0.0
      %v1525 = vmax.f32 %v1291, 0.0
      %v1526 = vmax.f32 %v1296, 0.0
      %v1527 = vmax.f32 %v1301, 0.0
      %v1528 = vmax.f32 %v1306, 0.0
      %v1529 = vmax.f32 %v1311, 0.0
      %v1530 = vmax.f32 %v1316, 0.0
      %v1531 = vmax.f32 %v1321, 0.0
      %v1532 = vmax.f32 %v1326, 0.0
      %v1533 = vmax.f32 %v1331, 0.0
      %v1534 = vmax.f32 %v1336, 0.0
      %v1535 = vmax.f32 %v1341, 0.0
      %v1536 = vmax.f32 %v1346, 0.0
      %v1537 = vmax.f32 %v1351, 0.0
      %v1538 = vmax.f32 %v1356, 0.0
      %v1539 = vmax.f32 %v1361, 0.0
      %v1540 = vmax.f32 %v1366, 0.0
      %v1541 = vmax.f32 %v1371, 0.0
      %v1542 = vmax.f32 %v1376, 0.0
      %v1543 = vmax.f32 %v1381, 0.0
      %v1544 = vmax.f32 %v1386, 0.0
      %v1545 = vmax.f32 %v1391, 0.0
      %v1546 = vmax.f32 %v1396, 0.0
      %v1547 = vmax.f32 %v1401, 0.0
      %v1548 = vmax.f32 %v1406, 0.0
      %v1549 = vmax.f32 %v1411, 0.0
      %v1550 = vmax.f32 %v1416, 0.0
      %v1551 = vmax.f32 %v1421, 0.0
      %v1552 = vmax.f32 %v1426, 0.0
      %v1553 = vmax.f32 %v1431, 0.0
      %v1554 = vmax.f32 %v1436, 0.0
      %v1555 = vmax.f32 %v1441, 0.0
      %v1556 = vmax.f32 %v1446, 0.0
      %v1557 = vmax.f32 %v1451, 0.0
      %v1558 = vmax.f32 %v1456, 0.0
      %v1559 = vmax.f32 %v1461, 0.0
      %v1560 = vmax.f32 %v1466, 0.0
      %v1561 = vmax.f32 %v1471, 0.0
      %v1562 = vmax.f32 %v1476, 0.0
      %v1563 = vmax.f32 %v1481, 0.0
      %v1564 = vmax.f32 %v1486, 0.0
      %v1565 = vmax.f32 %v1491, 0.0
      %v1566 = vmax.f32 %v1496, 0.0
      %v1567 = vmax.f32 %v1501, 0.0
      %v1568 = vld [vmem:[%s2 + $0xf0] sm:$0xff]
      %v1569 = vld [vmem:[%s2 + $0xf8] sm:$0xff]
      %v1570 = vld [vmem:[%s2 + $0x100] sm:$0xff]
      %v1571 = vld [vmem:[%s2 + $0x108] sm:$0xff]
      %v1572 = vld [vmem:[%s2 + $0x110] sm:$0xff]
      %v1573 = vld [vmem:[%s2 + $0x118] sm:$0xff]
      %v1574 = vld [vmem:[%s2 + $0x120] sm:$0xff]
      %v1575 = vld [vmem:[%s2 + $0x128] sm:$0xff]
      %v1576 = vld [vmem:[%s3 + $0x8] sm:$0x1]
      %v1577 = vlaneseq
      %v1578 = vshrl.u32 %v1577, 7
      %v1579 = vsub.s32 0, %v1578
      %v1580 = vrot.slane %v1576, %v1579
      %v1582 = vsel %vm525, %v1504, 0
      %v1585 = vsel %vm525, %v1505, 0
      %v1588 = vsel %vm525, %v1506, 0
      %v1591 = vsel %vm525, %v1507, 0
      %v1594 = vsel %vm525, %v1508, 0
      %v1597 = vsel %vm525, %v1509, 0
      %v1600 = vsel %vm525, %v1510, 0
      %v1603 = vsel %vm525, %v1511, 0
      %v1606 = vsel %vm525, %v1512, 0
      %v1609 = vsel %vm525, %v1513, 0
      %v1612 = vsel %vm525, %v1514, 0
      %v1615 = vsel %vm525, %v1515, 0
      %v1618 = vsel %vm525, %v1516, 0
      %v1621 = vsel %vm525, %v1517, 0
      %v1624 = vsel %vm525, %v1518, 0
      %v1627 = vsel %vm525, %v1519, 0
      %v1630 = vsel %vm525, %v1520, 0
      %v1633 = vsel %vm525, %v1521, 0
      %v1636 = vsel %vm525, %v1522, 0
      %v1639 = vsel %vm525, %v1523, 0
      %v1642 = vsel %vm525, %v1524, 0
      %v1645 = vsel %vm525, %v1525, 0
      %v1648 = vsel %vm525, %v1526, 0
      %v1651 = vsel %vm525, %v1527, 0
      %v1654 = vsel %vm525, %v1528, 0
      %v1657 = vsel %vm525, %v1529, 0
      %v1660 = vsel %vm525, %v1530, 0
      %v1663 = vsel %vm525, %v1531, 0
      %v1666 = vsel %vm525, %v1532, 0
      %v1669 = vsel %vm525, %v1533, 0
      %v1672 = vsel %vm525, %v1534, 0
      %v1675 = vsel %vm525, %v1535, 0
      %v1678 = vsel %vm525, %v1536, 0
      %v1681 = vsel %vm525, %v1537, 0
      %v1684 = vsel %vm525, %v1538, 0
      %v1687 = vsel %vm525, %v1539, 0
      %v1690 = vsel %vm525, %v1540, 0
      %v1693 = vsel %vm525, %v1541, 0
      %v1696 = vsel %vm525, %v1542, 0
      %v1699 = vsel %vm525, %v1543, 0
      %v1702 = vsel %vm525, %v1544, 0
      %v1705 = vsel %vm525, %v1545, 0
      %v1708 = vsel %vm525, %v1546, 0
      %v1711 = vsel %vm525, %v1547, 0
      %v1714 = vsel %vm525, %v1548, 0
      %v1717 = vsel %vm525, %v1549, 0
      %v1720 = vsel %vm525, %v1550, 0
      %v1723 = vsel %vm525, %v1551, 0
      %v1726 = vsel %vm525, %v1552, 0
      %v1729 = vsel %vm525, %v1553, 0
      %v1732 = vsel %vm525, %v1554, 0
      %v1735 = vsel %vm525, %v1555, 0
      %v1738 = vsel %vm525, %v1556, 0
      %v1741 = vsel %vm525, %v1557, 0
      %v1744 = vsel %vm525, %v1558, 0
      %v1747 = vsel %vm525, %v1559, 0
      %v1750 = vsel %vm525, %v1560, 0
      %v1753 = vsel %vm525, %v1561, 0
      %v1756 = vsel %vm525, %v1562, 0
      %v1759 = vsel %vm525, %v1563, 0
      %v1762 = vsel %vm525, %v1564, 0
      %v1765 = vsel %vm525, %v1565, 0
      %v1768 = vsel %vm525, %v1566, 0
      %v1771 = vsel %vm525, %v1567, 0
      %1773 = vmatprep.subr.mxu0 0.0
      %1774 = vmatpush1.msra.mxu0 %v1568
      %1775 = vmatprep.subr.mxu0 0.0
      %1776 = vmatpush1.msra.mxu0 %v1569
      %1777 = vmatprep.subr.mxu0 0.0
      %1778 = vmatpush1.msra.mxu0 %v1570
      %1779 = vmatprep.subr.mxu0 0.0
      %1780 = vmatpush1.msra.mxu0 %v1571
      %1781 = vmatprep.subr.mxu0 0.0
      %1782 = vmatpush1.msra.mxu0 %v1572
      %1783 = vmatprep.subr.mxu0 0.0
      %1784 = vmatpush1.msra.mxu0 %v1573
      %1785 = vmatprep.subr.mxu0 0.0
      %1786 = vmatpush1.msra.mxu0 %v1574
      %1787 = vmatprep.subr.mxu0 0.0
      %1788 = vmatpush1.msra.mxu0 %v1575
      %1789 = vmatprep.subr.mxu0 0.0
      %1790 = vmatpush1.msra.mxu0 0.0
      %1791 = vmatprep.subr.mxu0 0.0
      %1792 = vmatpush1.msra.mxu0 0.0
      %1793 = vmatprep.subr.mxu0 0.0
      %1794 = vmatpush1.msra.mxu0 0.0
      %1795 = vmatprep.subr.mxu0 0.0
      %1796 = vmatpush1.msra.mxu0 0.0
      %1797 = vmatprep.subr.mxu0 0.0
      %1798 = vmatpush1.msra.mxu0 0.0
      %1799 = vmatprep.subr.mxu0 0.0
      %1800 = vmatpush1.msra.mxu0 0.0
      %1801 = vmatprep.subr.mxu0 0.0
      %1802 = vmatpush1.msra.mxu0 0.0
      %1803 = vmatprep.subr.mxu0 0.0
      %1804 = vmatpush1.msra.mxu0 0.0
      %1805 = vmatprep.subr.mxu0 0.0
      %1806 = vmatpush1.msra.mxu0 0.0
      %1807 = vmatprep.subr.mxu0 0.0
      %1808 = vmatpush1.msra.mxu0 0.0
      %1809 = vmatprep.subr.mxu0 0.0
      %1810 = vmatpush1.msra.mxu0 0.0
      %1811 = vmatprep.subr.mxu0 0.0
      %1812 = vmatpush1.msra.mxu0 0.0
      %1813 = vmatprep.subr.mxu0 0.0
      %1814 = vmatpush1.msra.mxu0 0.0
      %1815 = vmatprep.subr.mxu0 0.0
      %1816 = vmatpush1.msra.mxu0 0.0
      %1817 = vmatprep.subr.mxu0 0.0
      %1818 = vmatpush1.msra.mxu0 0.0
      %1819 = vmatprep.subr.mxu0 0.0
      %1820 = vmatpush1.msra.mxu0 0.0
      %1821 = vmatprep.subr.mxu0 0.0
      %1822 = vmatpush1.msra.mxu0 0.0
      %1823 = vmatprep.subr.mxu0 0.0
      %1824 = vmatpush1.msra.mxu0 0.0
      %1825 = vmatprep.subr.mxu0 0.0
      %1826 = vmatpush1.msra.mxu0 0.0
      %1827 = vmatprep.subr.mxu0 0.0
      %1828 = vmatpush1.msra.mxu0 0.0
      %1829 = vmatprep.subr.mxu0 0.0
      %1830 = vmatpush1.msra.mxu0 0.0
      %1831 = vmatprep.subr.mxu0 0.0
      %1832 = vmatpush1.msra.mxu0 0.0
      %1833 = vmatprep.subr.mxu0 0.0
      %1834 = vmatpush1.msra.mxu0 0.0
      %1835 = vmatprep.subr.mxu0 0.0
      %1836 = vmatpush1.msra.mxu0 0.0
      %1837 = vmatprep.mubr.f32.mxu0 0.0
      %1838 = vmatmul.mubr.f32.gmra.mrb[0].mxu0 %v1582
      %v1839 = vpop.f32.mrb[0].mxu0
      %v1840 = vadd.f32 %v1580, %v1839
      %v1841 = vpop.f32.mrb[0].mxu0
      %1842 = vmatprep.mubr.f32.mxu0 0.0
      %1843 = vmatmul.mubr.f32.gmra.mrb[0].mxu0 %v1585
      %v1844 = vpop.f32.mrb[0].mxu0
      %v1845 = vadd.f32 %v1580, %v1844
      %v1846 = vpop.f32.mrb[0].mxu0
      %1847 = vmatprep.mubr.f32.mxu0 0.0
      %1848 = vmatmul.mubr.f32.gmra.mrb[0].mxu0 %v1588
      %v1849 = vpop.f32.mrb[0].mxu0
      %v1850 = vadd.f32 %v1580, %v1849
      %v1851 = vpop.f32.mrb[0].mxu0
      %1852 = vmatprep.mubr.f32.mxu0 0.0
      %1853 = vmatmul.mubr.f32.gmra.mrb[0].mxu0 %v1591
      %v1854 = vpop.f32.mrb[0].mxu0
      %v1855 = vadd.f32 %v1580, %v1854
      %v1856 = vpop.f32.mrb[0].mxu0
      %1857 = vmatprep.mubr.f32.mxu0 0.0
      %1858 = vmatmul.mubr.f32.gmra.mrb[0].mxu0 %v1594
      %v1859 = vpop.f32.mrb[0].mxu0
      %v1860 = vadd.f32 %v1580, %v1859
      %v1861 = vpop.f32.mrb[0].mxu0
      %1862 = vmatprep.mubr.f32.mxu0 0.0
      %1863 = vmatmul.mubr.f32.gmra.mrb[0].mxu0 %v1597
      %v1864 = vpop.f32.mrb[0].mxu0
      %v1865 = vadd.f32 %v1580, %v1864
      %v1866 = vpop.f32.mrb[0].mxu0
      %1867 = vmatprep.mubr.f32.mxu0 0.0
      %1868 = vmatmul.mubr.f32.gmra.mrb[0].mxu0 %v1600
      %v1869 = vpop.f32.mrb[0].mxu0
      %v1870 = vadd.f32 %v1580, %v1869
      %v1871 = vpop.f32.mrb[0].mxu0
      %1872 = vmatprep.mubr.f32.mxu0 0.0
      %1873 = vmatmul.mubr.f32.gmra.mrb[0].mxu0 %v1603
      %v1874 = vpop.f32.mrb[0].mxu0
      %v1875 = vadd.f32 %v1580, %v1874
      %v1876 = vpop.f32.mrb[0].mxu0
      %1877 = vmatprep.mubr.f32.mxu0 0.0
      %1878 = vmatmul.mubr.f32.gmra.mrb[0].mxu0 %v1606
      %v1879 = vpop.f32.mrb[0].mxu0
      %v1880 = vadd.f32 %v1580, %v1879
      %v1881 = vpop.f32.mrb[0].mxu0
      %1882 = vmatprep.mubr.f32.mxu0 0.0
      %1883 = vmatmul.mubr.f32.gmra.mrb[0].mxu0 %v1609
      %v1884 = vpop.f32.mrb[0].mxu0
      %v1885 = vadd.f32 %v1580, %v1884
      %v1886 = vpop.f32.mrb[0].mxu0
      %1887 = vmatprep.mubr.f32.mxu0 0.0
      %1888 = vmatmul.mubr.f32.gmra.mrb[0].mxu0 %v1612
      %v1889 = vpop.f32.mrb[0].mxu0
      %v1890 = vadd.f32 %v1580, %v1889
      %v1891 = vpop.f32.mrb[0].mxu0
      %1892 = vmatprep.mubr.f32.mxu0 0.0
      %1893 = vmatmul.mubr.f32.gmra.mrb[0].mxu0 %v1615
      %v1894 = vpop.f32.mrb[0].mxu0
      %v1895 = vadd.f32 %v1580, %v1894
      %v1896 = vpop.f32.mrb[0].mxu0
      %1897 = vmatprep.mubr.f32.mxu0 0.0
      %1898 = vmatmul.mubr.f32.gmra.mrb[0].mxu0 %v1618
      %v1899 = vpop.f32.mrb[0].mxu0
      %v1900 = vadd.f32 %v1580, %v1899
      %v1901 = vpop.f32.mrb[0].mxu0
      %1902 = vmatprep.mubr.f32.mxu0 0.0
      %1903 = vmatmul.mubr.f32.gmra.mrb[0].mxu0 %v1621
      %v1904 = vpop.f32.mrb[0].mxu0
      %v1905 = vadd.f32 %v1580, %v1904
      %v1906 = vpop.f32.mrb[0].mxu0
      %1907 = vmatprep.mubr.f32.mxu0 0.0
      %1908 = vmatmul.mubr.f32.gmra.mrb[0].mxu0 %v1624
      %v1909 = vpop.f32.mrb[0].mxu0
      %v1910 = vadd.f32 %v1580, %v1909
      %v1911 = vpop.f32.mrb[0].mxu0
      %1912 = vmatprep.mubr.f32.mxu0 0.0
      %1913 = vmatmul.mubr.f32.gmra.mrb[0].mxu0 %v1627
      %v1914 = vpop.f32.mrb[0].mxu0
      %v1915 = vadd.f32 %v1580, %v1914
      %v1916 = vpop.f32.mrb[0].mxu0
      %1917 = vmatprep.mubr.f32.mxu0 0.0
      %1918 = vmatmul.mubr.f32.gmra.mrb[0].mxu0 %v1630
      %v1919 = vpop.f32.mrb[0].mxu0
      %v1920 = vadd.f32 %v1580, %v1919
      %v1921 = vpop.f32.mrb[0].mxu0
      %1922 = vmatprep.mubr.f32.mxu0 0.0
      %1923 = vmatmul.mubr.f32.gmra.mrb[0].mxu0 %v1633
      %v1924 = vpop.f32.mrb[0].mxu0
      %v1925 = vadd.f32 %v1580, %v1924
      %v1926 = vpop.f32.mrb[0].mxu0
      %1927 = vmatprep.mubr.f32.mxu0 0.0
      %1928 = vmatmul.mubr.f32.gmra.mrb[0].mxu0 %v1636
      %v1929 = vpop.f32.mrb[0].mxu0
      %v1930 = vadd.f32 %v1580, %v1929
      %v1931 = vpop.f32.mrb[0].mxu0
      %1932 = vmatprep.mubr.f32.mxu0 0.0
      %1933 = vmatmul.mubr.f32.gmra.mrb[0].mxu0 %v1639
      %v1934 = vpop.f32.mrb[0].mxu0
      %v1935 = vadd.f32 %v1580, %v1934
      %v1936 = vpop.f32.mrb[0].mxu0
      %1937 = vmatprep.mubr.f32.mxu0 0.0
      %1938 = vmatmul.mubr.f32.gmra.mrb[0].mxu0 %v1642
      %v1939 = vpop.f32.mrb[0].mxu0
      %v1940 = vadd.f32 %v1580, %v1939
      %v1941 = vpop.f32.mrb[0].mxu0
      %1942 = vmatprep.mubr.f32.mxu0 0.0
      %1943 = vmatmul.mubr.f32.gmra.mrb[0].mxu0 %v1645
      %v1944 = vpop.f32.mrb[0].mxu0
      %v1945 = vadd.f32 %v1580, %v1944
      %v1946 = vpop.f32.mrb[0].mxu0
      %1947 = vmatprep.mubr.f32.mxu0 0.0
      %1948 = vmatmul.mubr.f32.gmra.mrb[0].mxu0 %v1648
      %v1949 = vpop.f32.mrb[0].mxu0
      %v1950 = vadd.f32 %v1580, %v1949
      %v1951 = vpop.f32.mrb[0].mxu0
      %1952 = vmatprep.mubr.f32.mxu0 0.0
      %1953 = vmatmul.mubr.f32.gmra.mrb[0].mxu0 %v1651
      %v1954 = vpop.f32.mrb[0].mxu0
      %v1955 = vadd.f32 %v1580, %v1954
      %v1956 = vpop.f32.mrb[0].mxu0
      %1957 = vmatprep.mubr.f32.mxu0 0.0
      %1958 = vmatmul.mubr.f32.gmra.mrb[0].mxu0 %v1654
      %v1959 = vpop.f32.mrb[0].mxu0
      %v1960 = vadd.f32 %v1580, %v1959
      %v1961 = vpop.f32.mrb[0].mxu0
      %1962 = vmatprep.mubr.f32.mxu0 0.0
      %1963 = vmatmul.mubr.f32.gmra.mrb[0].mxu0 %v1657
      %v1964 = vpop.f32.mrb[0].mxu0
      %v1965 = vadd.f32 %v1580, %v1964
      %v1966 = vpop.f32.mrb[0].mxu0
      %1967 = vmatprep.mubr.f32.mxu0 0.0
      %1968 = vmatmul.mubr.f32.gmra.mrb[0].mxu0 %v1660
      %v1969 = vpop.f32.mrb[0].mxu0
      %v1970 = vadd.f32 %v1580, %v1969
      %v1971 = vpop.f32.mrb[0].mxu0
      %1972 = vmatprep.mubr.f32.mxu0 0.0
      %1973 = vmatmul.mubr.f32.gmra.mrb[0].mxu0 %v1663
      %v1974 = vpop.f32.mrb[0].mxu0
      %v1975 = vadd.f32 %v1580, %v1974
      %v1976 = vpop.f32.mrb[0].mxu0
      %1977 = vmatprep.mubr.f32.mxu0 0.0
      %1978 = vmatmul.mubr.f32.gmra.mrb[0].mxu0 %v1666
      %v1979 = vpop.f32.mrb[0].mxu0
      %v1980 = vadd.f32 %v1580, %v1979
      %v1981 = vpop.f32.mrb[0].mxu0
      %1982 = vmatprep.mubr.f32.mxu0 0.0
      %1983 = vmatmul.mubr.f32.gmra.mrb[0].mxu0 %v1669
      %v1984 = vpop.f32.mrb[0].mxu0
      %v1985 = vadd.f32 %v1580, %v1984
      %v1986 = vpop.f32.mrb[0].mxu0
      %1987 = vmatprep.mubr.f32.mxu0 0.0
      %1988 = vmatmul.mubr.f32.gmra.mrb[0].mxu0 %v1672
      %v1989 = vpop.f32.mrb[0].mxu0
      %v1990 = vadd.f32 %v1580, %v1989
      %v1991 = vpop.f32.mrb[0].mxu0
      %1992 = vmatprep.mubr.f32.mxu0 0.0
      %1993 = vmatmul.mubr.f32.gmra.mrb[0].mxu0 %v1675
      %v1994 = vpop.f32.mrb[0].mxu0
      %v1995 = vadd.f32 %v1580, %v1994
      %v1996 = vpop.f32.mrb[0].mxu0
      %1997 = vmatprep.mubr.f32.mxu0 0.0
      %1998 = vmatmul.mubr.f32.gmra.mrb[0].mxu0 %v1678
      %v1999 = vpop.f32.mrb[0].mxu0
      %v2000 = vadd.f32 %v1580, %v1999
      %v2001 = vpop.f32.mrb[0].mxu0
      %2002 = vmatprep.mubr.f32.mxu0 0.0
      %2003 = vmatmul.mubr.f32.gmra.mrb[0].mxu0 %v1681
      %v2004 = vpop.f32.mrb[0].mxu0
      %v2005 = vadd.f32 %v1580, %v2004
      %v2006 = vpop.f32.mrb[0].mxu0
      %2007 = vmatprep.mubr.f32.mxu0 0.0
      %2008 = vmatmul.mubr.f32.gmra.mrb[0].mxu0 %v1684
      %v2009 = vpop.f32.mrb[0].mxu0
      %v2010 = vadd.f32 %v1580, %v2009
      %v2011 = vpop.f32.mrb[0].mxu0
      %2012 = vmatprep.mubr.f32.mxu0 0.0
      %2013 = vmatmul.mubr.f32.gmra.mrb[0].mxu0 %v1687
      %v2014 = vpop.f32.mrb[0].mxu0
      %v2015 = vadd.f32 %v1580, %v2014
      %v2016 = vpop.f32.mrb[0].mxu0
      %2017 = vmatprep.mubr.f32.mxu0 0.0
      %2018 = vmatmul.mubr.f32.gmra.mrb[0].mxu0 %v1690
      %v2019 = vpop.f32.mrb[0].mxu0
      %v2020 = vadd.f32 %v1580, %v2019
      %v2021 = vpop.f32.mrb[0].mxu0
      %2022 = vmatprep.mubr.f32.mxu0 0.0
      %2023 = vmatmul.mubr.f32.gmra.mrb[0].mxu0 %v1693
      %v2024 = vpop.f32.mrb[0].mxu0
      %v2025 = vadd.f32 %v1580, %v2024
      %v2026 = vpop.f32.mrb[0].mxu0
      %2027 = vmatprep.mubr.f32.mxu0 0.0
      %2028 = vmatmul.mubr.f32.gmra.mrb[0].mxu0 %v1696
      %v2029 = vpop.f32.mrb[0].mxu0
      %v2030 = vadd.f32 %v1580, %v2029
      %v2031 = vpop.f32.mrb[0].mxu0
      %2032 = vmatprep.mubr.f32.mxu0 0.0
      %2033 = vmatmul.mubr.f32.gmra.mrb[0].mxu0 %v1699
      %v2034 = vpop.f32.mrb[0].mxu0
      %v2035 = vadd.f32 %v1580, %v2034
      %v2036 = vpop.f32.mrb[0].mxu0
      %2037 = vmatprep.mubr.f32.mxu0 0.0
      %2038 = vmatmul.mubr.f32.gmra.mrb[0].mxu0 %v1702
      %v2039 = vpop.f32.mrb[0].mxu0
      %v2040 = vadd.f32 %v1580, %v2039
      %v2041 = vpop.f32.mrb[0].mxu0
      %2042 = vmatprep.mubr.f32.mxu0 0.0
      %2043 = vmatmul.mubr.f32.gmra.mrb[0].mxu0 %v1705
      %v2044 = vpop.f32.mrb[0].mxu0
      %v2045 = vadd.f32 %v1580, %v2044
      %v2046 = vpop.f32.mrb[0].mxu0
      %2047 = vmatprep.mubr.f32.mxu0 0.0
      %2048 = vmatmul.mubr.f32.gmra.mrb[0].mxu0 %v1708
      %v2049 = vpop.f32.mrb[0].mxu0
      %v2050 = vadd.f32 %v1580, %v2049
      %v2051 = vpop.f32.mrb[0].mxu0
      %2052 = vmatprep.mubr.f32.mxu0 0.0
      %2053 = vmatmul.mubr.f32.gmra.mrb[0].mxu0 %v1711
      %v2054 = vpop.f32.mrb[0].mxu0
      %v2055 = vadd.f32 %v1580, %v2054
      %v2056 = vpop.f32.mrb[0].mxu0
      %2057 = vmatprep.mubr.f32.mxu0 0.0
      %2058 = vmatmul.mubr.f32.gmra.mrb[0].mxu0 %v1714
      %v2059 = vpop.f32.mrb[0].mxu0
      %v2060 = vadd.f32 %v1580, %v2059
      %v2061 = vpop.f32.mrb[0].mxu0
      %2062 = vmatprep.mubr.f32.mxu0 0.0
      %2063 = vmatmul.mubr.f32.gmra.mrb[0].mxu0 %v1717
      %v2064 = vpop.f32.mrb[0].mxu0
      %v2065 = vadd.f32 %v1580, %v2064
      %v2066 = vpop.f32.mrb[0].mxu0
      %2067 = vmatprep.mubr.f32.mxu0 0.0
      %2068 = vmatmul.mubr.f32.gmra.mrb[0].mxu0 %v1720
      %v2069 = vpop.f32.mrb[0].mxu0
      %v2070 = vadd.f32 %v1580, %v2069
      %v2071 = vpop.f32.mrb[0].mxu0
      %2072 = vmatprep.mubr.f32.mxu0 0.0
      %2073 = vmatmul.mubr.f32.gmra.mrb[0].mxu0 %v1723
      %v2074 = vpop.f32.mrb[0].mxu0
      %v2075 = vadd.f32 %v1580, %v2074
      %v2076 = vpop.f32.mrb[0].mxu0
      %2077 = vmatprep.mubr.f32.mxu0 0.0
      %2078 = vmatmul.mubr.f32.gmra.mrb[0].mxu0 %v1726
      %v2079 = vpop.f32.mrb[0].mxu0
      %v2080 = vadd.f32 %v1580, %v2079
      %v2081 = vpop.f32.mrb[0].mxu0
      %2082 = vmatprep.mubr.f32.mxu0 0.0
      %2083 = vmatmul.mubr.f32.gmra.mrb[0].mxu0 %v1729
      %v2084 = vpop.f32.mrb[0].mxu0
      %v2085 = vadd.f32 %v1580, %v2084
      %v2086 = vpop.f32.mrb[0].mxu0
      %2087 = vmatprep.mubr.f32.mxu0 0.0
      %2088 = vmatmul.mubr.f32.gmra.mrb[0].mxu0 %v1732
      %v2089 = vpop.f32.mrb[0].mxu0
      %v2090 = vadd.f32 %v1580, %v2089
      %v2091 = vpop.f32.mrb[0].mxu0
      %2092 = vmatprep.mubr.f32.mxu0 0.0
      %2093 = vmatmul.mubr.f32.gmra.mrb[0].mxu0 %v1735
      %v2094 = vpop.f32.mrb[0].mxu0
      %v2095 = vadd.f32 %v1580, %v2094
      %v2096 = vpop.f32.mrb[0].mxu0
      %2097 = vmatprep.mubr.f32.mxu0 0.0
      %2098 = vmatmul.mubr.f32.gmra.mrb[0].mxu0 %v1738
      %v2099 = vpop.f32.mrb[0].mxu0
      %v2100 = vadd.f32 %v1580, %v2099
      %v2101 = vpop.f32.mrb[0].mxu0
      %2102 = vmatprep.mubr.f32.mxu0 0.0
      %2103 = vmatmul.mubr.f32.gmra.mrb[0].mxu0 %v1741
      %v2104 = vpop.f32.mrb[0].mxu0
      %v2105 = vadd.f32 %v1580, %v2104
      %v2106 = vpop.f32.mrb[0].mxu0
      %2107 = vmatprep.mubr.f32.mxu0 0.0
      %2108 = vmatmul.mubr.f32.gmra.mrb[0].mxu0 %v1744
      %v2109 = vpop.f32.mrb[0].mxu0
      %v2110 = vadd.f32 %v1580, %v2109
      %v2111 = vpop.f32.mrb[0].mxu0
      %2112 = vmatprep.mubr.f32.mxu0 0.0
      %2113 = vmatmul.mubr.f32.gmra.mrb[0].mxu0 %v1747
      %v2114 = vpop.f32.mrb[0].mxu0
      %v2115 = vadd.f32 %v1580, %v2114
      %v2116 = vpop.f32.mrb[0].mxu0
      %2117 = vmatprep.mubr.f32.mxu0 0.0
      %2118 = vmatmul.mubr.f32.gmra.mrb[0].mxu0 %v1750
      %v2119 = vpop.f32.mrb[0].mxu0
      %v2120 = vadd.f32 %v1580, %v2119
      %v2121 = vpop.f32.mrb[0].mxu0
      %2122 = vmatprep.mubr.f32.mxu0 0.0
      %2123 = vmatmul.mubr.f32.gmra.mrb[0].mxu0 %v1753
      %v2124 = vpop.f32.mrb[0].mxu0
      %v2125 = vadd.f32 %v1580, %v2124
      %v2126 = vpop.f32.mrb[0].mxu0
      %2127 = vmatprep.mubr.f32.mxu0 0.0
      %2128 = vmatmul.mubr.f32.gmra.mrb[0].mxu0 %v1756
      %v2129 = vpop.f32.mrb[0].mxu0
      %v2130 = vadd.f32 %v1580, %v2129
      %v2131 = vpop.f32.mrb[0].mxu0
      %2132 = vmatprep.mubr.f32.mxu0 0.0
      %2133 = vmatmul.mubr.f32.gmra.mrb[0].mxu0 %v1759
      %v2134 = vpop.f32.mrb[0].mxu0
      %v2135 = vadd.f32 %v1580, %v2134
      %v2136 = vpop.f32.mrb[0].mxu0
      %2137 = vmatprep.mubr.f32.mxu0 0.0
      %2138 = vmatmul.mubr.f32.gmra.mrb[0].mxu0 %v1762
      %v2139 = vpop.f32.mrb[0].mxu0
      %v2140 = vadd.f32 %v1580, %v2139
      %v2141 = vpop.f32.mrb[0].mxu0
      %2142 = vmatprep.mubr.f32.mxu0 0.0
      %2143 = vmatmul.mubr.f32.gmra.mrb[0].mxu0 %v1765
      %v2144 = vpop.f32.mrb[0].mxu0
      %v2145 = vadd.f32 %v1580, %v2144
      %v2146 = vpop.f32.mrb[0].mxu0
      %2147 = vmatprep.mubr.f32.mxu0 0.0
      %2148 = vmatmul.mubr.f32.gmra.mrb[0].mxu0 %v1768
      %v2149 = vpop.f32.mrb[0].mxu0
      %v2150 = vadd.f32 %v1580, %v2149
      %v2151 = vpop.f32.mrb[0].mxu0
      %2152 = vmatprep.mubr.f32.mxu0 0.0
      %2153 = vmatmul.mubr.f32.gmra.mrb[0].mxu0 %v1771
      %v2154 = vpop.f32.mrb[0].mxu0
      %v2155 = vadd.f32 %v1580, %v2154
      %v2156 = vpop.f32.mrb[0].mxu0
      %2157 = vdwg.mxu0
      %v2158 = vmax.f32 %v1840, 0.0
      %v2159 = vmax.f32 %v1845, 0.0
      %v2160 = vmax.f32 %v1850, 0.0
      %v2161 = vmax.f32 %v1855, 0.0
      %v2162 = vmax.f32 %v1860, 0.0
      %v2163 = vmax.f32 %v1865, 0.0
      %v2164 = vmax.f32 %v1870, 0.0
      %v2165 = vmax.f32 %v1875, 0.0
      %v2166 = vmax.f32 %v1880, 0.0
      %v2167 = vmax.f32 %v1885, 0.0
      %v2168 = vmax.f32 %v1890, 0.0
      %v2169 = vmax.f32 %v1895, 0.0
      %v2170 = vmax.f32 %v1900, 0.0
      %v2171 = vmax.f32 %v1905, 0.0
      %v2172 = vmax.f32 %v1910, 0.0
      %v2173 = vmax.f32 %v1915, 0.0
      %v2174 = vmax.f32 %v1920, 0.0
      %v2175 = vmax.f32 %v1925, 0.0
      %v2176 = vmax.f32 %v1930, 0.0
      %v2177 = vmax.f32 %v1935, 0.0
      %v2178 = vmax.f32 %v1940, 0.0
      %v2179 = vmax.f32 %v1945, 0.0
      %v2180 = vmax.f32 %v1950, 0.0
      %v2181 = vmax.f32 %v1955, 0.0
      %v2182 = vmax.f32 %v1960, 0.0
      %v2183 = vmax.f32 %v1965, 0.0
      %v2184 = vmax.f32 %v1970, 0.0
      %v2185 = vmax.f32 %v1975, 0.0
      %v2186 = vmax.f32 %v1980, 0.0
      %v2187 = vmax.f32 %v1985, 0.0
      %v2188 = vmax.f32 %v1990, 0.0
      %v2189 = vmax.f32 %v1995, 0.0
      %v2190 = vmax.f32 %v2000, 0.0
      %v2191 = vmax.f32 %v2005, 0.0
      %v2192 = vmax.f32 %v2010, 0.0
      %v2193 = vmax.f32 %v2015, 0.0
      %v2194 = vmax.f32 %v2020, 0.0
      %v2195 = vmax.f32 %v2025, 0.0
      %v2196 = vmax.f32 %v2030, 0.0
      %v2197 = vmax.f32 %v2035, 0.0
      %v2198 = vmax.f32 %v2040, 0.0
      %v2199 = vmax.f32 %v2045, 0.0
      %v2200 = vmax.f32 %v2050, 0.0
      %v2201 = vmax.f32 %v2055, 0.0
      %v2202 = vmax.f32 %v2060, 0.0
      %v2203 = vmax.f32 %v2065, 0.0
      %v2204 = vmax.f32 %v2070, 0.0
      %v2205 = vmax.f32 %v2075, 0.0
      %v2206 = vmax.f32 %v2080, 0.0
      %v2207 = vmax.f32 %v2085, 0.0
      %v2208 = vmax.f32 %v2090, 0.0
      %v2209 = vmax.f32 %v2095, 0.0
      %v2210 = vmax.f32 %v2100, 0.0
      %v2211 = vmax.f32 %v2105, 0.0
      %v2212 = vmax.f32 %v2110, 0.0
      %v2213 = vmax.f32 %v2115, 0.0
      %v2214 = vmax.f32 %v2120, 0.0
      %v2215 = vmax.f32 %v2125, 0.0
      %v2216 = vmax.f32 %v2130, 0.0
      %v2217 = vmax.f32 %v2135, 0.0
      %v2218 = vmax.f32 %v2140, 0.0
      %v2219 = vmax.f32 %v2145, 0.0
      %v2220 = vmax.f32 %v2150, 0.0
      %v2221 = vmax.f32 %v2155, 0.0
      %v2222 = vld [vmem:[%s2 + $0x130] sm:$0xff]
      %v2223 = vld [vmem:[%s2 + $0x138] sm:$0xff]
      %v2224 = vld [vmem:[%s2 + $0x140] sm:$0xff]
      %v2225 = vld [vmem:[%s2 + $0x148] sm:$0xff]
      %v2226 = vld [vmem:[%s2 + $0x150] sm:$0xff]
      %v2227 = vld [vmem:[%s2 + $0x158] sm:$0xff]
      %v2228 = vld [vmem:[%s2 + $0x160] sm:$0xff]
      %v2229 = vld [vmem:[%s2 + $0x168] sm:$0xff]
      %v2230 = vld [vmem:[%s3 + $0x9] sm:$0x1]
      %v2231 = vlaneseq
      %v2232 = vshrl.u32 %v2231, 7
      %v2233 = vsub.s32 0, %v2232
      %v2234 = vrot.slane %v2230, %v2233
      %v2236 = vsel %vm525, %v2158, 0
      %v2239 = vsel %vm525, %v2159, 0
      %v2242 = vsel %vm525, %v2160, 0
      %v2245 = vsel %vm525, %v2161, 0
      %v2248 = vsel %vm525, %v2162, 0
      %v2251 = vsel %vm525, %v2163, 0
      %v2254 = vsel %vm525, %v2164, 0
      %v2257 = vsel %vm525, %v2165, 0
      %v2260 = vsel %vm525, %v2166, 0
      %v2263 = vsel %vm525, %v2167, 0
      %v2266 = vsel %vm525, %v2168, 0
      %v2269 = vsel %vm525, %v2169, 0
      %v2272 = vsel %vm525, %v2170, 0
      %v2275 = vsel %vm525, %v2171, 0
      %v2278 = vsel %vm525, %v2172, 0
      %v2281 = vsel %vm525, %v2173, 0
      %v2284 = vsel %vm525, %v2174, 0
      %v2287 = vsel %vm525, %v2175, 0
      %v2290 = vsel %vm525, %v2176, 0
      %v2293 = vsel %vm525, %v2177, 0
      %v2296 = vsel %vm525, %v2178, 0
      %v2299 = vsel %vm525, %v2179, 0
      %v2302 = vsel %vm525, %v2180, 0
      %v2305 = vsel %vm525, %v2181, 0
      %v2308 = vsel %vm525, %v2182, 0
      %v2311 = vsel %vm525, %v2183, 0
      %v2314 = vsel %vm525, %v2184, 0
      %v2317 = vsel %vm525, %v2185, 0
      %v2320 = vsel %vm525, %v2186, 0
      %v2323 = vsel %vm525, %v2187, 0
      %v2326 = vsel %vm525, %v2188, 0
      %v2329 = vsel %vm525, %v2189, 0
      %v2332 = vsel %vm525, %v2190, 0
      %v2335 = vsel %vm525, %v2191, 0
      %v2338 = vsel %vm525, %v2192, 0
      %v2341 = vsel %vm525, %v2193, 0
      %v2344 = vsel %vm525, %v2194, 0
      %v2347 = vsel %vm525, %v2195, 0
      %v2350 = vsel %vm525, %v2196, 0
      %v2353 = vsel %vm525, %v2197, 0
      %v2356 = vsel %vm525, %v2198, 0
      %v2359 = vsel %vm525, %v2199, 0
      %v2362 = vsel %vm525, %v2200, 0
      %v2365 = vsel %vm525, %v2201, 0
      %v2368 = vsel %vm525, %v2202, 0
      %v2371 = vsel %vm525, %v2203, 0
      %v2374 = vsel %vm525, %v2204, 0
      %v2377 = vsel %vm525, %v2205, 0
      %v2380 = vsel %vm525, %v2206, 0
      %v2383 = vsel %vm525, %v2207, 0
      %v2386 = vsel %vm525, %v2208, 0
      %v2389 = vsel %vm525, %v2209, 0
      %v2392 = vsel %vm525, %v2210, 0
      %v2395 = vsel %vm525, %v2211, 0
      %v2398 = vsel %vm525, %v2212, 0
      %v2401 = vsel %vm525, %v2213, 0
      %v2404 = vsel %vm525, %v2214, 0
      %v2407 = vsel %vm525, %v2215, 0
      %v2410 = vsel %vm525, %v2216, 0
      %v2413 = vsel %vm525, %v2217, 0
      %v2416 = vsel %vm525, %v2218, 0
      %v2419 = vsel %vm525, %v2219, 0
      %v2422 = vsel %vm525, %v2220, 0
      %v2425 = vsel %vm525, %v2221, 0
      %2427 = vmatprep.subr.mxu0 0.0
      %2428 = vmatpush1.msra.mxu0 %v2222
      %2429 = vmatprep.subr.mxu0 0.0
      %2430 = vmatpush1.msra.mxu0 %v2223
      %2431 = vmatprep.subr.mxu0 0.0
      %2432 = vmatpush1.msra.mxu0 %v2224
      %2433 = vmatprep.subr.mxu0 0.0
      %2434 = vmatpush1.msra.mxu0 %v2225
      %2435 = vmatprep.subr.mxu0 0.0
      %2436 = vmatpush1.msra.mxu0 %v2226
      %2437 = vmatprep.subr.mxu0 0.0
      %2438 = vmatpush1.msra.mxu0 %v2227
      %2439 = vmatprep.subr.mxu0 0.0
      %2440 = vmatpush1.msra.mxu0 %v2228
      %2441 = vmatprep.subr.mxu0 0.0
      %2442 = vmatpush1.msra.mxu0 %v2229
      %2443 = vmatprep.subr.mxu0 0.0
      %2444 = vmatpush1.msra.mxu0 0.0
      %2445 = vmatprep.subr.mxu0 0.0
      %2446 = vmatpush1.msra.mxu0 0.0
      %2447 = vmatprep.subr.mxu0 0.0
      %2448 = vmatpush1.msra.mxu0 0.0
      %2449 = vmatprep.subr.mxu0 0.0
      %2450 = vmatpush1.msra.mxu0 0.0
      %2451 = vmatprep.subr.mxu0 0.0
      %2452 = vmatpush1.msra.mxu0 0.0
      %2453 = vmatprep.subr.mxu0 0.0
      %2454 = vmatpush1.msra.mxu0 0.0
      %2455 = vmatprep.subr.mxu0 0.0
      %2456 = vmatpush1.msra.mxu0 0.0
      %2457 = vmatprep.subr.mxu0 0.0
      %2458 = vmatpush1.msra.mxu0 0.0
      %2459 = vmatprep.subr.mxu0 0.0
      %2460 = vmatpush1.msra.mxu0 0.0
      %2461 = vmatprep.subr.mxu0 0.0
      %2462 = vmatpush1.msra.mxu0 0.0
      %2463 = vmatprep.subr.mxu0 0.0
      %2464 = vmatpush1.msra.mxu0 0.0
      %2465 = vmatprep.subr.mxu0 0.0
      %2466 = vmatpush1.msra.mxu0 0.0
      %2467 = vmatprep.subr.mxu0 0.0
      %2468 = vmatpush1.msra.mxu0 0.0
      %2469 = vmatprep.subr.mxu0 0.0
      %2470 = vmatpush1.msra.mxu0 0.0
      %2471 = vmatprep.subr.mxu0 0.0
      %2472 = vmatpush1.msra.mxu0 0.0
      %2473 = vmatprep.subr.mxu0 0.0
      %2474 = vmatpush1.msra.mxu0 0.0
      %2475 = vmatprep.subr.mxu0 0.0
      %2476 = vmatpush1.msra.mxu0 0.0
      %2477 = vmatprep.subr.mxu0 0.0
      %2478 = vmatpush1.msra.mxu0 0.0
      %2479 = vmatprep.subr.mxu0 0.0
      %2480 = vmatpush1.msra.mxu0 0.0
      %2481 = vmatprep.subr.mxu0 0.0
      %2482 = vmatpush1.msra.mxu0 0.0
      %2483 = vmatprep.subr.mxu0 0.0
      %2484 = vmatpush1.msra.mxu0 0.0
      %2485 = vmatprep.subr.mxu0 0.0
      %2486 = vmatpush1.msra.mxu0 0.0
      %2487 = vmatprep.subr.mxu0 0.0
      %2488 = vmatpush1.msra.mxu0 0.0
      %2489 = vmatprep.subr.mxu0 0.0
      %2490 = vmatpush1.msra.mxu0 0.0
      %2491 = vmatprep.mubr.f32.mxu0 0.0
      %2492 = vmatmul.mubr.f32.gmra.mrb[0].mxu0 %v2236
      %v2493 = vpop.f32.mrb[0].mxu0
      %v2494 = vadd.f32 %v2234, %v2493
      %v2495 = vpop.f32.mrb[0].mxu0
      %2496 = vmatprep.mubr.f32.mxu0 0.0
      %2497 = vmatmul.mubr.f32.gmra.mrb[0].mxu0 %v2239
      %v2498 = vpop.f32.mrb[0].mxu0
      %v2499 = vadd.f32 %v2234, %v2498
      %v2500 = vpop.f32.mrb[0].mxu0
      %2501 = vmatprep.mubr.f32.mxu0 0.0
      %2502 = vmatmul.mubr.f32.gmra.mrb[0].mxu0 %v2242
      %v2503 = vpop.f32.mrb[0].mxu0
      %v2504 = vadd.f32 %v2234, %v2503
      %v2505 = vpop.f32.mrb[0].mxu0
      %2506 = vmatprep.mubr.f32.mxu0 0.0
      %2507 = vmatmul.mubr.f32.gmra.mrb[0].mxu0 %v2245
      %v2508 = vpop.f32.mrb[0].mxu0
      %v2509 = vadd.f32 %v2234, %v2508
      %v2510 = vpop.f32.mrb[0].mxu0
      %2511 = vmatprep.mubr.f32.mxu0 0.0
      %2512 = vmatmul.mubr.f32.gmra.mrb[0].mxu0 %v2248
      %v2513 = vpop.f32.mrb[0].mxu0
      %v2514 = vadd.f32 %v2234, %v2513
      %v2515 = vpop.f32.mrb[0].mxu0
      %2516 = vmatprep.mubr.f32.mxu0 0.0
      %2517 = vmatmul.mubr.f32.gmra.mrb[0].mxu0 %v2251
      %v2518 = vpop.f32.mrb[0].mxu0
      %v2519 = vadd.f32 %v2234, %v2518
      %v2520 = vpop.f32.mrb[0].mxu0
      %2521 = vmatprep.mubr.f32.mxu0 0.0
      %2522 = vmatmul.mubr.f32.gmra.mrb[0].mxu0 %v2254
      %v2523 = vpop.f32.mrb[0].mxu0
      %v2524 = vadd.f32 %v2234, %v2523
      %v2525 = vpop.f32.mrb[0].mxu0
      %2526 = vmatprep.mubr.f32.mxu0 0.0
      %2527 = vmatmul.mubr.f32.gmra.mrb[0].mxu0 %v2257
      %v2528 = vpop.f32.mrb[0].mxu0
      %v2529 = vadd.f32 %v2234, %v2528
      %v2530 = vpop.f32.mrb[0].mxu0
      %2531 = vmatprep.mubr.f32.mxu0 0.0
      %2532 = vmatmul.mubr.f32.gmra.mrb[0].mxu0 %v2260
      %v2533 = vpop.f32.mrb[0].mxu0
      %v2534 = vadd.f32 %v2234, %v2533
      %v2535 = vpop.f32.mrb[0].mxu0
      %2536 = vmatprep.mubr.f32.mxu0 0.0
      %2537 = vmatmul.mubr.f32.gmra.mrb[0].mxu0 %v2263
      %v2538 = vpop.f32.mrb[0].mxu0
      %v2539 = vadd.f32 %v2234, %v2538
      %v2540 = vpop.f32.mrb[0].mxu0
      %2541 = vmatprep.mubr.f32.mxu0 0.0
      %2542 = vmatmul.mubr.f32.gmra.mrb[0].mxu0 %v2266
      %v2543 = vpop.f32.mrb[0].mxu0
      %v2544 = vadd.f32 %v2234, %v2543
      %v2545 = vpop.f32.mrb[0].mxu0
      %2546 = vmatprep.mubr.f32.mxu0 0.0
      %2547 = vmatmul.mubr.f32.gmra.mrb[0].mxu0 %v2269
      %v2548 = vpop.f32.mrb[0].mxu0
      %v2549 = vadd.f32 %v2234, %v2548
      %v2550 = vpop.f32.mrb[0].mxu0
      %2551 = vmatprep.mubr.f32.mxu0 0.0
      %2552 = vmatmul.mubr.f32.gmra.mrb[0].mxu0 %v2272
      %v2553 = vpop.f32.mrb[0].mxu0
      %v2554 = vadd.f32 %v2234, %v2553
      %v2555 = vpop.f32.mrb[0].mxu0
      %2556 = vmatprep.mubr.f32.mxu0 0.0
      %2557 = vmatmul.mubr.f32.gmra.mrb[0].mxu0 %v2275
      %v2558 = vpop.f32.mrb[0].mxu0
      %v2559 = vadd.f32 %v2234, %v2558
      %v2560 = vpop.f32.mrb[0].mxu0
      %2561 = vmatprep.mubr.f32.mxu0 0.0
      %2562 = vmatmul.mubr.f32.gmra.mrb[0].mxu0 %v2278
      %v2563 = vpop.f32.mrb[0].mxu0
      %v2564 = vadd.f32 %v2234, %v2563
      %v2565 = vpop.f32.mrb[0].mxu0
      %2566 = vmatprep.mubr.f32.mxu0 0.0
      %2567 = vmatmul.mubr.f32.gmra.mrb[0].mxu0 %v2281
      %v2568 = vpop.f32.mrb[0].mxu0
      %v2569 = vadd.f32 %v2234, %v2568
      %v2570 = vpop.f32.mrb[0].mxu0
      %2571 = vmatprep.mubr.f32.mxu0 0.0
      %2572 = vmatmul.mubr.f32.gmra.mrb[0].mxu0 %v2284
      %v2573 = vpop.f32.mrb[0].mxu0
      %v2574 = vadd.f32 %v2234, %v2573
      %v2575 = vpop.f32.mrb[0].mxu0
      %2576 = vmatprep.mubr.f32.mxu0 0.0
      %2577 = vmatmul.mubr.f32.gmra.mrb[0].mxu0 %v2287
      %v2578 = vpop.f32.mrb[0].mxu0
      %v2579 = vadd.f32 %v2234, %v2578
      %v2580 = vpop.f32.mrb[0].mxu0
      %2581 = vmatprep.mubr.f32.mxu0 0.0
      %2582 = vmatmul.mubr.f32.gmra.mrb[0].mxu0 %v2290
      %v2583 = vpop.f32.mrb[0].mxu0
      %v2584 = vadd.f32 %v2234, %v2583
      %v2585 = vpop.f32.mrb[0].mxu0
      %2586 = vmatprep.mubr.f32.mxu0 0.0
      %2587 = vmatmul.mubr.f32.gmra.mrb[0].mxu0 %v2293
      %v2588 = vpop.f32.mrb[0].mxu0
      %v2589 = vadd.f32 %v2234, %v2588
      %v2590 = vpop.f32.mrb[0].mxu0
      %2591 = vmatprep.mubr.f32.mxu0 0.0
      %2592 = vmatmul.mubr.f32.gmra.mrb[0].mxu0 %v2296
      %v2593 = vpop.f32.mrb[0].mxu0
      %v2594 = vadd.f32 %v2234, %v2593
      %v2595 = vpop.f32.mrb[0].mxu0
      %2596 = vmatprep.mubr.f32.mxu0 0.0
      %2597 = vmatmul.mubr.f32.gmra.mrb[0].mxu0 %v2299
      %v2598 = vpop.f32.mrb[0].mxu0
      %v2599 = vadd.f32 %v2234, %v2598
      %v2600 = vpop.f32.mrb[0].mxu0
      %2601 = vmatprep.mubr.f32.mxu0 0.0
      %2602 = vmatmul.mubr.f32.gmra.mrb[0].mxu0 %v2302
      %v2603 = vpop.f32.mrb[0].mxu0
      %v2604 = vadd.f32 %v2234, %v2603
      %v2605 = vpop.f32.mrb[0].mxu0
      %2606 = vmatprep.mubr.f32.mxu0 0.0
      %2607 = vmatmul.mubr.f32.gmra.mrb[0].mxu0 %v2305
      %v2608 = vpop.f32.mrb[0].mxu0
      %v2609 = vadd.f32 %v2234, %v2608
      %v2610 = vpop.f32.mrb[0].mxu0
      %2611 = vmatprep.mubr.f32.mxu0 0.0
      %2612 = vmatmul.mubr.f32.gmra.mrb[0].mxu0 %v2308
      %v2613 = vpop.f32.mrb[0].mxu0
      %v2614 = vadd.f32 %v2234, %v2613
      %v2615 = vpop.f32.mrb[0].mxu0
      %2616 = vmatprep.mubr.f32.mxu0 0.0
      %2617 = vmatmul.mubr.f32.gmra.mrb[0].mxu0 %v2311
      %v2618 = vpop.f32.mrb[0].mxu0
      %v2619 = vadd.f32 %v2234, %v2618
      %v2620 = vpop.f32.mrb[0].mxu0
      %2621 = vmatprep.mubr.f32.mxu0 0.0
      %2622 = vmatmul.mubr.f32.gmra.mrb[0].mxu0 %v2314
      %v2623 = vpop.f32.mrb[0].mxu0
      %v2624 = vadd.f32 %v2234, %v2623
      %v2625 = vpop.f32.mrb[0].mxu0
      %2626 = vmatprep.mubr.f32.mxu0 0.0
      %2627 = vmatmul.mubr.f32.gmra.mrb[0].mxu0 %v2317
      %v2628 = vpop.f32.mrb[0].mxu0
      %v2629 = vadd.f32 %v2234, %v2628
      %v2630 = vpop.f32.mrb[0].mxu0
      %2631 = vmatprep.mubr.f32.mxu0 0.0
      %2632 = vmatmul.mubr.f32.gmra.mrb[0].mxu0 %v2320
      %v2633 = vpop.f32.mrb[0].mxu0
      %v2634 = vadd.f32 %v2234, %v2633
      %v2635 = vpop.f32.mrb[0].mxu0
      %2636 = vmatprep.mubr.f32.mxu0 0.0
      %2637 = vmatmul.mubr.f32.gmra.mrb[0].mxu0 %v2323
      %v2638 = vpop.f32.mrb[0].mxu0
      %v2639 = vadd.f32 %v2234, %v2638
      %v2640 = vpop.f32.mrb[0].mxu0
      %2641 = vmatprep.mubr.f32.mxu0 0.0
      %2642 = vmatmul.mubr.f32.gmra.mrb[0].mxu0 %v2326
      %v2643 = vpop.f32.mrb[0].mxu0
      %v2644 = vadd.f32 %v2234, %v2643
      %v2645 = vpop.f32.mrb[0].mxu0
      %2646 = vmatprep.mubr.f32.mxu0 0.0
      %2647 = vmatmul.mubr.f32.gmra.mrb[0].mxu0 %v2329
      %v2648 = vpop.f32.mrb[0].mxu0
      %v2649 = vadd.f32 %v2234, %v2648
      %v2650 = vpop.f32.mrb[0].mxu0
      %2651 = vmatprep.mubr.f32.mxu0 0.0
      %2652 = vmatmul.mubr.f32.gmra.mrb[0].mxu0 %v2332
      %v2653 = vpop.f32.mrb[0].mxu0
      %v2654 = vadd.f32 %v2234, %v2653
      %v2655 = vpop.f32.mrb[0].mxu0
      %2656 = vmatprep.mubr.f32.mxu0 0.0
      %2657 = vmatmul.mubr.f32.gmra.mrb[0].mxu0 %v2335
      %v2658 = vpop.f32.mrb[0].mxu0
      %v2659 = vadd.f32 %v2234, %v2658
      %v2660 = vpop.f32.mrb[0].mxu0
      %2661 = vmatprep.mubr.f32.mxu0 0.0
      %2662 = vmatmul.mubr.f32.gmra.mrb[0].mxu0 %v2338
      %v2663 = vpop.f32.mrb[0].mxu0
      %v2664 = vadd.f32 %v2234, %v2663
      %v2665 = vpop.f32.mrb[0].mxu0
      %2666 = vmatprep.mubr.f32.mxu0 0.0
      %2667 = vmatmul.mubr.f32.gmra.mrb[0].mxu0 %v2341
      %v2668 = vpop.f32.mrb[0].mxu0
      %v2669 = vadd.f32 %v2234, %v2668
      %v2670 = vpop.f32.mrb[0].mxu0
      %2671 = vmatprep.mubr.f32.mxu0 0.0
      %2672 = vmatmul.mubr.f32.gmra.mrb[0].mxu0 %v2344
      %v2673 = vpop.f32.mrb[0].mxu0
      %v2674 = vadd.f32 %v2234, %v2673
      %v2675 = vpop.f32.mrb[0].mxu0
      %2676 = vmatprep.mubr.f32.mxu0 0.0
      %2677 = vmatmul.mubr.f32.gmra.mrb[0].mxu0 %v2347
      %v2678 = vpop.f32.mrb[0].mxu0
      %v2679 = vadd.f32 %v2234, %v2678
      %v2680 = vpop.f32.mrb[0].mxu0
      %2681 = vmatprep.mubr.f32.mxu0 0.0
      %2682 = vmatmul.mubr.f32.gmra.mrb[0].mxu0 %v2350
      %v2683 = vpop.f32.mrb[0].mxu0
      %v2684 = vadd.f32 %v2234, %v2683
      %v2685 = vpop.f32.mrb[0].mxu0
      %2686 = vmatprep.mubr.f32.mxu0 0.0
      %2687 = vmatmul.mubr.f32.gmra.mrb[0].mxu0 %v2353
      %v2688 = vpop.f32.mrb[0].mxu0
      %v2689 = vadd.f32 %v2234, %v2688
      %v2690 = vpop.f32.mrb[0].mxu0
      %2691 = vmatprep.mubr.f32.mxu0 0.0
      %2692 = vmatmul.mubr.f32.gmra.mrb[0].mxu0 %v2356
      %v2693 = vpop.f32.mrb[0].mxu0
      %v2694 = vadd.f32 %v2234, %v2693
      %v2695 = vpop.f32.mrb[0].mxu0
      %2696 = vmatprep.mubr.f32.mxu0 0.0
      %2697 = vmatmul.mubr.f32.gmra.mrb[0].mxu0 %v2359
      %v2698 = vpop.f32.mrb[0].mxu0
      %v2699 = vadd.f32 %v2234, %v2698
      %v2700 = vpop.f32.mrb[0].mxu0
      %2701 = vmatprep.mubr.f32.mxu0 0.0
      %2702 = vmatmul.mubr.f32.gmra.mrb[0].mxu0 %v2362
      %v2703 = vpop.f32.mrb[0].mxu0
      %v2704 = vadd.f32 %v2234, %v2703
      %v2705 = vpop.f32.mrb[0].mxu0
      %2706 = vmatprep.mubr.f32.mxu0 0.0
      %2707 = vmatmul.mubr.f32.gmra.mrb[0].mxu0 %v2365
      %v2708 = vpop.f32.mrb[0].mxu0
      %v2709 = vadd.f32 %v2234, %v2708
      %v2710 = vpop.f32.mrb[0].mxu0
      %2711 = vmatprep.mubr.f32.mxu0 0.0
      %2712 = vmatmul.mubr.f32.gmra.mrb[0].mxu0 %v2368
      %v2713 = vpop.f32.mrb[0].mxu0
      %v2714 = vadd.f32 %v2234, %v2713
      %v2715 = vpop.f32.mrb[0].mxu0
      %2716 = vmatprep.mubr.f32.mxu0 0.0
      %2717 = vmatmul.mubr.f32.gmra.mrb[0].mxu0 %v2371
      %v2718 = vpop.f32.mrb[0].mxu0
      %v2719 = vadd.f32 %v2234, %v2718
      %v2720 = vpop.f32.mrb[0].mxu0
      %2721 = vmatprep.mubr.f32.mxu0 0.0
      %2722 = vmatmul.mubr.f32.gmra.mrb[0].mxu0 %v2374
      %v2723 = vpop.f32.mrb[0].mxu0
      %v2724 = vadd.f32 %v2234, %v2723
      %v2725 = vpop.f32.mrb[0].mxu0
      %2726 = vmatprep.mubr.f32.mxu0 0.0
      %2727 = vmatmul.mubr.f32.gmra.mrb[0].mxu0 %v2377
      %v2728 = vpop.f32.mrb[0].mxu0
      %v2729 = vadd.f32 %v2234, %v2728
      %v2730 = vpop.f32.mrb[0].mxu0
      %2731 = vmatprep.mubr.f32.mxu0 0.0
      %2732 = vmatmul.mubr.f32.gmra.mrb[0].mxu0 %v2380
      %v2733 = vpop.f32.mrb[0].mxu0
      %v2734 = vadd.f32 %v2234, %v2733
      %v2735 = vpop.f32.mrb[0].mxu0
      %2736 = vmatprep.mubr.f32.mxu0 0.0
      %2737 = vmatmul.mubr.f32.gmra.mrb[0].mxu0 %v2383
      %v2738 = vpop.f32.mrb[0].mxu0
      %v2739 = vadd.f32 %v2234, %v2738
      %v2740 = vpop.f32.mrb[0].mxu0
      %2741 = vmatprep.mubr.f32.mxu0 0.0
      %2742 = vmatmul.mubr.f32.gmra.mrb[0].mxu0 %v2386
      %v2743 = vpop.f32.mrb[0].mxu0
      %v2744 = vadd.f32 %v2234, %v2743
      %v2745 = vpop.f32.mrb[0].mxu0
      %2746 = vmatprep.mubr.f32.mxu0 0.0
      %2747 = vmatmul.mubr.f32.gmra.mrb[0].mxu0 %v2389
      %v2748 = vpop.f32.mrb[0].mxu0
      %v2749 = vadd.f32 %v2234, %v2748
      %v2750 = vpop.f32.mrb[0].mxu0
      %2751 = vmatprep.mubr.f32.mxu0 0.0
      %2752 = vmatmul.mubr.f32.gmra.mrb[0].mxu0 %v2392
      %v2753 = vpop.f32.mrb[0].mxu0
      %v2754 = vadd.f32 %v2234, %v2753
      %v2755 = vpop.f32.mrb[0].mxu0
      %2756 = vmatprep.mubr.f32.mxu0 0.0
      %2757 = vmatmul.mubr.f32.gmra.mrb[0].mxu0 %v2395
      %v2758 = vpop.f32.mrb[0].mxu0
      %v2759 = vadd.f32 %v2234, %v2758
      %v2760 = vpop.f32.mrb[0].mxu0
      %2761 = vmatprep.mubr.f32.mxu0 0.0
      %2762 = vmatmul.mubr.f32.gmra.mrb[0].mxu0 %v2398
      %v2763 = vpop.f32.mrb[0].mxu0
      %v2764 = vadd.f32 %v2234, %v2763
      %v2765 = vpop.f32.mrb[0].mxu0
      %2766 = vmatprep.mubr.f32.mxu0 0.0
      %2767 = vmatmul.mubr.f32.gmra.mrb[0].mxu0 %v2401
      %v2768 = vpop.f32.mrb[0].mxu0
      %v2769 = vadd.f32 %v2234, %v2768
      %v2770 = vpop.f32.mrb[0].mxu0
      %2771 = vmatprep.mubr.f32.mxu0 0.0
      %2772 = vmatmul.mubr.f32.gmra.mrb[0].mxu0 %v2404
      %v2773 = vpop.f32.mrb[0].mxu0
      %v2774 = vadd.f32 %v2234, %v2773
      %v2775 = vpop.f32.mrb[0].mxu0
      %2776 = vmatprep.mubr.f32.mxu0 0.0
      %2777 = vmatmul.mubr.f32.gmra.mrb[0].mxu0 %v2407
      %v2778 = vpop.f32.mrb[0].mxu0
      %v2779 = vadd.f32 %v2234, %v2778
      %v2780 = vpop.f32.mrb[0].mxu0
      %2781 = vmatprep.mubr.f32.mxu0 0.0
      %2782 = vmatmul.mubr.f32.gmra.mrb[0].mxu0 %v2410
      %v2783 = vpop.f32.mrb[0].mxu0
      %v2784 = vadd.f32 %v2234, %v2783
      %v2785 = vpop.f32.mrb[0].mxu0
      %2786 = vmatprep.mubr.f32.mxu0 0.0
      %2787 = vmatmul.mubr.f32.gmra.mrb[0].mxu0 %v2413
      %v2788 = vpop.f32.mrb[0].mxu0
      %v2789 = vadd.f32 %v2234, %v2788
      %v2790 = vpop.f32.mrb[0].mxu0
      %2791 = vmatprep.mubr.f32.mxu0 0.0
      %2792 = vmatmul.mubr.f32.gmra.mrb[0].mxu0 %v2416
      %v2793 = vpop.f32.mrb[0].mxu0
      %v2794 = vadd.f32 %v2234, %v2793
      %v2795 = vpop.f32.mrb[0].mxu0
      %2796 = vmatprep.mubr.f32.mxu0 0.0
      %2797 = vmatmul.mubr.f32.gmra.mrb[0].mxu0 %v2419
      %v2798 = vpop.f32.mrb[0].mxu0
      %v2799 = vadd.f32 %v2234, %v2798
      %v2800 = vpop.f32.mrb[0].mxu0
      %2801 = vmatprep.mubr.f32.mxu0 0.0
      %2802 = vmatmul.mubr.f32.gmra.mrb[0].mxu0 %v2422
      %v2803 = vpop.f32.mrb[0].mxu0
      %v2804 = vadd.f32 %v2234, %v2803
      %v2805 = vpop.f32.mrb[0].mxu0
      %2806 = vmatprep.mubr.f32.mxu0 0.0
      %2807 = vmatmul.mubr.f32.gmra.mrb[0].mxu0 %v2425
      %v2808 = vpop.f32.mrb[0].mxu0
      %v2809 = vadd.f32 %v2234, %v2808
      %v2810 = vpop.f32.mrb[0].mxu0
      %2811 = vdwg.mxu0
      %v2812 = vmax.f32 %v2494, 0.0
      %v2813 = vmax.f32 %v2499, 0.0
      %v2814 = vmax.f32 %v2504, 0.0
      %v2815 = vmax.f32 %v2509, 0.0
      %v2816 = vmax.f32 %v2514, 0.0
      %v2817 = vmax.f32 %v2519, 0.0
      %v2818 = vmax.f32 %v2524, 0.0
      %v2819 = vmax.f32 %v2529, 0.0
      %v2820 = vmax.f32 %v2534, 0.0
      %v2821 = vmax.f32 %v2539, 0.0
      %v2822 = vmax.f32 %v2544, 0.0
      %v2823 = vmax.f32 %v2549, 0.0
      %v2824 = vmax.f32 %v2554, 0.0
      %v2825 = vmax.f32 %v2559, 0.0
      %v2826 = vmax.f32 %v2564, 0.0
      %v2827 = vmax.f32 %v2569, 0.0
      %v2828 = vmax.f32 %v2574, 0.0
      %v2829 = vmax.f32 %v2579, 0.0
      %v2830 = vmax.f32 %v2584, 0.0
      %v2831 = vmax.f32 %v2589, 0.0
      %v2832 = vmax.f32 %v2594, 0.0
      %v2833 = vmax.f32 %v2599, 0.0
      %v2834 = vmax.f32 %v2604, 0.0
      %v2835 = vmax.f32 %v2609, 0.0
      %v2836 = vmax.f32 %v2614, 0.0
      %v2837 = vmax.f32 %v2619, 0.0
      %v2838 = vmax.f32 %v2624, 0.0
      %v2839 = vmax.f32 %v2629, 0.0
      %v2840 = vmax.f32 %v2634, 0.0
      %v2841 = vmax.f32 %v2639, 0.0
      %v2842 = vmax.f32 %v2644, 0.0
      %v2843 = vmax.f32 %v2649, 0.0
      %v2844 = vmax.f32 %v2654, 0.0
      %v2845 = vmax.f32 %v2659, 0.0
      %v2846 = vmax.f32 %v2664, 0.0
      %v2847 = vmax.f32 %v2669, 0.0
      %v2848 = vmax.f32 %v2674, 0.0
      %v2849 = vmax.f32 %v2679, 0.0
      %v2850 = vmax.f32 %v2684, 0.0
      %v2851 = vmax.f32 %v2689, 0.0
      %v2852 = vmax.f32 %v2694, 0.0
      %v2853 = vmax.f32 %v2699, 0.0
      %v2854 = vmax.f32 %v2704, 0.0
      %v2855 = vmax.f32 %v2709, 0.0
      %v2856 = vmax.f32 %v2714, 0.0
      %v2857 = vmax.f32 %v2719, 0.0
      %v2858 = vmax.f32 %v2724, 0.0
      %v2859 = vmax.f32 %v2729, 0.0
      %v2860 = vmax.f32 %v2734, 0.0
      %v2861 = vmax.f32 %v2739, 0.0
      %v2862 = vmax.f32 %v2744, 0.0
      %v2863 = vmax.f32 %v2749, 0.0
      %v2864 = vmax.f32 %v2754, 0.0
      %v2865 = vmax.f32 %v2759, 0.0
      %v2866 = vmax.f32 %v2764, 0.0
      %v2867 = vmax.f32 %v2769, 0.0
      %v2868 = vmax.f32 %v2774, 0.0
      %v2869 = vmax.f32 %v2779, 0.0
      %v2870 = vmax.f32 %v2784, 0.0
      %v2871 = vmax.f32 %v2789, 0.0
      %v2872 = vmax.f32 %v2794, 0.0
      %v2873 = vmax.f32 %v2799, 0.0
      %v2874 = vmax.f32 %v2804, 0.0
      %v2875 = vmax.f32 %v2809, 0.0
      %v2876 = vld [vmem:[%s2 + $0x170] sm:$0x1]
      %v2877 = vld [vmem:[%s3 + $0xa] sm:$0x1]
      %v2878 = vlaneseq
      %v2879 = vshrl.u32 %v2878, 7
      %v2880 = vsub.s32 0, %v2879
      %v2881 = vrot.slane %v2876, %v2880
      %v2882 = vmul.f32 %v2812, %v2881
      %v2883 = vmul.f32 %v2813, %v2881
      %v2884 = vmul.f32 %v2814, %v2881
      %v2885 = vmul.f32 %v2815, %v2881
      %v2886 = vmul.f32 %v2816, %v2881
      %v2887 = vmul.f32 %v2817, %v2881
      %v2888 = vmul.f32 %v2818, %v2881
      %v2889 = vmul.f32 %v2819, %v2881
      %v2890 = vmul.f32 %v2820, %v2881
      %v2891 = vmul.f32 %v2821, %v2881
      %v2892 = vmul.f32 %v2822, %v2881
      %v2893 = vmul.f32 %v2823, %v2881
      %v2894 = vmul.f32 %v2824, %v2881
      %v2895 = vmul.f32 %v2825, %v2881
      %v2896 = vmul.f32 %v2826, %v2881
      %v2897 = vmul.f32 %v2827, %v2881
      %v2898 = vmul.f32 %v2828, %v2881
      %v2899 = vmul.f32 %v2829, %v2881
      %v2900 = vmul.f32 %v2830, %v2881
      %v2901 = vmul.f32 %v2831, %v2881
      %v2902 = vmul.f32 %v2832, %v2881
      %v2903 = vmul.f32 %v2833, %v2881
      %v2904 = vmul.f32 %v2834, %v2881
      %v2905 = vmul.f32 %v2835, %v2881
      %v2906 = vmul.f32 %v2836, %v2881
      %v2907 = vmul.f32 %v2837, %v2881
      %v2908 = vmul.f32 %v2838, %v2881
      %v2909 = vmul.f32 %v2839, %v2881
      %v2910 = vmul.f32 %v2840, %v2881
      %v2911 = vmul.f32 %v2841, %v2881
      %v2912 = vmul.f32 %v2842, %v2881
      %v2913 = vmul.f32 %v2843, %v2881
      %v2914 = vmul.f32 %v2844, %v2881
      %v2915 = vmul.f32 %v2845, %v2881
      %v2916 = vmul.f32 %v2846, %v2881
      %v2917 = vmul.f32 %v2847, %v2881
      %v2918 = vmul.f32 %v2848, %v2881
      %v2919 = vmul.f32 %v2849, %v2881
      %v2920 = vmul.f32 %v2850, %v2881
      %v2921 = vmul.f32 %v2851, %v2881
      %v2922 = vmul.f32 %v2852, %v2881
      %v2923 = vmul.f32 %v2853, %v2881
      %v2924 = vmul.f32 %v2854, %v2881
      %v2925 = vmul.f32 %v2855, %v2881
      %v2926 = vmul.f32 %v2856, %v2881
      %v2927 = vmul.f32 %v2857, %v2881
      %v2928 = vmul.f32 %v2858, %v2881
      %v2929 = vmul.f32 %v2859, %v2881
      %v2930 = vmul.f32 %v2860, %v2881
      %v2931 = vmul.f32 %v2861, %v2881
      %v2932 = vmul.f32 %v2862, %v2881
      %v2933 = vmul.f32 %v2863, %v2881
      %v2934 = vmul.f32 %v2864, %v2881
      %v2935 = vmul.f32 %v2865, %v2881
      %v2936 = vmul.f32 %v2866, %v2881
      %v2937 = vmul.f32 %v2867, %v2881
      %v2938 = vmul.f32 %v2868, %v2881
      %v2939 = vmul.f32 %v2869, %v2881
      %v2940 = vmul.f32 %v2870, %v2881
      %v2941 = vmul.f32 %v2871, %v2881
      %v2942 = vmul.f32 %v2872, %v2881
      %v2943 = vmul.f32 %v2873, %v2881
      %v2944 = vmul.f32 %v2874, %v2881
      %v2945 = vmul.f32 %v2875, %v2881
      %v2946 = vsel %vm356, %v2882, 0.0
      %2947 = vadd.xlane.f32.xlu0 %v2946
      %v2948 = vpop.xlane.xlu0 %2947
      %v2949 = vsel %vm356, %v2883, 0.0
      %2950 = vadd.xlane.f32.xlu0 %v2949
      %v2951 = vpop.xlane.xlu0 %2950
      %v2952 = vsel %vm356, %v2884, 0.0
      %2953 = vadd.xlane.f32.xlu0 %v2952
      %v2954 = vpop.xlane.xlu0 %2953
      %v2955 = vsel %vm356, %v2885, 0.0
      %2956 = vadd.xlane.f32.xlu0 %v2955
      %v2957 = vpop.xlane.xlu0 %2956
      %v2958 = vsel %vm356, %v2886, 0.0
      %2959 = vadd.xlane.f32.xlu0 %v2958
      %v2960 = vpop.xlane.xlu0 %2959
      %v2961 = vsel %vm356, %v2887, 0.0
      %2962 = vadd.xlane.f32.xlu0 %v2961
      %v2963 = vpop.xlane.xlu0 %2962
      %v2964 = vsel %vm356, %v2888, 0.0
      %2965 = vadd.xlane.f32.xlu0 %v2964
      %v2966 = vpop.xlane.xlu0 %2965
      %v2967 = vsel %vm356, %v2889, 0.0
      %2968 = vadd.xlane.f32.xlu0 %v2967
      %v2969 = vpop.xlane.xlu0 %2968
      %v2970 = vsel %vm356, %v2890, 0.0
      %2971 = vadd.xlane.f32.xlu0 %v2970
      %v2972 = vpop.xlane.xlu0 %2971
      %v2973 = vsel %vm356, %v2891, 0.0
      %2974 = vadd.xlane.f32.xlu0 %v2973
      %v2975 = vpop.xlane.xlu0 %2974
      %v2976 = vsel %vm356, %v2892, 0.0
      %2977 = vadd.xlane.f32.xlu0 %v2976
      %v2978 = vpop.xlane.xlu0 %2977
      %v2979 = vsel %vm356, %v2893, 0.0
      %2980 = vadd.xlane.f32.xlu0 %v2979
      %v2981 = vpop.xlane.xlu0 %2980
      %v2982 = vsel %vm356, %v2894, 0.0
      %2983 = vadd.xlane.f32.xlu0 %v2982
      %v2984 = vpop.xlane.xlu0 %2983
      %v2985 = vsel %vm356, %v2895, 0.0
      %2986 = vadd.xlane.f32.xlu0 %v2985
      %v2987 = vpop.xlane.xlu0 %2986
      %v2988 = vsel %vm356, %v2896, 0.0
      %2989 = vadd.xlane.f32.xlu0 %v2988
      %v2990 = vpop.xlane.xlu0 %2989
      %v2991 = vsel %vm356, %v2897, 0.0
      %2992 = vadd.xlane.f32.xlu0 %v2991
      %v2993 = vpop.xlane.xlu0 %2992
      %v2994 = vsel %vm356, %v2898, 0.0
      %2995 = vadd.xlane.f32.xlu0 %v2994
      %v2996 = vpop.xlane.xlu0 %2995
      %v2997 = vsel %vm356, %v2899, 0.0
      %2998 = vadd.xlane.f32.xlu0 %v2997
      %v2999 = vpop.xlane.xlu0 %2998
      %v3000 = vsel %vm356, %v2900, 0.0
      %3001 = vadd.xlane.f32.xlu0 %v3000
      %v3002 = vpop.xlane.xlu0 %3001
      %v3003 = vsel %vm356, %v2901, 0.0
      %3004 = vadd.xlane.f32.xlu0 %v3003
      %v3005 = vpop.xlane.xlu0 %3004
      %v3006 = vsel %vm356, %v2902, 0.0
      %3007 = vadd.xlane.f32.xlu0 %v3006
      %v3008 = vpop.xlane.xlu0 %3007
      %v3009 = vsel %vm356, %v2903, 0.0
      %3010 = vadd.xlane.f32.xlu0 %v3009
      %v3011 = vpop.xlane.xlu0 %3010
      %v3012 = vsel %vm356, %v2904, 0.0
      %3013 = vadd.xlane.f32.xlu0 %v3012
      %v3014 = vpop.xlane.xlu0 %3013
      %v3015 = vsel %vm356, %v2905, 0.0
      %3016 = vadd.xlane.f32.xlu0 %v3015
      %v3017 = vpop.xlane.xlu0 %3016
      %v3018 = vsel %vm356, %v2906, 0.0
      %3019 = vadd.xlane.f32.xlu0 %v3018
      %v3020 = vpop.xlane.xlu0 %3019
      %v3021 = vsel %vm356, %v2907, 0.0
      %3022 = vadd.xlane.f32.xlu0 %v3021
      %v3023 = vpop.xlane.xlu0 %3022
      %v3024 = vsel %vm356, %v2908, 0.0
      %3025 = vadd.xlane.f32.xlu0 %v3024
      %v3026 = vpop.xlane.xlu0 %3025
      %v3027 = vsel %vm356, %v2909, 0.0
      %3028 = vadd.xlane.f32.xlu0 %v3027
      %v3029 = vpop.xlane.xlu0 %3028
      %v3030 = vsel %vm356, %v2910, 0.0
      %3031 = vadd.xlane.f32.xlu0 %v3030
      %v3032 = vpop.xlane.xlu0 %3031
      %v3033 = vsel %vm356, %v2911, 0.0
      %3034 = vadd.xlane.f32.xlu0 %v3033
      %v3035 = vpop.xlane.xlu0 %3034
      %v3036 = vsel %vm356, %v2912, 0.0
      %3037 = vadd.xlane.f32.xlu0 %v3036
      %v3038 = vpop.xlane.xlu0 %3037
      %v3039 = vsel %vm356, %v2913, 0.0
      %3040 = vadd.xlane.f32.xlu0 %v3039
      %v3041 = vpop.xlane.xlu0 %3040
      %v3042 = vsel %vm356, %v2914, 0.0
      %3043 = vadd.xlane.f32.xlu0 %v3042
      %v3044 = vpop.xlane.xlu0 %3043
      %v3045 = vsel %vm356, %v2915, 0.0
      %3046 = vadd.xlane.f32.xlu0 %v3045
      %v3047 = vpop.xlane.xlu0 %3046
      %v3048 = vsel %vm356, %v2916, 0.0
      %3049 = vadd.xlane.f32.xlu0 %v3048
      %v3050 = vpop.xlane.xlu0 %3049
      %v3051 = vsel %vm356, %v2917, 0.0
      %3052 = vadd.xlane.f32.xlu0 %v3051
      %v3053 = vpop.xlane.xlu0 %3052
      %v3054 = vsel %vm356, %v2918, 0.0
      %3055 = vadd.xlane.f32.xlu0 %v3054
      %v3056 = vpop.xlane.xlu0 %3055
      %v3057 = vsel %vm356, %v2919, 0.0
      %3058 = vadd.xlane.f32.xlu0 %v3057
      %v3059 = vpop.xlane.xlu0 %3058
      %v3060 = vsel %vm356, %v2920, 0.0
      %3061 = vadd.xlane.f32.xlu0 %v3060
      %v3062 = vpop.xlane.xlu0 %3061
      %v3063 = vsel %vm356, %v2921, 0.0
      %3064 = vadd.xlane.f32.xlu0 %v3063
      %v3065 = vpop.xlane.xlu0 %3064
      %v3066 = vsel %vm356, %v2922, 0.0
      %3067 = vadd.xlane.f32.xlu0 %v3066
      %v3068 = vpop.xlane.xlu0 %3067
      %v3069 = vsel %vm356, %v2923, 0.0
      %3070 = vadd.xlane.f32.xlu0 %v3069
      %v3071 = vpop.xlane.xlu0 %3070
      %v3072 = vsel %vm356, %v2924, 0.0
      %3073 = vadd.xlane.f32.xlu0 %v3072
      %v3074 = vpop.xlane.xlu0 %3073
      %v3075 = vsel %vm356, %v2925, 0.0
      %3076 = vadd.xlane.f32.xlu0 %v3075
      %v3077 = vpop.xlane.xlu0 %3076
      %v3078 = vsel %vm356, %v2926, 0.0
      %3079 = vadd.xlane.f32.xlu0 %v3078
      %v3080 = vpop.xlane.xlu0 %3079
      %v3081 = vsel %vm356, %v2927, 0.0
      %3082 = vadd.xlane.f32.xlu0 %v3081
      %v3083 = vpop.xlane.xlu0 %3082
      %v3084 = vsel %vm356, %v2928, 0.0
      %3085 = vadd.xlane.f32.xlu0 %v3084
      %v3086 = vpop.xlane.xlu0 %3085
      %v3087 = vsel %vm356, %v2929, 0.0
      %3088 = vadd.xlane.f32.xlu0 %v3087
      %v3089 = vpop.xlane.xlu0 %3088
      %v3090 = vsel %vm356, %v2930, 0.0
      %3091 = vadd.xlane.f32.xlu0 %v3090
      %v3092 = vpop.xlane.xlu0 %3091
      %v3093 = vsel %vm356, %v2931, 0.0
      %3094 = vadd.xlane.f32.xlu0 %v3093
      %v3095 = vpop.xlane.xlu0 %3094
      %v3096 = vsel %vm356, %v2932, 0.0
      %3097 = vadd.xlane.f32.xlu0 %v3096
      %v3098 = vpop.xlane.xlu0 %3097
      %v3099 = vsel %vm356, %v2933, 0.0
      %3100 = vadd.xlane.f32.xlu0 %v3099
      %v3101 = vpop.xlane.xlu0 %3100
      %v3102 = vsel %vm356, %v2934, 0.0
      %3103 = vadd.xlane.f32.xlu0 %v3102
      %v3104 = vpop.xlane.xlu0 %3103
      %v3105 = vsel %vm356, %v2935, 0.0
      %3106 = vadd.xlane.f32.xlu0 %v3105
      %v3107 = vpop.xlane.xlu0 %3106
      %v3108 = vsel %vm356, %v2936, 0.0
      %3109 = vadd.xlane.f32.xlu0 %v3108
      %v3110 = vpop.xlane.xlu0 %3109
      %v3111 = vsel %vm356, %v2937, 0.0
      %3112 = vadd.xlane.f32.xlu0 %v3111
      %v3113 = vpop.xlane.xlu0 %3112
      %v3114 = vsel %vm356, %v2938, 0.0
      %3115 = vadd.xlane.f32.xlu0 %v3114
      %v3116 = vpop.xlane.xlu0 %3115
      %v3117 = vsel %vm356, %v2939, 0.0
      %3118 = vadd.xlane.f32.xlu0 %v3117
      %v3119 = vpop.xlane.xlu0 %3118
      %v3120 = vsel %vm356, %v2940, 0.0
      %3121 = vadd.xlane.f32.xlu0 %v3120
      %v3122 = vpop.xlane.xlu0 %3121
      %v3123 = vsel %vm356, %v2941, 0.0
      %3124 = vadd.xlane.f32.xlu0 %v3123
      %v3125 = vpop.xlane.xlu0 %3124
      %v3126 = vsel %vm356, %v2942, 0.0
      %3127 = vadd.xlane.f32.xlu0 %v3126
      %v3128 = vpop.xlane.xlu0 %3127
      %v3129 = vsel %vm356, %v2943, 0.0
      %3130 = vadd.xlane.f32.xlu0 %v3129
      %v3131 = vpop.xlane.xlu0 %3130
      %v3132 = vsel %vm356, %v2944, 0.0
      %3133 = vadd.xlane.f32.xlu0 %v3132
      %v3134 = vpop.xlane.xlu0 %3133
      %v3135 = vsel %vm356, %v2945, 0.0
      %3136 = vadd.xlane.f32.xlu0 %v3135
      %v3137 = vpop.xlane.xlu0 %3136
      %v3138 = vlaneseq
      %v3139 = vshrl.u32 %v3138, 7
      %v3140 = vsub.s32 0, %v3139
      %v3141 = vrot.slane %v2877, %v3140
      %v3142 = vadd.f32 %v2948, %v3141
      %v3143 = vadd.f32 %v2951, %v3141
      %v3144 = vadd.f32 %v2954, %v3141
      %v3145 = vadd.f32 %v2957, %v3141
      %v3146 = vadd.f32 %v2960, %v3141
      %v3147 = vadd.f32 %v2963, %v3141
      %v3148 = vadd.f32 %v2966, %v3141
      %v3149 = vadd.f32 %v2969, %v3141
      %v3150 = vadd.f32 %v2972, %v3141
      %v3151 = vadd.f32 %v2975, %v3141
      %v3152 = vadd.f32 %v2978, %v3141
      %v3153 = vadd.f32 %v2981, %v3141
      %v3154 = vadd.f32 %v2984, %v3141
      %v3155 = vadd.f32 %v2987, %v3141
      %v3156 = vadd.f32 %v2990, %v3141
      %v3157 = vadd.f32 %v2993, %v3141
      %v3158 = vadd.f32 %v2996, %v3141
      %v3159 = vadd.f32 %v2999, %v3141
      %v3160 = vadd.f32 %v3002, %v3141
      %v3161 = vadd.f32 %v3005, %v3141
      %v3162 = vadd.f32 %v3008, %v3141
      %v3163 = vadd.f32 %v3011, %v3141
      %v3164 = vadd.f32 %v3014, %v3141
      %v3165 = vadd.f32 %v3017, %v3141
      %v3166 = vadd.f32 %v3020, %v3141
      %v3167 = vadd.f32 %v3023, %v3141
      %v3168 = vadd.f32 %v3026, %v3141
      %v3169 = vadd.f32 %v3029, %v3141
      %v3170 = vadd.f32 %v3032, %v3141
      %v3171 = vadd.f32 %v3035, %v3141
      %v3172 = vadd.f32 %v3038, %v3141
      %v3173 = vadd.f32 %v3041, %v3141
      %v3174 = vadd.f32 %v3044, %v3141
      %v3175 = vadd.f32 %v3047, %v3141
      %v3176 = vadd.f32 %v3050, %v3141
      %v3177 = vadd.f32 %v3053, %v3141
      %v3178 = vadd.f32 %v3056, %v3141
      %v3179 = vadd.f32 %v3059, %v3141
      %v3180 = vadd.f32 %v3062, %v3141
      %v3181 = vadd.f32 %v3065, %v3141
      %v3182 = vadd.f32 %v3068, %v3141
      %v3183 = vadd.f32 %v3071, %v3141
      %v3184 = vadd.f32 %v3074, %v3141
      %v3185 = vadd.f32 %v3077, %v3141
      %v3186 = vadd.f32 %v3080, %v3141
      %v3187 = vadd.f32 %v3083, %v3141
      %v3188 = vadd.f32 %v3086, %v3141
      %v3189 = vadd.f32 %v3089, %v3141
      %v3190 = vadd.f32 %v3092, %v3141
      %v3191 = vadd.f32 %v3095, %v3141
      %v3192 = vadd.f32 %v3098, %v3141
      %v3193 = vadd.f32 %v3101, %v3141
      %v3194 = vadd.f32 %v3104, %v3141
      %v3195 = vadd.f32 %v3107, %v3141
      %v3196 = vadd.f32 %v3110, %v3141
      %v3197 = vadd.f32 %v3113, %v3141
      %v3198 = vadd.f32 %v3116, %v3141
      %v3199 = vadd.f32 %v3119, %v3141
      %v3200 = vadd.f32 %v3122, %v3141
      %v3201 = vadd.f32 %v3125, %v3141
      %v3202 = vadd.f32 %v3128, %v3141
      %v3203 = vadd.f32 %v3131, %v3141
      %v3204 = vadd.f32 %v3134, %v3141
      %v3205 = vadd.f32 %v3137, %v3141
      %vm3206 = vcmp.gt.f32.partialorder %v3142, 0.0
      %vm3207 = vcmp.gt.f32.partialorder %v3143, 0.0
      %vm3208 = vcmp.gt.f32.partialorder %v3144, 0.0
      %vm3209 = vcmp.gt.f32.partialorder %v3145, 0.0
      %vm3210 = vcmp.gt.f32.partialorder %v3146, 0.0
      %vm3211 = vcmp.gt.f32.partialorder %v3147, 0.0
      %vm3212 = vcmp.gt.f32.partialorder %v3148, 0.0
      %vm3213 = vcmp.gt.f32.partialorder %v3149, 0.0
      %vm3214 = vcmp.gt.f32.partialorder %v3150, 0.0
      %vm3215 = vcmp.gt.f32.partialorder %v3151, 0.0
      %vm3216 = vcmp.gt.f32.partialorder %v3152, 0.0
      %vm3217 = vcmp.gt.f32.partialorder %v3153, 0.0
      %vm3218 = vcmp.gt.f32.partialorder %v3154, 0.0
      %vm3219 = vcmp.gt.f32.partialorder %v3155, 0.0
      %vm3220 = vcmp.gt.f32.partialorder %v3156, 0.0
      %vm3221 = vcmp.gt.f32.partialorder %v3157, 0.0
      %vm3222 = vcmp.gt.f32.partialorder %v3158, 0.0
      %vm3223 = vcmp.gt.f32.partialorder %v3159, 0.0
      %vm3224 = vcmp.gt.f32.partialorder %v3160, 0.0
      %vm3225 = vcmp.gt.f32.partialorder %v3161, 0.0
      %vm3226 = vcmp.gt.f32.partialorder %v3162, 0.0
      %vm3227 = vcmp.gt.f32.partialorder %v3163, 0.0
      %vm3228 = vcmp.gt.f32.partialorder %v3164, 0.0
      %vm3229 = vcmp.gt.f32.partialorder %v3165, 0.0
      %vm3230 = vcmp.gt.f32.partialorder %v3166, 0.0
      %vm3231 = vcmp.gt.f32.partialorder %v3167, 0.0
      %vm3232 = vcmp.gt.f32.partialorder %v3168, 0.0
      %vm3233 = vcmp.gt.f32.partialorder %v3169, 0.0
      %vm3234 = vcmp.gt.f32.partialorder %v3170, 0.0
      %vm3235 = vcmp.gt.f32.partialorder %v3171, 0.0
      %vm3236 = vcmp.gt.f32.partialorder %v3172, 0.0
      %vm3237 = vcmp.gt.f32.partialorder %v3173, 0.0
      %vm3238 = vcmp.gt.f32.partialorder %v3174, 0.0
      %vm3239 = vcmp.gt.f32.partialorder %v3175, 0.0
      %vm3240 = vcmp.gt.f32.partialorder %v3176, 0.0
      %vm3241 = vcmp.gt.f32.partialorder %v3177, 0.0
      %vm3242 = vcmp.gt.f32.partialorder %v3178, 0.0
      %vm3243 = vcmp.gt.f32.partialorder %v3179, 0.0
      %vm3244 = vcmp.gt.f32.partialorder %v3180, 0.0
      %vm3245 = vcmp.gt.f32.partialorder %v3181, 0.0
      %vm3246 = vcmp.gt.f32.partialorder %v3182, 0.0
      %vm3247 = vcmp.gt.f32.partialorder %v3183, 0.0
      %vm3248 = vcmp.gt.f32.partialorder %v3184, 0.0
      %vm3249 = vcmp.gt.f32.partialorder %v3185, 0.0
      %vm3250 = vcmp.gt.f32.partialorder %v3186, 0.0
      %vm3251 = vcmp.gt.f32.partialorder %v3187, 0.0
      %vm3252 = vcmp.gt.f32.partialorder %v3188, 0.0
      %vm3253 = vcmp.gt.f32.partialorder %v3189, 0.0
      %vm3254 = vcmp.gt.f32.partialorder %v3190, 0.0
      %vm3255 = vcmp.gt.f32.partialorder %v3191, 0.0
      %vm3256 = vcmp.gt.f32.partialorder %v3192, 0.0
      %vm3257 = vcmp.gt.f32.partialorder %v3193, 0.0
      %vm3258 = vcmp.gt.f32.partialorder %v3194, 0.0
      %vm3259 = vcmp.gt.f32.partialorder %v3195, 0.0
      %vm3260 = vcmp.gt.f32.partialorder %v3196, 0.0
      %vm3261 = vcmp.gt.f32.partialorder %v3197, 0.0
      %vm3262 = vcmp.gt.f32.partialorder %v3198, 0.0
      %vm3263 = vcmp.gt.f32.partialorder %v3199, 0.0
      %vm3264 = vcmp.gt.f32.partialorder %v3200, 0.0
      %vm3265 = vcmp.gt.f32.partialorder %v3201, 0.0
      %vm3266 = vcmp.gt.f32.partialorder %v3202, 0.0
      %vm3267 = vcmp.gt.f32.partialorder %v3203, 0.0
      %vm3268 = vcmp.gt.f32.partialorder %v3204, 0.0
      %vm3269 = vcmp.gt.f32.partialorder %v3205, 0.0
      %v3270 = vmin.f32 %v3142, 0.0
      %v3271 = vmin.f32 %v3143, 0.0
      %v3272 = vmin.f32 %v3144, 0.0
      %v3273 = vmin.f32 %v3145, 0.0
      %v3274 = vmin.f32 %v3146, 0.0
      %v3275 = vmin.f32 %v3147, 0.0
      %v3276 = vmin.f32 %v3148, 0.0
      %v3277 = vmin.f32 %v3149, 0.0
      %v3278 = vmin.f32 %v3150, 0.0
      %v3279 = vmin.f32 %v3151, 0.0
      %v3280 = vmin.f32 %v3152, 0.0
      %v3281 = vmin.f32 %v3153, 0.0
      %v3282 = vmin.f32 %v3154, 0.0
      %v3283 = vmin.f32 %v3155, 0.0
      %v3284 = vmin.f32 %v3156, 0.0
      %v3285 = vmin.f32 %v3157, 0.0
      %v3286 = vmin.f32 %v3158, 0.0
      %v3287 = vmin.f32 %v3159, 0.0
      %v3288 = vmin.f32 %v3160, 0.0
      %v3289 = vmin.f32 %v3161, 0.0
      %v3290 = vmin.f32 %v3162, 0.0
      %v3291 = vmin.f32 %v3163, 0.0
      %v3292 = vmin.f32 %v3164, 0.0
      %v3293 = vmin.f32 %v3165, 0.0
      %v3294 = vmin.f32 %v3166, 0.0
      %v3295 = vmin.f32 %v3167, 0.0
      %v3296 = vmin.f32 %v3168, 0.0
      %v3297 = vmin.f32 %v3169, 0.0
      %v3298 = vmin.f32 %v3170, 0.0
      %v3299 = vmin.f32 %v3171, 0.0
      %v3300 = vmin.f32 %v3172, 0.0
      %v3301 = vmin.f32 %v3173, 0.0
      %v3302 = vmin.f32 %v3174, 0.0
      %v3303 = vmin.f32 %v3175, 0.0
      %v3304 = vmin.f32 %v3176, 0.0
      %v3305 = vmin.f32 %v3177, 0.0
      %v3306 = vmin.f32 %v3178, 0.0
      %v3307 = vmin.f32 %v3179, 0.0
      %v3308 = vmin.f32 %v3180, 0.0
      %v3309 = vmin.f32 %v3181, 0.0
      %v3310 = vmin.f32 %v3182, 0.0
      %v3311 = vmin.f32 %v3183, 0.0
      %v3312 = vmin.f32 %v3184, 0.0
      %v3313 = vmin.f32 %v3185, 0.0
      %v3314 = vmin.f32 %v3186, 0.0
      %v3315 = vmin.f32 %v3187, 0.0
      %v3316 = vmin.f32 %v3188, 0.0
      %v3317 = vmin.f32 %v3189, 0.0
      %v3318 = vmin.f32 %v3190, 0.0
      %v3319 = vmin.f32 %v3191, 0.0
      %v3320 = vmin.f32 %v3192, 0.0
      %v3321 = vmin.f32 %v3193, 0.0
      %v3322 = vmin.f32 %v3194, 0.0
      %v3323 = vmin.f32 %v3195, 0.0
      %v3324 = vmin.f32 %v3196, 0.0
      %v3325 = vmin.f32 %v3197, 0.0
      %v3326 = vmin.f32 %v3198, 0.0
      %v3327 = vmin.f32 %v3199, 0.0
      %v3328 = vmin.f32 %v3200, 0.0
      %v3329 = vmin.f32 %v3201, 0.0
      %v3330 = vmin.f32 %v3202, 0.0
      %v3331 = vmin.f32 %v3203, 0.0
      %v3332 = vmin.f32 %v3204, 0.0
      %v3333 = vmin.f32 %v3205, 0.0
      %v3334 = vmul.f32 %v3270, 1.442695
      %v3335 = vpow.pop %v3334
      %v3336 = vmul.f32 %v3271, 1.442695
      %v3337 = vpow.pop %v3336
      %v3338 = vmul.f32 %v3272, 1.442695
      %v3339 = vpow.pop %v3338
      %v3340 = vmul.f32 %v3273, 1.442695
      %v3341 = vpow.pop %v3340
      %v3342 = vmul.f32 %v3274, 1.442695
      %v3343 = vpow.pop %v3342
      %v3344 = vmul.f32 %v3275, 1.442695
      %v3345 = vpow.pop %v3344
      %v3346 = vmul.f32 %v3276, 1.442695
      %v3347 = vpow.pop %v3346
      %v3348 = vmul.f32 %v3277, 1.442695
      %v3349 = vpow.pop %v3348
      %v3350 = vmul.f32 %v3278, 1.442695
      %v3351 = vpow.pop %v3350
      %v3352 = vmul.f32 %v3279, 1.442695
      %v3353 = vpow.pop %v3352
      %v3354 = vmul.f32 %v3280, 1.442695
      %v3355 = vpow.pop %v3354
      %v3356 = vmul.f32 %v3281, 1.442695
      %v3357 = vpow.pop %v3356
      %v3358 = vmul.f32 %v3282, 1.442695
      %v3359 = vpow.pop %v3358
      %v3360 = vmul.f32 %v3283, 1.442695
      %v3361 = vpow.pop %v3360
      %v3362 = vmul.f32 %v3284, 1.442695
      %v3363 = vpow.pop %v3362
      %v3364 = vmul.f32 %v3285, 1.442695
      %v3365 = vpow.pop %v3364
      %v3366 = vmul.f32 %v3286, 1.442695
      %v3367 = vpow.pop %v3366
      %v3368 = vmul.f32 %v3287, 1.442695
      %v3369 = vpow.pop %v3368
      %v3370 = vmul.f32 %v3288, 1.442695
      %v3371 = vpow.pop %v3370
      %v3372 = vmul.f32 %v3289, 1.442695
      %v3373 = vpow.pop %v3372
      %v3374 = vmul.f32 %v3290, 1.442695
      %v3375 = vpow.pop %v3374
      %v3376 = vmul.f32 %v3291, 1.442695
      %v3377 = vpow.pop %v3376
      %v3378 = vmul.f32 %v3292, 1.442695
      %v3379 = vpow.pop %v3378
      %v3380 = vmul.f32 %v3293, 1.442695
      %v3381 = vpow.pop %v3380
      %v3382 = vmul.f32 %v3294, 1.442695
      %v3383 = vpow.pop %v3382
      %v3384 = vmul.f32 %v3295, 1.442695
      %v3385 = vpow.pop %v3384
      %v3386 = vmul.f32 %v3296, 1.442695
      %v3387 = vpow.pop %v3386
      %v3388 = vmul.f32 %v3297, 1.442695
      %v3389 = vpow.pop %v3388
      %v3390 = vmul.f32 %v3298, 1.442695
      %v3391 = vpow.pop %v3390
      %v3392 = vmul.f32 %v3299, 1.442695
      %v3393 = vpow.pop %v3392
      %v3394 = vmul.f32 %v3300, 1.442695
      %v3395 = vpow.pop %v3394
      %v3396 = vmul.f32 %v3301, 1.442695
      %v3397 = vpow.pop %v3396
      %v3398 = vmul.f32 %v3302, 1.442695
      %v3399 = vpow.pop %v3398
      %v3400 = vmul.f32 %v3303, 1.442695
      %v3401 = vpow.pop %v3400
      %v3402 = vmul.f32 %v3304, 1.442695
      %v3403 = vpow.pop %v3402
      %v3404 = vmul.f32 %v3305, 1.442695
      %v3405 = vpow.pop %v3404
      %v3406 = vmul.f32 %v3306, 1.442695
      %v3407 = vpow.pop %v3406
      %v3408 = vmul.f32 %v3307, 1.442695
      %v3409 = vpow.pop %v3408
      %v3410 = vmul.f32 %v3308, 1.442695
      %v3411 = vpow.pop %v3410
      %v3412 = vmul.f32 %v3309, 1.442695
      %v3413 = vpow.pop %v3412
      %v3414 = vmul.f32 %v3310, 1.442695
      %v3415 = vpow.pop %v3414
      %v3416 = vmul.f32 %v3311, 1.442695
      %v3417 = vpow.pop %v3416
      %v3418 = vmul.f32 %v3312, 1.442695
      %v3419 = vpow.pop %v3418
      %v3420 = vmul.f32 %v3313, 1.442695
      %v3421 = vpow.pop %v3420
      %v3422 = vmul.f32 %v3314, 1.442695
      %v3423 = vpow.pop %v3422
      %v3424 = vmul.f32 %v3315, 1.442695
      %v3425 = vpow.pop %v3424
      %v3426 = vmul.f32 %v3316, 1.442695
      %v3427 = vpow.pop %v3426
      %v3428 = vmul.f32 %v3317, 1.442695
      %v3429 = vpow.pop %v3428
      %v3430 = vmul.f32 %v3318, 1.442695
      %v3431 = vpow.pop %v3430
      %v3432 = vmul.f32 %v3319, 1.442695
      %v3433 = vpow.pop %v3432
      %v3434 = vmul.f32 %v3320, 1.442695
      %v3435 = vpow.pop %v3434
      %v3436 = vmul.f32 %v3321, 1.442695
      %v3437 = vpow.pop %v3436
      %v3438 = vmul.f32 %v3322, 1.442695
      %v3439 = vpow.pop %v3438
      %v3440 = vmul.f32 %v3323, 1.442695
      %v3441 = vpow.pop %v3440
      %v3442 = vmul.f32 %v3324, 1.442695
      %v3443 = vpow.pop %v3442
      %v3444 = vmul.f32 %v3325, 1.442695
      %v3445 = vpow.pop %v3444
      %v3446 = vmul.f32 %v3326, 1.442695
      %v3447 = vpow.pop %v3446
      %v3448 = vmul.f32 %v3327, 1.442695
      %v3449 = vpow.pop %v3448
      %v3450 = vmul.f32 %v3328, 1.442695
      %v3451 = vpow.pop %v3450
      %v3452 = vmul.f32 %v3329, 1.442695
      %v3453 = vpow.pop %v3452
      %v3454 = vmul.f32 %v3330, 1.442695
      %v3455 = vpow.pop %v3454
      %v3456 = vmul.f32 %v3331, 1.442695
      %v3457 = vpow.pop %v3456
      %v3458 = vmul.f32 %v3332, 1.442695
      %v3459 = vpow.pop %v3458
      %v3460 = vmul.f32 %v3333, 1.442695
      %v3461 = vpow.pop %v3460
      %v3462 = vsub.f32 %v3335, 1.0
      %v3463 = vsub.f32 %v3337, 1.0
      %v3464 = vsub.f32 %v3339, 1.0
      %v3465 = vsub.f32 %v3341, 1.0
      %v3466 = vsub.f32 %v3343, 1.0
      %v3467 = vsub.f32 %v3345, 1.0
      %v3468 = vsub.f32 %v3347, 1.0
      %v3469 = vsub.f32 %v3349, 1.0
      %v3470 = vsub.f32 %v3351, 1.0
      %v3471 = vsub.f32 %v3353, 1.0
      %v3472 = vsub.f32 %v3355, 1.0
      %v3473 = vsub.f32 %v3357, 1.0
      %v3474 = vsub.f32 %v3359, 1.0
      %v3475 = vsub.f32 %v3361, 1.0
      %v3476 = vsub.f32 %v3363, 1.0
      %v3477 = vsub.f32 %v3365, 1.0
      %v3478 = vsub.f32 %v3367, 1.0
      %v3479 = vsub.f32 %v3369, 1.0
      %v3480 = vsub.f32 %v3371, 1.0
      %v3481 = vsub.f32 %v3373, 1.0
      %v3482 = vsub.f32 %v3375, 1.0
      %v3483 = vsub.f32 %v3377, 1.0
      %v3484 = vsub.f32 %v3379, 1.0
      %v3485 = vsub.f32 %v3381, 1.0
      %v3486 = vsub.f32 %v3383, 1.0
      %v3487 = vsub.f32 %v3385, 1.0
      %v3488 = vsub.f32 %v3387, 1.0
      %v3489 = vsub.f32 %v3389, 1.0
      %v3490 = vsub.f32 %v3391, 1.0
      %v3491 = vsub.f32 %v3393, 1.0
      %v3492 = vsub.f32 %v3395, 1.0
      %v3493 = vsub.f32 %v3397, 1.0
      %v3494 = vsub.f32 %v3399, 1.0
      %v3495 = vsub.f32 %v3401, 1.0
      %v3496 = vsub.f32 %v3403, 1.0
      %v3497 = vsub.f32 %v3405, 1.0
      %v3498 = vsub.f32 %v3407, 1.0
      %v3499 = vsub.f32 %v3409, 1.0
      %v3500 = vsub.f32 %v3411, 1.0
      %v3501 = vsub.f32 %v3413, 1.0
      %v3502 = vsub.f32 %v3415, 1.0
      %v3503 = vsub.f32 %v3417, 1.0
      %v3504 = vsub.f32 %v3419, 1.0
      %v3505 = vsub.f32 %v3421, 1.0
      %v3506 = vsub.f32 %v3423, 1.0
      %v3507 = vsub.f32 %v3425, 1.0
      %v3508 = vsub.f32 %v3427, 1.0
      %v3509 = vsub.f32 %v3429, 1.0
      %v3510 = vsub.f32 %v3431, 1.0
      %v3511 = vsub.f32 %v3433, 1.0
      %v3512 = vsub.f32 %v3435, 1.0
      %v3513 = vsub.f32 %v3437, 1.0
      %v3514 = vsub.f32 %v3439, 1.0
      %v3515 = vsub.f32 %v3441, 1.0
      %v3516 = vsub.f32 %v3443, 1.0
      %v3517 = vsub.f32 %v3445, 1.0
      %v3518 = vsub.f32 %v3447, 1.0
      %v3519 = vsub.f32 %v3449, 1.0
      %v3520 = vsub.f32 %v3451, 1.0
      %v3521 = vsub.f32 %v3453, 1.0
      %v3522 = vsub.f32 %v3455, 1.0
      %v3523 = vsub.f32 %v3457, 1.0
      %v3524 = vsub.f32 %v3459, 1.0
      %v3525 = vsub.f32 %v3461, 1.0
      %v3526 = vsel %vm3206, %v3142, %v3462
      %v3527 = vsel %vm3207, %v3143, %v3463
      %v3528 = vsel %vm3208, %v3144, %v3464
      %v3529 = vsel %vm3209, %v3145, %v3465
      %v3530 = vsel %vm3210, %v3146, %v3466
      %v3531 = vsel %vm3211, %v3147, %v3467
      %v3532 = vsel %vm3212, %v3148, %v3468
      %v3533 = vsel %vm3213, %v3149, %v3469
      %v3534 = vsel %vm3214, %v3150, %v3470
      %v3535 = vsel %vm3215, %v3151, %v3471
      %v3536 = vsel %vm3216, %v3152, %v3472
      %v3537 = vsel %vm3217, %v3153, %v3473
      %v3538 = vsel %vm3218, %v3154, %v3474
      %v3539 = vsel %vm3219, %v3155, %v3475
      %v3540 = vsel %vm3220, %v3156, %v3476
      %v3541 = vsel %vm3221, %v3157, %v3477
      %v3542 = vsel %vm3222, %v3158, %v3478
      %v3543 = vsel %vm3223, %v3159, %v3479
      %v3544 = vsel %vm3224, %v3160, %v3480
      %v3545 = vsel %vm3225, %v3161, %v3481
      %v3546 = vsel %vm3226, %v3162, %v3482
      %v3547 = vsel %vm3227, %v3163, %v3483
      %v3548 = vsel %vm3228, %v3164, %v3484
      %v3549 = vsel %vm3229, %v3165, %v3485
      %v3550 = vsel %vm3230, %v3166, %v3486
      %v3551 = vsel %vm3231, %v3167, %v3487
      %v3552 = vsel %vm3232, %v3168, %v3488
      %v3553 = vsel %vm3233, %v3169, %v3489
      %v3554 = vsel %vm3234, %v3170, %v3490
      %v3555 = vsel %vm3235, %v3171, %v3491
      %v3556 = vsel %vm3236, %v3172, %v3492
      %v3557 = vsel %vm3237, %v3173, %v3493
      %v3558 = vsel %vm3238, %v3174, %v3494
      %v3559 = vsel %vm3239, %v3175, %v3495
      %v3560 = vsel %vm3240, %v3176, %v3496
      %v3561 = vsel %vm3241, %v3177, %v3497
      %v3562 = vsel %vm3242, %v3178, %v3498
      %v3563 = vsel %vm3243, %v3179, %v3499
      %v3564 = vsel %vm3244, %v3180, %v3500
      %v3565 = vsel %vm3245, %v3181, %v3501
      %v3566 = vsel %vm3246, %v3182, %v3502
      %v3567 = vsel %vm3247, %v3183, %v3503
      %v3568 = vsel %vm3248, %v3184, %v3504
      %v3569 = vsel %vm3249, %v3185, %v3505
      %v3570 = vsel %vm3250, %v3186, %v3506
      %v3571 = vsel %vm3251, %v3187, %v3507
      %v3572 = vsel %vm3252, %v3188, %v3508
      %v3573 = vsel %vm3253, %v3189, %v3509
      %v3574 = vsel %vm3254, %v3190, %v3510
      %v3575 = vsel %vm3255, %v3191, %v3511
      %v3576 = vsel %vm3256, %v3192, %v3512
      %v3577 = vsel %vm3257, %v3193, %v3513
      %v3578 = vsel %vm3258, %v3194, %v3514
      %v3579 = vsel %vm3259, %v3195, %v3515
      %v3580 = vsel %vm3260, %v3196, %v3516
      %v3581 = vsel %vm3261, %v3197, %v3517
      %v3582 = vsel %vm3262, %v3198, %v3518
      %v3583 = vsel %vm3263, %v3199, %v3519
      %v3584 = vsel %vm3264, %v3200, %v3520
      %v3585 = vsel %vm3265, %v3201, %v3521
      %v3586 = vsel %vm3266, %v3202, %v3522
      %v3587 = vsel %vm3267, %v3203, %v3523
      %v3588 = vsel %vm3268, %v3204, %v3524
      %v3589 = vsel %vm3269, %v3205, %v3525
      %v3590 = vadd.f32 %v3526, 1.0
      %v3591 = vadd.f32 %v3527, 1.0
      %v3592 = vadd.f32 %v3528, 1.0
      %v3593 = vadd.f32 %v3529, 1.0
      %v3594 = vadd.f32 %v3530, 1.0
      %v3595 = vadd.f32 %v3531, 1.0
      %v3596 = vadd.f32 %v3532, 1.0
      %v3597 = vadd.f32 %v3533, 1.0
      %v3598 = vadd.f32 %v3534, 1.0
      %v3599 = vadd.f32 %v3535, 1.0
      %v3600 = vadd.f32 %v3536, 1.0
      %v3601 = vadd.f32 %v3537, 1.0
      %v3602 = vadd.f32 %v3538, 1.0
      %v3603 = vadd.f32 %v3539, 1.0
      %v3604 = vadd.f32 %v3540, 1.0
      %v3605 = vadd.f32 %v3541, 1.0
      %v3606 = vadd.f32 %v3542, 1.0
      %v3607 = vadd.f32 %v3543, 1.0
      %v3608 = vadd.f32 %v3544, 1.0
      %v3609 = vadd.f32 %v3545, 1.0
      %v3610 = vadd.f32 %v3546, 1.0
      %v3611 = vadd.f32 %v3547, 1.0
      %v3612 = vadd.f32 %v3548, 1.0
      %v3613 = vadd.f32 %v3549, 1.0
      %v3614 = vadd.f32 %v3550, 1.0
      %v3615 = vadd.f32 %v3551, 1.0
      %v3616 = vadd.f32 %v3552, 1.0
      %v3617 = vadd.f32 %v3553, 1.0
      %v3618 = vadd.f32 %v3554, 1.0
      %v3619 = vadd.f32 %v3555, 1.0
      %v3620 = vadd.f32 %v3556, 1.0
      %v3621 = vadd.f32 %v3557, 1.0
      %v3622 = vadd.f32 %v3558, 1.0
      %v3623 = vadd.f32 %v3559, 1.0
      %v3624 = vadd.f32 %v3560, 1.0
      %v3625 = vadd.f32 %v3561, 1.0
      %v3626 = vadd.f32 %v3562, 1.0
      %v3627 = vadd.f32 %v3563, 1.0
      %v3628 = vadd.f32 %v3564, 1.0
      %v3629 = vadd.f32 %v3565, 1.0
      %v3630 = vadd.f32 %v3566, 1.0
      %v3631 = vadd.f32 %v3567, 1.0
      %v3632 = vadd.f32 %v3568, 1.0
      %v3633 = vadd.f32 %v3569, 1.0
      %v3634 = vadd.f32 %v3570, 1.0
      %v3635 = vadd.f32 %v3571, 1.0
      %v3636 = vadd.f32 %v3572, 1.0
      %v3637 = vadd.f32 %v3573, 1.0
      %v3638 = vadd.f32 %v3574, 1.0
      %v3639 = vadd.f32 %v3575, 1.0
      %v3640 = vadd.f32 %v3576, 1.0
      %v3641 = vadd.f32 %v3577, 1.0
      %v3642 = vadd.f32 %v3578, 1.0
      %v3643 = vadd.f32 %v3579, 1.0
      %v3644 = vadd.f32 %v3580, 1.0
      %v3645 = vadd.f32 %v3581, 1.0
      %v3646 = vadd.f32 %v3582, 1.0
      %v3647 = vadd.f32 %v3583, 1.0
      %v3648 = vadd.f32 %v3584, 1.0
      %v3649 = vadd.f32 %v3585, 1.0
      %v3650 = vadd.f32 %v3586, 1.0
      %v3651 = vadd.f32 %v3587, 1.0
      %v3652 = vadd.f32 %v3588, 1.0
      %v3653 = vadd.f32 %v3589, 1.0
      %v3654 = vld [vmem:[%s5] sm:$0xff]
      %v3655 = vld [vmem:[%s5 + $0x8] sm:$0xff]
      %v3656 = vld [vmem:[%s5 + $0x10] sm:$0xff]
      %v3657 = vld [vmem:[%s5 + $0x18] sm:$0xff]
      %3658 = vmatprep.subr.mxu0 0.0
      %3659 = vmatpush1.msra.mxu0 %v3590
      %3660 = vmatprep.subr.mxu0 0.0
      %3661 = vmatpush1.msra.mxu0 %v3591
      %3662 = vmatprep.subr.mxu0 0.0
      %3663 = vmatpush1.msra.mxu0 %v3592
      %3664 = vmatprep.subr.mxu0 0.0
      %3665 = vmatpush1.msra.mxu0 %v3593
      %3666 = vmatprep.subr.mxu0 0.0
      %3667 = vmatpush1.msra.mxu0 %v3594
      %3668 = vmatprep.subr.mxu0 0.0
      %3669 = vmatpush1.msra.mxu0 %v3595
      %3670 = vmatprep.subr.mxu0 0.0
      %3671 = vmatpush1.msra.mxu0 %v3596
      %3672 = vmatprep.subr.mxu0 0.0
      %3673 = vmatpush1.msra.mxu0 %v3597
      %3674 = vmatprep.subr.mxu0 0.0
      %3675 = vmatpush1.msra.mxu0 %v3598
      %3676 = vmatprep.subr.mxu0 0.0
      %3677 = vmatpush1.msra.mxu0 %v3599
      %3678 = vmatprep.subr.mxu0 0.0
      %3679 = vmatpush1.msra.mxu0 %v3600
      %3680 = vmatprep.subr.mxu0 0.0
      %3681 = vmatpush1.msra.mxu0 %v3601
      %3682 = vmatprep.subr.mxu0 0.0
      %3683 = vmatpush1.msra.mxu0 %v3602
      %3684 = vmatprep.subr.mxu0 0.0
      %3685 = vmatpush1.msra.mxu0 %v3603
      %3686 = vmatprep.subr.mxu0 0.0
      %3687 = vmatpush1.msra.mxu0 %v3604
      %3688 = vmatprep.subr.mxu0 0.0
      %3689 = vmatpush1.msra.mxu0 %v3605
      %3690 = vmatprep.subr.mxu0 0.0
      %3691 = vmatpush1.msra.mxu0 %v3606
      %3692 = vmatprep.subr.mxu0 0.0
      %3693 = vmatpush1.msra.mxu0 %v3607
      %3694 = vmatprep.subr.mxu0 0.0
      %3695 = vmatpush1.msra.mxu0 %v3608
      %3696 = vmatprep.subr.mxu0 0.0
      %3697 = vmatpush1.msra.mxu0 %v3609
      %3698 = vmatprep.subr.mxu0 0.0
      %3699 = vmatpush1.msra.mxu0 %v3610
      %3700 = vmatprep.subr.mxu0 0.0
      %3701 = vmatpush1.msra.mxu0 %v3611
      %3702 = vmatprep.subr.mxu0 0.0
      %3703 = vmatpush1.msra.mxu0 %v3612
      %3704 = vmatprep.subr.mxu0 0.0
      %3705 = vmatpush1.msra.mxu0 %v3613
      %3706 = vmatprep.subr.mxu0 0.0
      %3707 = vmatpush1.msra.mxu0 %v3614
      %3708 = vmatprep.subr.mxu0 0.0
      %3709 = vmatpush1.msra.mxu0 %v3615
      %3710 = vmatprep.subr.mxu0 0.0
      %3711 = vmatpush1.msra.mxu0 %v3616
      %3712 = vmatprep.subr.mxu0 0.0
      %3713 = vmatpush1.msra.mxu0 %v3617
      %3714 = vmatprep.subr.mxu0 0.0
      %3715 = vmatpush1.msra.mxu0 %v3618
      %3716 = vmatprep.subr.mxu0 0.0
      %3717 = vmatpush1.msra.mxu0 %v3619
      %3718 = vmatprep.subr.mxu0 0.0
      %3719 = vmatpush1.msra.mxu0 %v3620
      %3720 = vmatprep.subr.mxu0 0.0
      %3721 = vmatpush1.msra.mxu0 %v3621
      %3722 = vmatprep.mubr.f32.mxu0 %v3655
      %3723 = vmatmul.mubr.f32.gmra.mrb[0].mxu0 %v3654
      %v3724 = vpop.f32.mrb[0].mxu0
      %v3725 = vadd.f32 0.0, %v3724
      %v3726 = vpop.f32.mrb[0].mxu0
      %3727 = vdwg.mxu0
      %3728 = vmatprep.subr.mxu0 0.0
      %3729 = vmatpush1.msra.mxu0 %v3622
      %3730 = vmatprep.subr.mxu0 0.0
      %3731 = vmatpush1.msra.mxu0 %v3623
      %3732 = vmatprep.subr.mxu0 0.0
      %3733 = vmatpush1.msra.mxu0 %v3624
      %3734 = vmatprep.subr.mxu0 0.0
      %3735 = vmatpush1.msra.mxu0 %v3625
      %3736 = vmatprep.subr.mxu0 0.0
      %3737 = vmatpush1.msra.mxu0 %v3626
      %3738 = vmatprep.subr.mxu0 0.0
      %3739 = vmatpush1.msra.mxu0 %v3627
      %3740 = vmatprep.subr.mxu0 0.0
      %3741 = vmatpush1.msra.mxu0 %v3628
      %3742 = vmatprep.subr.mxu0 0.0
      %3743 = vmatpush1.msra.mxu0 %v3629
      %3744 = vmatprep.subr.mxu0 0.0
      %3745 = vmatpush1.msra.mxu0 %v3630
      %3746 = vmatprep.subr.mxu0 0.0
      %3747 = vmatpush1.msra.mxu0 %v3631
      %3748 = vmatprep.subr.mxu0 0.0
      %3749 = vmatpush1.msra.mxu0 %v3632
      %3750 = vmatprep.subr.mxu0 0.0
      %3751 = vmatpush1.msra.mxu0 %v3633
      %3752 = vmatprep.subr.mxu0 0.0
      %3753 = vmatpush1.msra.mxu0 %v3634
      %3754 = vmatprep.subr.mxu0 0.0
      %3755 = vmatpush1.msra.mxu0 %v3635
      %3756 = vmatprep.subr.mxu0 0.0
      %3757 = vmatpush1.msra.mxu0 %v3636
      %3758 = vmatprep.subr.mxu0 0.0
      %3759 = vmatpush1.msra.mxu0 %v3637
      %3760 = vmatprep.subr.mxu0 0.0
      %3761 = vmatpush1.msra.mxu0 %v3638
      %3762 = vmatprep.subr.mxu0 0.0
      %3763 = vmatpush1.msra.mxu0 %v3639
      %3764 = vmatprep.subr.mxu0 0.0
      %3765 = vmatpush1.msra.mxu0 %v3640
      %3766 = vmatprep.subr.mxu0 0.0
      %3767 = vmatpush1.msra.mxu0 %v3641
      %3768 = vmatprep.subr.mxu0 0.0
      %3769 = vmatpush1.msra.mxu0 %v3642
      %3770 = vmatprep.subr.mxu0 0.0
      %3771 = vmatpush1.msra.mxu0 %v3643
      %3772 = vmatprep.subr.mxu0 0.0
      %3773 = vmatpush1.msra.mxu0 %v3644
      %3774 = vmatprep.subr.mxu0 0.0
      %3775 = vmatpush1.msra.mxu0 %v3645
      %3776 = vmatprep.subr.mxu0 0.0
      %3777 = vmatpush1.msra.mxu0 %v3646
      %3778 = vmatprep.subr.mxu0 0.0
      %3779 = vmatpush1.msra.mxu0 %v3647
      %3780 = vmatprep.subr.mxu0 0.0
      %3781 = vmatpush1.msra.mxu0 %v3648
      %3782 = vmatprep.subr.mxu0 0.0
      %3783 = vmatpush1.msra.mxu0 %v3649
      %3784 = vmatprep.subr.mxu0 0.0
      %3785 = vmatpush1.msra.mxu0 %v3650
      %3786 = vmatprep.subr.mxu0 0.0
      %3787 = vmatpush1.msra.mxu0 %v3651
      %3788 = vmatprep.subr.mxu0 0.0
      %3789 = vmatpush1.msra.mxu0 %v3652
      %3790 = vmatprep.subr.mxu0 0.0
      %3791 = vmatpush1.msra.mxu0 %v3653
      %3792 = vmatprep.mubr.f32.mxu0 %v3657
      %3793 = vmatmul.mubr.f32.gmra.mrb[0].mxu0 %v3656
      %v3794 = vpop.f32.mrb[0].mxu0
      %v3795 = vadd.f32 %v3725, %v3794
      %v3796 = vpop.f32.mrb[0].mxu0
      %3797 = vdwg.mxu0
      %v3798 = vmul.f32 %v265, 0.5
      %v3799 = vmul.f32 %v3795, %v3798
      %3801 = vrot.lane.b32.xlu0 %v3799, 1
      %v3802 = vpop.permute.xlu0 %3801
      %v3804 = vmul.f32 %v770, %v3802
      %3806 = vrot.lane.b32.xlu0 %v766, 1
      %v3807 = vpop.permute.xlu0 %3806
      %v3809 = vadd.f32 %v3804, %v3807
      %3811 = vrot.lane.b32.xlu0 %v3809, 127
      %v3812 = vpop.permute.xlu0 %3811
      %vm3814 = vcmask 7168
      %3815 = vst.msk [vmem:[%s263] sm:$0xff] %vm3814, %v3812
      %p3816 = scmp.lt.s32.totalorder %s17, 1
      %s3817 = scalar_select %p3816, %s17, 1
      %s3818 = smul.addr %s3817, 8
      %s3819 = scalar_lea.vmem %s6, %s3818
      // Predicated region
      $region45: #{tpu_custom_call.1} parent=43 // pred_check
        %p3820 = pneg %p171
      $region46: #{tpu_custom_call.1} parent=43 // pred_check_branch
        %3822 = sbr.rel (%p3820) target = $region48
      $region47: #{tpu_custom_call.1} parent=43 // pred_region
        _
      $region48: #{tpu_custom_call.1} parent=43 // pred_fallthru
        _
    $region44: #{tpu_custom_call.1} parent=5 // pred_fallthru
      _
    %p3823 = scmp.le.s32.totalorder 2, %s12
    // Predicated region
    $region49: #{tpu_custom_call.1} parent=5 // pred_check
      %p3824 = pneg %p3823
    $region50: #{tpu_custom_call.1} parent=5 // pred_check_branch
      %3826 = sbr.rel (%p3824) target = $region52
    $region51: #{tpu_custom_call.1} parent=5 // pred_region
      %s3827 = ssub.s32 %s12, 2
      // Predicated region
      $region53: #{tpu_custom_call.1} parent=51 // pred_check
        %p3828 = pneg %p177
      $region54: #{tpu_custom_call.1} parent=51 // pred_check_branch
        %3830 = sbr.rel (%p3828) target = $region56
      $region55: #{tpu_custom_call.1} parent=51 // pred_region
        %p3831 = scmp.lt.s32.totalorder %s18, 1
        %s3832 = scalar_select %p3831, %s18, 1
        %s3833 = smul.addr %s3832, 8
        %s3834 = scalar_lea.vmem %s6, %s3833
      $region56: #{tpu_custom_call.1} parent=51 // pred_fallthru
        _
    $region52: #{tpu_custom_call.1} parent=5 // pred_fallthru
      _
  $region6: #{tpu_custom_call.1} parent=0 // loop_footer
    %s16 = sadd.s32 1, %s12
  $region7: #{tpu_custom_call.1} parent=0 // loop_footer_branch
    %11 = sbr.rel target = $region3
  $region8: #{tpu_custom_call.1} parent=0 // loop_exit
    _

</llo_original>
